<compile_context>
chip_gen: v7x
topology: tpu7x:2x2x1
jax: 0.10.0
libtpu: 0.0.40
codegen_flags: <defaults>
</compile_context>

<pallas_src>
import math

import jax
import jax.numpy as jnp
from jax.experimental import pallas as pl
from jax.experimental.pallas import tpu as pltpu

# ---- small config, consistent with the module's constructor ----
B = 2           # batch
S = 64          # seq_length
C = 8           # in_channel
E = 16          # emb_size
NH = 8          # num_heads  (head_dim = E // NH = 2)
HC = 4 * E      # EmbConvBlock hidden = emb_size * 4
HF = 64         # FeedForward hidden_size
K = 8           # temporal kernel size (T_kernel_size)
CK = C * K      # im2col width
CHC = C * HC    # conv1 outputs laid out per input channel
EPS_BN = 1e-5
EPS_LN = 1e-5
SCALE = float(E) ** -0.5          # emb_size ** -0.5 (as in the torch code)
PREC = jax.lax.Precision.HIGHEST  # reference-side matmul precision


# ----------------------------- math helpers -----------------------------
def _erf(x):
    # Abramowitz & Stegun 7.1.26 rational approximation, |err| < 1.5e-7
    # (float32-accurate stand-in for the exact erf of nn.GELU()).
    a1, a2, a3, a4, a5 = 0.254829592, -0.284496736, 1.421413741, -1.453152027, 1.061405429
    p = 0.3275911
    s = jnp.where(x >= 0.0, 1.0, -1.0)
    z = jnp.abs(x)
    t = 1.0 / (1.0 + p * z)
    poly = ((((a5 * t + a4) * t + a3) * t + a2) * t + a1) * t
    return s * (1.0 - poly * jnp.exp(-z * z))


def _gelu(x):
    return 0.5 * x * (1.0 + _erf(x * 0.7071067811865476))


def _layernorm(x, gamma, beta, eps=EPS_LN):
    mu = jnp.mean(x, axis=-1, keepdims=True)
    var = jnp.mean((x - mu) ** 2, axis=-1, keepdims=True)
    return (x - mu) * jax.lax.rsqrt(var + eps) * gamma + beta


# ----------------------------- fused Pallas kernel -----------------------------
def _fused_kernel(xcol_ref, w1_ref, b1_ref, w2_ref, b2_ref, pe_ref,
                  wqkv_ref, hmask_ref, bias_ref,
                  go_ref, bo_ref, ga_ref, ba_ref,
                  fw1_ref, fb1_ref, fw2_ref, fb2_ref, gf_ref, bf_ref,
                  out_ref):
    # ---- EmbConvBlock: conv1(+BN1) and conv2(+BN2) folded into two matmuls ----
    xcol = xcol_ref[0]                                                     # (S, C*K) im2col
    a1 = jnp.dot(xcol, w1_ref[...], preferred_element_type=jnp.float32) + b1_ref[...]
    a1 = _gelu(a1)                                                         # (S, C*HC)
    z = jnp.dot(a1, w2_ref[...], preferred_element_type=jnp.float32) + b2_ref[...]
    z = _gelu(z) + pe_ref[...]                                             # (S, E) + tAPE (dropout=id)

    # ---- Attention (heads batched via head masks; bias added AFTER softmax, as in torch) ----
    qkv = jnp.dot(z, wqkv_ref[...], preferred_element_type=jnp.float32)    # (S, 3E)
    q = qkv[:, :E]                                                         # scale folded into W_q
    k = qkv[:, E:2 * E]
    v = qkv[:, 2 * E:]
    hmask = hmask_ref[...]                                                 # (NH, 1, E)
    qm = (q[None, :, :] * hmask).reshape(NH * S, E)                        # row h*S+i = head-h query i
    s = jnp.einsum('re,ke->rk', qm, k, preferred_element_type=jnp.float32)  # (NH*S, S) all-head scores
    s = s - jnp.max(s, axis=-1, keepdims=True)
    p = jnp.exp(s)
    attn = p * pl.reciprocal(jnp.sum(p, axis=-1, keepdims=True), approx=True)
    attn = attn + bias_ref[...]                                            # relative bias post-softmax
    r = jnp.dot(attn, v, preferred_element_type=jnp.float32)               # (NH*S, E)
    o = jnp.sum(r.reshape(NH, S, E) * hmask, axis=0)                       # keep each head's own columns
    o = _layernorm(o, go_ref[...], bo_ref[...])                            # to_out LayerNorm
    z2 = _layernorm(z + o, ga_ref[...], ba_ref[...])                       # add & norm

    # ---- FeedForward (dropouts = identity) ----
    h = jnp.maximum(jnp.dot(z2, fw1_ref[...], preferred_element_type=jnp.float32) + fb1_ref[...], 0.0)
    y = jnp.dot(h, fw2_ref[...], preferred_element_type=jnp.float32) + fb2_ref[...]
    out_ref[0] = _layernorm(z2 + y, gf_ref[...], bf_ref[...])              # add & norm


# ----------------------------- pallas_call wrapper -----------------------------
def _full(a):
    n = a.ndim
    return pl.BlockSpec(a.shape, lambda b, n=n: (0,) * n)


def _fused_call(xcol, p):
    args = (xcol,
            p['w1_big'], p['b1_big'], p['w2f'], p['b2f'], p['pe'],
            p['wqkv'], p['head_mask'], p['bias_flat'],
            p['ln_out_g'], p['ln_out_b'], p['ln_attn_g'], p['ln_attn_b'],
            p['fw1'], p['fb1'], p['fw2'], p['fb2'], p['ln_ffn_g'], p['ln_ffn_b'])
    in_specs = [pl.BlockSpec((1, S, CK), lambda b: (b, 0, 0))] + [_full(a) for a in args[1:]]
    return pl.pallas_call(
        _fused_kernel,
        out_shape=jax.ShapeDtypeStruct((B, S, E), jnp.float32),
        grid=(B,),
        in_specs=in_specs,
        out_specs=pl.BlockSpec((1, S, E), lambda b: (b, 0, 0)),
        compiler_params=pltpu.CompilerParams(dimension_semantics=("parallel",)),
    )(*args)


def transformer_forward(packed, x):
    # PyTorch Conv2d(padding='same') with kernel 8 pads (3, 4) along time.
    xpad = jnp.pad(x, ((0, 0), (3, 4), (0, 0)))
    # im2col built per batch element (no temporal bleed): xcol[b, s, c*K+k] = xpad[b, s+k, c]
    xcol = jnp.stack([xpad[:, k:k + S, :] for k in range(K)], axis=-1)     # (B, S, C, K)
    xcol = xcol.reshape(B, S, CK)
    return _fused_call(xcol, packed)                                       # (B, S, E)


# ----------------------------- parameters -----------------------------
def init_params(key):
    keys = jax.random.split(key, 32)

    def nrm(i, shape, s=0.2):
        return s * jax.random.normal(keys[i], shape, jnp.float32)

    p = {}
    # Conv2d(1, HC, [K, 1]) : torch weight (HC,1,K,1) stored transposed as (K, HC)
    p['w1t'] = nrm(0, (K, HC), 0.3)
    p['b1'] = nrm(1, (1, HC), 0.1)
    p['bn1_g'] = 1.0 + nrm(2, (1, HC), 0.1)
    p['bn1_b'] = nrm(3, (1, HC), 0.1)
    p['bn1_mean'] = nrm(4, (1, HC), 0.1)
    p['bn1_var'] = 0.8 + 0.4 * jax.random.uniform(keys[5], (1, HC), jnp.float32)
    # Conv2d(HC, E, [1, C]) : torch weight (E,HC,1,C) stored as (C, HC, E)
    p['w2c'] = nrm(6, (C, HC, E), 0.15)
    p['b2'] = nrm(7, (1, E), 0.1)
    p['bn2_g'] = 1.0 + nrm(8, (1, E), 0.1)
    p['bn2_b'] = nrm(9, (1, E), 0.1)
    p['bn2_mean'] = nrm(10, (1, E), 0.1)
    p['bn2_var'] = 0.8 + 0.4 * jax.random.uniform(keys[11], (1, E), jnp.float32)
    # Attention: Linear(E,E,bias=False) weights stored pre-transposed (y = x @ W)
    p['wq'] = nrm(12, (E, E), 0.3)
    p['wk'] = nrm(13, (E, E), 0.3)
    p['wv'] = nrm(14, (E, E), 0.3)
    # relative_bias_table (2S-1, NH); __init__ uses zeros -- random here to exercise the path
    rel_table = nrm(15, (2 * S - 1, NH), 0.2)
    idx = jnp.arange(S)[:, None] - jnp.arange(S)[None, :] + (S - 1)
    p['rel_bias'] = jnp.transpose(rel_table[idx], (2, 0, 1))   # (NH, S, S), bias[h,i,j]=table[i-j+S-1,h]
    p['ln_out_g'] = 1.0 + nrm(16, (1, E), 0.1)
    p['ln_out_b'] = nrm(17, (1, E), 0.1)
    p['ln_attn_g'] = 1.0 + nrm(18, (1, E), 0.1)
    p['ln_attn_b'] = nrm(19, (1, E), 0.1)
    # FeedForward
    p['fw1'] = nrm(20, (E, HF), 0.3)
    p['fb1'] = nrm(21, (1, HF), 0.1)
    p['fw2'] = nrm(22, (HF, E), 0.3)
    p['fb2'] = nrm(23, (1, E), 0.1)
    p['ln_ffn_g'] = 1.0 + nrm(24, (1, E), 0.1)
    p['ln_ffn_b'] = nrm(25, (1, E), 0.1)
    # tAPE positional-encoding buffer (max_len = seq_length = S)
    pos = jnp.arange(S, dtype=jnp.float32)[:, None]
    div = jnp.exp(jnp.arange(0, E, 2, dtype=jnp.float32) * (-math.log(10000.0) / E))
    pe = jnp.zeros((S, E), jnp.float32)
    pe = pe.at[:, 0::2].set(jnp.sin(pos * div * (E / S)))
    pe = pe.at[:, 1::2].set(jnp.cos(pos * div * (E / S)))
    p['pe'] = pe
    return p


def fold_params(p):
    """Fold eval-mode BatchNorms into the conv weights and pack everything the fused kernel needs."""
    q = {}
    # conv1 + BN1 folded, laid out block-diagonally so im2col(S, C*K) @ w1_big -> (S, C*HC)
    s1 = p['bn1_g'] * jax.lax.rsqrt(p['bn1_var'] + EPS_BN)                 # (1, HC)
    w1f = p['w1t'] * s1                                                    # (K, HC)
    b1f = (p['b1'] - p['bn1_mean']) * s1 + p['bn1_b']                      # (1, HC)
    eye_c = jnp.eye(C, dtype=jnp.float32)
    q['w1_big'] = jnp.einsum('cd,kh->ckdh', eye_c, w1f).reshape(CK, CHC)   # (C*K, C*HC) block-diag
    q['b1_big'] = jnp.tile(b1f.reshape(HC), (C,)).reshape(1, CHC)          # (1, C*HC)
    # conv2 + BN2 folded; columns of a1 are ordered (c, h) to match w2c (C, HC, E)
    s2 = p['bn2_g'] * jax.lax.rsqrt(p['bn2_var'] + EPS_BN)                 # (1, E)
    q['w2f'] = (p['w2c'] * s2).reshape(CHC, E)                             # (C*HC, E)
    q['b2f'] = (p['b2'] - p['bn2_mean']) * s2 + p['bn2_b']                 # (1, E)
    q['pe'] = p['pe']
    # attention: emb_size**-0.5 scale folded into W_q; Q,K,V fused into one (E,3E) matmul
    q['wqkv'] = jnp.concatenate([p['wq'] * SCALE, p['wk'], p['wv']], axis=1)  # (E, 3E)
    head_ids = jnp.arange(E, dtype=jnp.int32) // (E // NH)
    q['head_mask'] = (head_ids[None, None, :] ==
                      jnp.arange(NH, dtype=jnp.int32)[:, None, None]).astype(jnp.float32)  # (NH,1,E)
    q['bias_flat'] = p['rel_bias'].reshape(NH * S, S)                      # (NH*S, S)
    for name in ('ln_out_g', 'ln_out_b', 'ln_attn_g', 'ln_attn_b',
                 'fw1', 'fb1', 'fw2', 'fb2', 'ln_ffn_g', 'ln_ffn_b'):
        q[name] = p[name]
    return q


# ----------------------------- pure-JAX reference (semantics check) -----------------------------
def _gelu_exact(x):
    return 0.5 * x * (1.0 + jax.scipy.special.erf(x / jnp.sqrt(2.0)))


def reference_forward(p, x):
    xpad = jnp.pad(x, ((0, 0), (3, 4), (0, 0)))
    a1 = jnp.zeros((B, S, HC, C), jnp.float32)
    for k in range(K):
        a1 = a1 + xpad[:, k:k + S, None, :] * p['w1t'][k][None, None, :, None]
    a1 = a1 + p['b1'].reshape(1, 1, HC, 1)
    a1 = (a1 - p['bn1_mean'].reshape(1, 1, HC, 1)) * jax.lax.rsqrt(p['bn1_var'].reshape(1, 1, HC, 1) + EPS_BN) \
        * p['bn1_g'].reshape(1, 1, HC, 1) + p['bn1_b'].reshape(1, 1, HC, 1)
    a1 = _gelu_exact(a1)
    z = jnp.einsum('bthc,che->bte', a1, p['w2c'], precision=PREC) + p['b2']
    z = (z - p['bn2_mean']) * jax.lax.rsqrt(p['bn2_var'] + EPS_BN) * p['bn2_g'] + p['bn2_b']
    z = _gelu_exact(z)
    z = z + p['pe'][None]
    d = E // NH
    q = jnp.matmul(z, p['wq'], precision=PREC).reshape(B, S, NH, d).transpose(0, 2, 1, 3)
    k_ = jnp.matmul(z, p['wk'], precision=PREC).reshape(B, S, NH, d).transpose(0, 2, 1, 3)
    v = jnp.matmul(z, p['wv'], precision=PREC).reshape(B, S, NH, d).transpose(0, 2, 1, 3)
    attn = jnp.einsum('bhqd,bhkd->bhqk', q, k_, precision=PREC) * SCALE
    attn = jax.nn.softmax(attn, axis=-1) + p['rel_bias'][None]
    o = jnp.einsum('bhqk,bhkd->bhqd', attn, v, precision=PREC).transpose(0, 2, 1, 3).reshape(B, S, E)
    o = _layernorm(o, p['ln_out_g'], p['ln_out_b'])
    z2 = _layernorm(z + o, p['ln_attn_g'], p['ln_attn_b'])
    h = jnp.maximum(jnp.matmul(z2, p['fw1'], precision=PREC) + p['fb1'], 0.0)
    y = jnp.matmul(h, p['fw2'], precision=PREC) + p['fb2']
    return _layernorm(z2 + y, p['ln_ffn_g'], p['ln_ffn_b'])


# ----------------------------- main -----------------------------
if __name__ == "__main__":
    key = jax.random.PRNGKey(0)
    pkey, xkey = jax.random.split(key)
    params = init_params(pkey)
    packed = fold_params(params)
    x = jax.random.normal(xkey, (B, S, C), jnp.float32)

    out = jax.jit(transformer_forward)(packed, x)
    out = jax.block_until_ready(out)
    assert out.shape == (B, S, E), out.shape

    ref = reference_forward(params, x)
    # tolerance allows for the EUP approx reciprocal in the softmax and the erf polynomial
    if not jnp.allclose(out, ref, atol=3e-3, rtol=3e-3):
        raise AssertionError(
            f"mismatch vs reference, max abs err = {float(jnp.max(jnp.abs(out - ref)))}")
    print("KERNEL_OK")
</pallas_src>

<mosaic_0001>
module attributes {stable_mosaic.version = 11 : i64} {
  func.func @_fused_kernel(%arg0: i32, %arg1: memref<1x64x64xf32, #tpu.memory_space<vmem>>, %arg2: memref<64x512xf32, #tpu.memory_space<vmem>>, %arg3: memref<1x512xf32, #tpu.memory_space<vmem>>, %arg4: memref<512x16xf32, #tpu.memory_space<vmem>>, %arg5: memref<1x16xf32, #tpu.memory_space<vmem>>, %arg6: memref<64x16xf32, #tpu.memory_space<vmem>>, %arg7: memref<16x48xf32, #tpu.memory_space<vmem>>, %arg8: memref<8x1x16xf32, #tpu.memory_space<vmem>>, %arg9: memref<512x64xf32, #tpu.memory_space<vmem>>, %arg10: memref<1x16xf32, #tpu.memory_space<vmem>>, %arg11: memref<1x16xf32, #tpu.memory_space<vmem>>, %arg12: memref<1x16xf32, #tpu.memory_space<vmem>>, %arg13: memref<1x16xf32, #tpu.memory_space<vmem>>, %arg14: memref<16x64xf32, #tpu.memory_space<vmem>>, %arg15: memref<1x64xf32, #tpu.memory_space<vmem>>, %arg16: memref<64x16xf32, #tpu.memory_space<vmem>>, %arg17: memref<1x16xf32, #tpu.memory_space<vmem>>, %arg18: memref<1x16xf32, #tpu.memory_space<vmem>>, %arg19: memref<1x16xf32, #tpu.memory_space<vmem>>, %arg20: memref<1x64x16xf32, #tpu.memory_space<vmem>>) attributes {dimension_semantics = [#tpu.dimension_semantics<parallel>], iteration_bounds = array<i64: 2>, scalar_prefetch = 0 : i64, scratch_operands = 0 : i64, tpu.core_type = #tpu.core_type<tc>, window_params = [{transform_indices = @transform_0, window_bounds = array<i64: 1, 64, 64>}, {pipeline_mode = #tpu.pipeline_mode<synchronous>, transform_indices = @transform_1, window_bounds = array<i64: 64, 512>}, {pipeline_mode = #tpu.pipeline_mode<synchronous>, transform_indices = @transform_2, window_bounds = array<i64: 1, 512>}, {pipeline_mode = #tpu.pipeline_mode<synchronous>, transform_indices = @transform_3, window_bounds = array<i64: 512, 16>}, {pipeline_mode = #tpu.pipeline_mode<synchronous>, transform_indices = @transform_4, window_bounds = array<i64: 1, 16>}, {pipeline_mode = #tpu.pipeline_mode<synchronous>, transform_indices = @transform_5, window_bounds = array<i64: 64, 16>}, {pipeline_mode = #tpu.pipeline_mode<synchronous>, transform_indices = @transform_6, window_bounds = array<i64: 16, 48>}, {pipeline_mode = #tpu.pipeline_mode<synchronous>, transform_indices = @transform_7, window_bounds = array<i64: 8, 1, 16>}, {pipeline_mode = #tpu.pipeline_mode<synchronous>, transform_indices = @transform_8, window_bounds = array<i64: 512, 64>}, {pipeline_mode = #tpu.pipeline_mode<synchronous>, transform_indices = @transform_9, window_bounds = array<i64: 1, 16>}, {pipeline_mode = #tpu.pipeline_mode<synchronous>, transform_indices = @transform_10, window_bounds = array<i64: 1, 16>}, {pipeline_mode = #tpu.pipeline_mode<synchronous>, transform_indices = @transform_11, window_bounds = array<i64: 1, 16>}, {pipeline_mode = #tpu.pipeline_mode<synchronous>, transform_indices = @transform_12, window_bounds = array<i64: 1, 16>}, {pipeline_mode = #tpu.pipeline_mode<synchronous>, transform_indices = @transform_13, window_bounds = array<i64: 16, 64>}, {pipeline_mode = #tpu.pipeline_mode<synchronous>, transform_indices = @transform_14, window_bounds = array<i64: 1, 64>}, {pipeline_mode = #tpu.pipeline_mode<synchronous>, transform_indices = @transform_15, window_bounds = array<i64: 64, 16>}, {pipeline_mode = #tpu.pipeline_mode<synchronous>, transform_indices = @transform_16, window_bounds = array<i64: 1, 16>}, {pipeline_mode = #tpu.pipeline_mode<synchronous>, transform_indices = @transform_17, window_bounds = array<i64: 1, 16>}, {pipeline_mode = #tpu.pipeline_mode<synchronous>, transform_indices = @transform_18, window_bounds = array<i64: 1, 16>}, {transform_indices = @transform_19, window_bounds = array<i64: 1, 64, 16>}]} {
    %c0 = arith.constant 0 : index
    %c0_0 = arith.constant 0 : index
    %c0_1 = arith.constant 0 : index
    %0 = vector.load %arg1[%c0, %c0_0, %c0_1] : memref<1x64x64xf32, #tpu.memory_space<vmem>>, vector<1x64x64xf32>
    %1 = vector.shape_cast %0 : vector<1x64x64xf32> to vector<64x64xf32>
    %c0_2 = arith.constant 0 : index
    %c0_3 = arith.constant 0 : index
    %2 = vector.load %arg2[%c0_2, %c0_3] : memref<64x512xf32, #tpu.memory_space<vmem>>, vector<64x512xf32>
    %cst = arith.constant dense<0.000000e+00> : vector<64x512xf32>
    %3 = tpu.matmul %1, %2, %cst {dimension_numbers = #tpu.dot_dimension_numbers<[1], [0], [0], [1], [0, 0, 1, 1], [], []>} : vector<64x64xf32>, vector<64x512xf32>, vector<64x512xf32> -> vector<64x512xf32>
    %c0_4 = arith.constant 0 : index
    %c0_5 = arith.constant 0 : index
    %4 = vector.load %arg3[%c0_4, %c0_5] : memref<1x512xf32, #tpu.memory_space<vmem>>, vector<1x512xf32>
    %5 = vector.broadcast %4 : vector<1x512xf32> to vector<64x512xf32>
    %6 = arith.addf %3, %5 : vector<64x512xf32>
    %cst_6 = arith.constant 5.000000e-01 : f32
    %7 = vector.broadcast %cst_6 : f32 to vector<64x512xf32>
    %8 = arith.mulf %7, %6 : vector<64x512xf32>
    %cst_7 = arith.constant 0.707106769 : f32
    %9 = vector.broadcast %cst_7 : f32 to vector<64x512xf32>
    %10 = arith.mulf %6, %9 : vector<64x512xf32>
    %cst_8 = arith.constant 0.000000e+00 : f32
    %11 = vector.broadcast %cst_8 : f32 to vector<64x512xf32>
    %12 = arith.cmpf oge, %10, %11 : vector<64x512xf32>
    %cst_9 = arith.constant 1.000000e+00 : f32
    %cst_10 = arith.constant -1.000000e+00 : f32
    %13 = vector.broadcast %cst_9 : f32 to vector<64x512xf32>
    %14 = vector.broadcast %cst_10 : f32 to vector<64x512xf32>
    %15 = arith.select %12, %13, %14 : vector<64x512xi1>, vector<64x512xf32>
    %16 = math.absf %10 : vector<64x512xf32>
    %cst_11 = arith.constant 0.327591091 : f32
    %17 = vector.broadcast %cst_11 : f32 to vector<64x512xf32>
    %18 = arith.mulf %17, %16 : vector<64x512xf32>
    %cst_12 = arith.constant 1.000000e+00 : f32
    %19 = vector.broadcast %cst_12 : f32 to vector<64x512xf32>
    %20 = arith.addf %19, %18 : vector<64x512xf32>
    %cst_13 = arith.constant 1.000000e+00 : f32
    %21 = vector.broadcast %cst_13 : f32 to vector<64x512xf32>
    %22 = arith.divf %21, %20 : vector<64x512xf32>
    %cst_14 = arith.constant 1.06140542 : f32
    %23 = vector.broadcast %cst_14 : f32 to vector<64x512xf32>
    %24 = arith.mulf %23, %22 : vector<64x512xf32>
    %cst_15 = arith.constant -1.45315206 : f32
    %25 = vector.broadcast %cst_15 : f32 to vector<64x512xf32>
    %26 = arith.addf %24, %25 : vector<64x512xf32>
    %27 = arith.mulf %26, %22 : vector<64x512xf32>
    %cst_16 = arith.constant 1.42141378 : f32
    %28 = vector.broadcast %cst_16 : f32 to vector<64x512xf32>
    %29 = arith.addf %27, %28 : vector<64x512xf32>
    %30 = arith.mulf %29, %22 : vector<64x512xf32>
    %cst_17 = arith.constant -0.284496725 : f32
    %31 = vector.broadcast %cst_17 : f32 to vector<64x512xf32>
    %32 = arith.addf %30, %31 : vector<64x512xf32>
    %33 = arith.mulf %32, %22 : vector<64x512xf32>
    %cst_18 = arith.constant 0.254829586 : f32
    %34 = vector.broadcast %cst_18 : f32 to vector<64x512xf32>
    %35 = arith.addf %33, %34 : vector<64x512xf32>
    %36 = arith.mulf %35, %22 : vector<64x512xf32>
    %cst_19 = arith.constant 0.000000e+00 : f32
    %37 = vector.broadcast %cst_19 : f32 to vector<64x512xf32>
    %38 = arith.subf %37, %16 : vector<64x512xf32>
    %39 = arith.mulf %38, %16 : vector<64x512xf32>
    %40 = math.exp %39 : vector<64x512xf32>
    %41 = arith.mulf %36, %40 : vector<64x512xf32>
    %cst_20 = arith.constant 1.000000e+00 : f32
    %42 = vector.broadcast %cst_20 : f32 to vector<64x512xf32>
    %43 = arith.subf %42, %41 : vector<64x512xf32>
    %44 = arith.mulf %15, %43 : vector<64x512xf32>
    %cst_21 = arith.constant 1.000000e+00 : f32
    %45 = vector.broadcast %cst_21 : f32 to vector<64x512xf32>
    %46 = arith.addf %45, %44 : vector<64x512xf32>
    %47 = arith.mulf %8, %46 : vector<64x512xf32>
    %c0_22 = arith.constant 0 : index
    %c0_23 = arith.constant 0 : index
    %48 = vector.load %arg4[%c0_22, %c0_23] : memref<512x16xf32, #tpu.memory_space<vmem>>, vector<512x16xf32>
    %cst_24 = arith.constant dense<0.000000e+00> : vector<64x16xf32>
    %49 = tpu.matmul %47, %48, %cst_24 {dimension_numbers = #tpu.dot_dimension_numbers<[1], [0], [0], [1], [0, 0, 1, 1], [], []>} : vector<64x512xf32>, vector<512x16xf32>, vector<64x16xf32> -> vector<64x16xf32>
    %c0_25 = arith.constant 0 : index
    %c0_26 = arith.constant 0 : index
    %50 = vector.load %arg5[%c0_25, %c0_26] : memref<1x16xf32, #tpu.memory_space<vmem>>, vector<1x16xf32>
    %51 = vector.broadcast %50 : vector<1x16xf32> to vector<64x16xf32>
    %52 = arith.addf %49, %51 : vector<64x16xf32>
    %cst_27 = arith.constant 5.000000e-01 : f32
    %53 = vector.broadcast %cst_27 : f32 to vector<64x16xf32>
    %54 = arith.mulf %53, %52 : vector<64x16xf32>
    %cst_28 = arith.constant 0.707106769 : f32
    %55 = vector.broadcast %cst_28 : f32 to vector<64x16xf32>
    %56 = arith.mulf %52, %55 : vector<64x16xf32>
    %cst_29 = arith.constant 0.000000e+00 : f32
    %57 = vector.broadcast %cst_29 : f32 to vector<64x16xf32>
    %58 = arith.cmpf oge, %56, %57 : vector<64x16xf32>
    %cst_30 = arith.constant 1.000000e+00 : f32
    %cst_31 = arith.constant -1.000000e+00 : f32
    %59 = vector.broadcast %cst_30 : f32 to vector<64x16xf32>
    %60 = vector.broadcast %cst_31 : f32 to vector<64x16xf32>
    %61 = arith.select %58, %59, %60 : vector<64x16xi1>, vector<64x16xf32>
    %62 = math.absf %56 : vector<64x16xf32>
    %cst_32 = arith.constant 0.327591091 : f32
    %63 = vector.broadcast %cst_32 : f32 to vector<64x16xf32>
    %64 = arith.mulf %63, %62 : vector<64x16xf32>
    %cst_33 = arith.constant 1.000000e+00 : f32
    %65 = vector.broadcast %cst_33 : f32 to vector<64x16xf32>
    %66 = arith.addf %65, %64 : vector<64x16xf32>
    %cst_34 = arith.constant 1.000000e+00 : f32
    %67 = vector.broadcast %cst_34 : f32 to vector<64x16xf32>
    %68 = arith.divf %67, %66 : vector<64x16xf32>
    %cst_35 = arith.constant 1.06140542 : f32
    %69 = vector.broadcast %cst_35 : f32 to vector<64x16xf32>
    %70 = arith.mulf %69, %68 : vector<64x16xf32>
    %cst_36 = arith.constant -1.45315206 : f32
    %71 = vector.broadcast %cst_36 : f32 to vector<64x16xf32>
    %72 = arith.addf %70, %71 : vector<64x16xf32>
    %73 = arith.mulf %72, %68 : vector<64x16xf32>
    %cst_37 = arith.constant 1.42141378 : f32
    %74 = vector.broadcast %cst_37 : f32 to vector<64x16xf32>
    %75 = arith.addf %73, %74 : vector<64x16xf32>
    %76 = arith.mulf %75, %68 : vector<64x16xf32>
    %cst_38 = arith.constant -0.284496725 : f32
    %77 = vector.broadcast %cst_38 : f32 to vector<64x16xf32>
    %78 = arith.addf %76, %77 : vector<64x16xf32>
    %79 = arith.mulf %78, %68 : vector<64x16xf32>
    %cst_39 = arith.constant 0.254829586 : f32
    %80 = vector.broadcast %cst_39 : f32 to vector<64x16xf32>
    %81 = arith.addf %79, %80 : vector<64x16xf32>
    %82 = arith.mulf %81, %68 : vector<64x16xf32>
    %cst_40 = arith.constant 0.000000e+00 : f32
    %83 = vector.broadcast %cst_40 : f32 to vector<64x16xf32>
    %84 = arith.subf %83, %62 : vector<64x16xf32>
    %85 = arith.mulf %84, %62 : vector<64x16xf32>
    %86 = math.exp %85 : vector<64x16xf32>
    %87 = arith.mulf %82, %86 : vector<64x16xf32>
    %cst_41 = arith.constant 1.000000e+00 : f32
    %88 = vector.broadcast %cst_41 : f32 to vector<64x16xf32>
    %89 = arith.subf %88, %87 : vector<64x16xf32>
    %90 = arith.mulf %61, %89 : vector<64x16xf32>
    %cst_42 = arith.constant 1.000000e+00 : f32
    %91 = vector.broadcast %cst_42 : f32 to vector<64x16xf32>
    %92 = arith.addf %91, %90 : vector<64x16xf32>
    %93 = arith.mulf %54, %92 : vector<64x16xf32>
    %c0_43 = arith.constant 0 : index
    %c0_44 = arith.constant 0 : index
    %94 = vector.load %arg6[%c0_43, %c0_44] : memref<64x16xf32, #tpu.memory_space<vmem>>, vector<64x16xf32>
    %95 = arith.addf %93, %94 : vector<64x16xf32>
    %c0_45 = arith.constant 0 : index
    %c0_46 = arith.constant 0 : index
    %96 = vector.load %arg7[%c0_45, %c0_46] : memref<16x48xf32, #tpu.memory_space<vmem>>, vector<16x48xf32>
    %cst_47 = arith.constant dense<0.000000e+00> : vector<64x48xf32>
    %97 = tpu.matmul %95, %96, %cst_47 {dimension_numbers = #tpu.dot_dimension_numbers<[1], [0], [0], [1], [0, 0, 1, 1], [], []>} : vector<64x16xf32>, vector<16x48xf32>, vector<64x48xf32> -> vector<64x48xf32>
    %98 = vector.extract_strided_slice %97 {offsets = [0, 0], sizes = [64, 16], strides = [1, 1]} : vector<64x48xf32> to vector<64x16xf32>
    %99 = vector.extract_strided_slice %97 {offsets = [0, 16], sizes = [64, 16], strides = [1, 1]} : vector<64x48xf32> to vector<64x16xf32>
    %100 = vector.extract_strided_slice %97 {offsets = [0, 32], sizes = [64, 16], strides = [1, 1]} : vector<64x48xf32> to vector<64x16xf32>
    %c0_48 = arith.constant 0 : index
    %c0_49 = arith.constant 0 : index
    %c0_50 = arith.constant 0 : index
    %101 = vector.load %arg8[%c0_48, %c0_49, %c0_50] : memref<8x1x16xf32, #tpu.memory_space<vmem>>, vector<8x1x16xf32>
    %102 = vector.shape_cast %98 : vector<64x16xf32> to vector<1x64x16xf32>
    %103 = vector.broadcast %102 : vector<1x64x16xf32> to vector<8x64x16xf32>
    %104 = vector.broadcast %101 : vector<8x1x16xf32> to vector<8x64x16xf32>
    %105 = arith.mulf %103, %104 : vector<8x64x16xf32>
    %106 = vector.shape_cast %105 : vector<8x64x16xf32> to vector<512x16xf32>
    "tpu.trace_start"() <{level = 10 : i32, message = "re,ke->rk"}> : () -> ()
    %cst_51 = arith.constant dense<0.000000e+00> : vector<512x64xf32>
    %107 = tpu.matmul %106, %99, %cst_51 {dimension_numbers = #tpu.dot_dimension_numbers<[1], [1], [0], [0], [0, 0, 1, 0], [], []>} : vector<512x16xf32>, vector<64x16xf32>, vector<512x64xf32> -> vector<512x64xf32>
    "tpu.trace_stop"() : () -> ()
    %cst_52 = arith.constant dense<0xFF800000> : vector<512xf32>
    %108 = vector.multi_reduction <maximumf>, %107, %cst_52 [1] : vector<512x64xf32> to vector<512xf32>
    %109 = vector.shape_cast %108 : vector<512xf32> to vector<512x1xf32>
    %110 = vector.broadcast %109 : vector<512x1xf32> to vector<512x64xf32>
    %111 = arith.subf %107, %110 : vector<512x64xf32>
    %112 = math.exp %111 : vector<512x64xf32>
    %cst_53 = arith.constant dense<0.000000e+00> : vector<512xf32>
    %113 = vector.multi_reduction <add>, %112, %cst_53 [1] : vector<512x64xf32> to vector<512xf32>
    %114 = vector.shape_cast %113 : vector<512xf32> to vector<512x1xf32>
    %115 = tpu.reciprocal %114 {approx = true} : vector<512x1xf32> -> vector<512x1xf32>
    %116 = vector.broadcast %115 : vector<512x1xf32> to vector<512x64xf32>
    %117 = arith.mulf %112, %116 : vector<512x64xf32>
    %c0_54 = arith.constant 0 : index
    %c0_55 = arith.constant 0 : index
    %118 = vector.load %arg9[%c0_54, %c0_55] : memref<512x64xf32, #tpu.memory_space<vmem>>, vector<512x64xf32>
    %119 = arith.addf %117, %118 : vector<512x64xf32>
    %cst_56 = arith.constant dense<0.000000e+00> : vector<512x16xf32>
    %120 = tpu.matmul %119, %100, %cst_56 {dimension_numbers = #tpu.dot_dimension_numbers<[1], [0], [0], [1], [0, 0, 1, 1], [], []>} : vector<512x64xf32>, vector<64x16xf32>, vector<512x16xf32> -> vector<512x16xf32>
    %121 = vector.shape_cast %120 : vector<512x16xf32> to vector<8x64x16xf32>
    %122 = vector.broadcast %101 : vector<8x1x16xf32> to vector<8x64x16xf32>
    %123 = arith.mulf %121, %122 : vector<8x64x16xf32>
    %cst_57 = arith.constant dense<0.000000e+00> : vector<64x16xf32>
    %124 = vector.multi_reduction <add>, %123, %cst_57 [0] : vector<8x64x16xf32> to vector<64x16xf32>
    %c0_58 = arith.constant 0 : index
    %c0_59 = arith.constant 0 : index
    %125 = vector.load %arg10[%c0_58, %c0_59] : memref<1x16xf32, #tpu.memory_space<vmem>>, vector<1x16xf32>
    %c0_60 = arith.constant 0 : index
    %c0_61 = arith.constant 0 : index
    %126 = vector.load %arg11[%c0_60, %c0_61] : memref<1x16xf32, #tpu.memory_space<vmem>>, vector<1x16xf32>
    %cst_62 = arith.constant dense<0.000000e+00> : vector<64xf32>
    %127 = vector.multi_reduction <add>, %124, %cst_62 [1] : vector<64x16xf32> to vector<64xf32>
    %128 = vector.shape_cast %127 : vector<64xf32> to vector<64x1xf32>
    %cst_63 = arith.constant 1.600000e+01 : f32
    %129 = vector.broadcast %cst_63 : f32 to vector<64x1xf32>
    %130 = arith.divf %128, %129 : vector<64x1xf32>
    %131 = vector.broadcast %130 : vector<64x1xf32> to vector<64x16xf32>
    %132 = arith.subf %124, %131 : vector<64x16xf32>
    %133 = arith.mulf %132, %132 : vector<64x16xf32>
    %cst_64 = arith.constant dense<0.000000e+00> : vector<64xf32>
    %134 = vector.multi_reduction <add>, %133, %cst_64 [1] : vector<64x16xf32> to vector<64xf32>
    %135 = vector.shape_cast %134 : vector<64xf32> to vector<64x1xf32>
    %cst_65 = arith.constant 1.600000e+01 : f32
    %136 = vector.broadcast %cst_65 : f32 to vector<64x1xf32>
    %137 = arith.divf %135, %136 : vector<64x1xf32>
    %138 = vector.broadcast %130 : vector<64x1xf32> to vector<64x16xf32>
    %139 = arith.subf %124, %138 : vector<64x16xf32>
    %cst_66 = arith.constant 9.99999974E-6 : f32
    %140 = vector.broadcast %cst_66 : f32 to vector<64x1xf32>
    %141 = arith.addf %137, %140 : vector<64x1xf32>
    %142 = math.rsqrt %141 : vector<64x1xf32>
    %143 = vector.broadcast %142 : vector<64x1xf32> to vector<64x16xf32>
    %144 = arith.mulf %139, %143 : vector<64x16xf32>
    %145 = vector.broadcast %125 : vector<1x16xf32> to vector<64x16xf32>
    %146 = arith.mulf %144, %145 : vector<64x16xf32>
    %147 = vector.broadcast %126 : vector<1x16xf32> to vector<64x16xf32>
    %148 = arith.addf %146, %147 : vector<64x16xf32>
    %149 = arith.addf %95, %148 : vector<64x16xf32>
    %c0_67 = arith.constant 0 : index
    %c0_68 = arith.constant 0 : index
    %150 = vector.load %arg12[%c0_67, %c0_68] : memref<1x16xf32, #tpu.memory_space<vmem>>, vector<1x16xf32>
    %c0_69 = arith.constant 0 : index
    %c0_70 = arith.constant 0 : index
    %151 = vector.load %arg13[%c0_69, %c0_70] : memref<1x16xf32, #tpu.memory_space<vmem>>, vector<1x16xf32>
    %cst_71 = arith.constant dense<0.000000e+00> : vector<64xf32>
    %152 = vector.multi_reduction <add>, %149, %cst_71 [1] : vector<64x16xf32> to vector<64xf32>
    %153 = vector.shape_cast %152 : vector<64xf32> to vector<64x1xf32>
    %cst_72 = arith.constant 1.600000e+01 : f32
    %154 = vector.broadcast %cst_72 : f32 to vector<64x1xf32>
    %155 = arith.divf %153, %154 : vector<64x1xf32>
    %156 = vector.broadcast %155 : vector<64x1xf32> to vector<64x16xf32>
    %157 = arith.subf %149, %156 : vector<64x16xf32>
    %158 = arith.mulf %157, %157 : vector<64x16xf32>
    %cst_73 = arith.constant dense<0.000000e+00> : vector<64xf32>
    %159 = vector.multi_reduction <add>, %158, %cst_73 [1] : vector<64x16xf32> to vector<64xf32>
    %160 = vector.shape_cast %159 : vector<64xf32> to vector<64x1xf32>
    %cst_74 = arith.constant 1.600000e+01 : f32
    %161 = vector.broadcast %cst_74 : f32 to vector<64x1xf32>
    %162 = arith.divf %160, %161 : vector<64x1xf32>
    %163 = vector.broadcast %155 : vector<64x1xf32> to vector<64x16xf32>
    %164 = arith.subf %149, %163 : vector<64x16xf32>
    %cst_75 = arith.constant 9.99999974E-6 : f32
    %165 = vector.broadcast %cst_75 : f32 to vector<64x1xf32>
    %166 = arith.addf %162, %165 : vector<64x1xf32>
    %167 = math.rsqrt %166 : vector<64x1xf32>
    %168 = vector.broadcast %167 : vector<64x1xf32> to vector<64x16xf32>
    %169 = arith.mulf %164, %168 : vector<64x16xf32>
    %170 = vector.broadcast %150 : vector<1x16xf32> to vector<64x16xf32>
    %171 = arith.mulf %169, %170 : vector<64x16xf32>
    %172 = vector.broadcast %151 : vector<1x16xf32> to vector<64x16xf32>
    %173 = arith.addf %171, %172 : vector<64x16xf32>
    %c0_76 = arith.constant 0 : index
    %c0_77 = arith.constant 0 : index
    %174 = vector.load %arg14[%c0_76, %c0_77] : memref<16x64xf32, #tpu.memory_space<vmem>>, vector<16x64xf32>
    %cst_78 = arith.constant dense<0.000000e+00> : vector<64x64xf32>
    %175 = tpu.matmul %173, %174, %cst_78 {dimension_numbers = #tpu.dot_dimension_numbers<[1], [0], [0], [1], [0, 0, 1, 1], [], []>} : vector<64x16xf32>, vector<16x64xf32>, vector<64x64xf32> -> vector<64x64xf32>
    %c0_79 = arith.constant 0 : index
    %c0_80 = arith.constant 0 : index
    %176 = vector.load %arg15[%c0_79, %c0_80] : memref<1x64xf32, #tpu.memory_space<vmem>>, vector<1x64xf32>
    %177 = vector.broadcast %176 : vector<1x64xf32> to vector<64x64xf32>
    %178 = arith.addf %175, %177 : vector<64x64xf32>
    %cst_81 = arith.constant 0.000000e+00 : f32
    %179 = vector.broadcast %cst_81 : f32 to vector<64x64xf32>
    %180 = arith.maximumf %178, %179 : vector<64x64xf32>
    %c0_82 = arith.constant 0 : index
    %c0_83 = arith.constant 0 : index
    %181 = vector.load %arg16[%c0_82, %c0_83] : memref<64x16xf32, #tpu.memory_space<vmem>>, vector<64x16xf32>
    %cst_84 = arith.constant dense<0.000000e+00> : vector<64x16xf32>
    %182 = tpu.matmul %180, %181, %cst_84 {dimension_numbers = #tpu.dot_dimension_numbers<[1], [0], [0], [1], [0, 0, 1, 1], [], []>} : vector<64x64xf32>, vector<64x16xf32>, vector<64x16xf32> -> vector<64x16xf32>
    %c0_85 = arith.constant 0 : index
    %c0_86 = arith.constant 0 : index
    %183 = vector.load %arg17[%c0_85, %c0_86] : memref<1x16xf32, #tpu.memory_space<vmem>>, vector<1x16xf32>
    %184 = vector.broadcast %183 : vector<1x16xf32> to vector<64x16xf32>
    %185 = arith.addf %182, %184 : vector<64x16xf32>
    %186 = arith.addf %173, %185 : vector<64x16xf32>
    %c0_87 = arith.constant 0 : index
    %c0_88 = arith.constant 0 : index
    %187 = vector.load %arg18[%c0_87, %c0_88] : memref<1x16xf32, #tpu.memory_space<vmem>>, vector<1x16xf32>
    %c0_89 = arith.constant 0 : index
    %c0_90 = arith.constant 0 : index
    %188 = vector.load %arg19[%c0_89, %c0_90] : memref<1x16xf32, #tpu.memory_space<vmem>>, vector<1x16xf32>
    %cst_91 = arith.constant dense<0.000000e+00> : vector<64xf32>
    %189 = vector.multi_reduction <add>, %186, %cst_91 [1] : vector<64x16xf32> to vector<64xf32>
    %190 = vector.shape_cast %189 : vector<64xf32> to vector<64x1xf32>
    %cst_92 = arith.constant 1.600000e+01 : f32
    %191 = vector.broadcast %cst_92 : f32 to vector<64x1xf32>
    %192 = arith.divf %190, %191 : vector<64x1xf32>
    %193 = vector.broadcast %192 : vector<64x1xf32> to vector<64x16xf32>
    %194 = arith.subf %186, %193 : vector<64x16xf32>
    %195 = arith.mulf %194, %194 : vector<64x16xf32>
    %cst_93 = arith.constant dense<0.000000e+00> : vector<64xf32>
    %196 = vector.multi_reduction <add>, %195, %cst_93 [1] : vector<64x16xf32> to vector<64xf32>
    %197 = vector.shape_cast %196 : vector<64xf32> to vector<64x1xf32>
    %cst_94 = arith.constant 1.600000e+01 : f32
    %198 = vector.broadcast %cst_94 : f32 to vector<64x1xf32>
    %199 = arith.divf %197, %198 : vector<64x1xf32>
    %200 = vector.broadcast %192 : vector<64x1xf32> to vector<64x16xf32>
    %201 = arith.subf %186, %200 : vector<64x16xf32>
    %cst_95 = arith.constant 9.99999974E-6 : f32
    %202 = vector.broadcast %cst_95 : f32 to vector<64x1xf32>
    %203 = arith.addf %199, %202 : vector<64x1xf32>
    %204 = math.rsqrt %203 : vector<64x1xf32>
    %205 = vector.broadcast %204 : vector<64x1xf32> to vector<64x16xf32>
    %206 = arith.mulf %201, %205 : vector<64x16xf32>
    %207 = vector.broadcast %187 : vector<1x16xf32> to vector<64x16xf32>
    %208 = arith.mulf %206, %207 : vector<64x16xf32>
    %209 = vector.broadcast %188 : vector<1x16xf32> to vector<64x16xf32>
    %210 = arith.addf %208, %209 : vector<64x16xf32>
    %c0_96 = arith.constant 0 : index
    %c0_97 = arith.constant 0 : index
    %c0_98 = arith.constant 0 : index
    %211 = vector.load %arg20[%c0_96, %c0_97, %c0_98] : memref<1x64x16xf32, #tpu.memory_space<vmem>>, vector<1x64x16xf32>
    %212 = vector.shape_cast %211 : vector<1x64x16xf32> to vector<64x16xf32>
    %213 = vector.shape_cast %210 : vector<64x16xf32> to vector<1x64x16xf32>
    tpu.vector_store %arg20[%c0_96, %c0_97, %c0_98], %213 {strides = array<i32>} : memref<1x64x16xf32, #tpu.memory_space<vmem>>, vector<1x64x16xf32>,
    return
  }
  func.func @transform_0(%arg0: i32) -> (i32, i32, i32) {
    %c0_i32 = arith.constant 0 : i32
    %c0_i32_0 = arith.constant 0 : i32
    %c0_i32_1 = arith.constant 0 : i32
    return %arg0, %c0_i32, %c0_i32_0 : i32, i32, i32
  }
  func.func @transform_1(%arg0: i32) -> (i32, i32) {
    %c0_i32 = arith.constant 0 : i32
    %c0_i32_0 = arith.constant 0 : i32
    %c0_i32_1 = arith.constant 0 : i32
    return %c0_i32, %c0_i32_0 : i32, i32
  }
  func.func @transform_2(%arg0: i32) -> (i32, i32) {
    %c0_i32 = arith.constant 0 : i32
    %c0_i32_0 = arith.constant 0 : i32
    %c0_i32_1 = arith.constant 0 : i32
    return %c0_i32, %c0_i32_0 : i32, i32
  }
  func.func @transform_3(%arg0: i32) -> (i32, i32) {
    %c0_i32 = arith.constant 0 : i32
    %c0_i32_0 = arith.constant 0 : i32
    %c0_i32_1 = arith.constant 0 : i32
    return %c0_i32, %c0_i32_0 : i32, i32
  }
  func.func @transform_4(%arg0: i32) -> (i32, i32) {
    %c0_i32 = arith.constant 0 : i32
    %c0_i32_0 = arith.constant 0 : i32
    %c0_i32_1 = arith.constant 0 : i32
    return %c0_i32, %c0_i32_0 : i32, i32
  }
  func.func @transform_5(%arg0: i32) -> (i32, i32) {
    %c0_i32 = arith.constant 0 : i32
    %c0_i32_0 = arith.constant 0 : i32
    %c0_i32_1 = arith.constant 0 : i32
    return %c0_i32, %c0_i32_0 : i32, i32
  }
  func.func @transform_6(%arg0: i32) -> (i32, i32) {
    %c0_i32 = arith.constant 0 : i32
    %c0_i32_0 = arith.constant 0 : i32
    %c0_i32_1 = arith.constant 0 : i32
    return %c0_i32, %c0_i32_0 : i32, i32
  }
  func.func @transform_7(%arg0: i32) -> (i32, i32, i32) {
    %c0_i32 = arith.constant 0 : i32
    %c0_i32_0 = arith.constant 0 : i32
    %c0_i32_1 = arith.constant 0 : i32
    %c0_i32_2 = arith.constant 0 : i32
    return %c0_i32, %c0_i32_0, %c0_i32_1 : i32, i32, i32
  }
  func.func @transform_8(%arg0: i32) -> (i32, i32) {
    %c0_i32 = arith.constant 0 : i32
    %c0_i32_0 = arith.constant 0 : i32
    %c0_i32_1 = arith.constant 0 : i32
    return %c0_i32, %c0_i32_0 : i32, i32
  }
  func.func @transform_9(%arg0: i32) -> (i32, i32) {
    %c0_i32 = arith.constant 0 : i32
    %c0_i32_0 = arith.constant 0 : i32
    %c0_i32_1 = arith.constant 0 : i32
    return %c0_i32, %c0_i32_0 : i32, i32
  }
  func.func @transform_10(%arg0: i32) -> (i32, i32) {
    %c0_i32 = arith.constant 0 : i32
    %c0_i32_0 = arith.constant 0 : i32
    %c0_i32_1 = arith.constant 0 : i32
    return %c0_i32, %c0_i32_0 : i32, i32
  }
  func.func @transform_11(%arg0: i32) -> (i32, i32) {
    %c0_i32 = arith.constant 0 : i32
    %c0_i32_0 = arith.constant 0 : i32
    %c0_i32_1 = arith.constant 0 : i32
    return %c0_i32, %c0_i32_0 : i32, i32
  }
  func.func @transform_12(%arg0: i32) -> (i32, i32) {
    %c0_i32 = arith.constant 0 : i32
    %c0_i32_0 = arith.constant 0 : i32
    %c0_i32_1 = arith.constant 0 : i32
    return %c0_i32, %c0_i32_0 : i32, i32
  }
  func.func @transform_13(%arg0: i32) -> (i32, i32) {
    %c0_i32 = arith.constant 0 : i32
    %c0_i32_0 = arith.constant 0 : i32
    %c0_i32_1 = arith.constant 0 : i32
    return %c0_i32, %c0_i32_0 : i32, i32
  }
  func.func @transform_14(%arg0: i32) -> (i32, i32) {
    %c0_i32 = arith.constant 0 : i32
    %c0_i32_0 = arith.constant 0 : i32
    %c0_i32_1 = arith.constant 0 : i32
    return %c0_i32, %c0_i32_0 : i32, i32
  }
  func.func @transform_15(%arg0: i32) -> (i32, i32) {
    %c0_i32 = arith.constant 0 : i32
    %c0_i32_0 = arith.constant 0 : i32
    %c0_i32_1 = arith.constant 0 : i32
    return %c0_i32, %c0_i32_0 : i32, i32
  }
  func.func @transform_16(%arg0: i32) -> (i32, i32) {
    %c0_i32 = arith.constant 0 : i32
    %c0_i32_0 = arith.constant 0 : i32
    %c0_i32_1 = arith.constant 0 : i32
    return %c0_i32, %c0_i32_0 : i32, i32
  }
  func.func @transform_17(%arg0: i32) -> (i32, i32) {
    %c0_i32 = arith.constant 0 : i32
    %c0_i32_0 = arith.constant 0 : i32
    %c0_i32_1 = arith.constant 0 : i32
    return %c0_i32, %c0_i32_0 : i32, i32
  }
  func.func @transform_18(%arg0: i32) -> (i32, i32) {
    %c0_i32 = arith.constant 0 : i32
    %c0_i32_0 = arith.constant 0 : i32
    %c0_i32_1 = arith.constant 0 : i32
    return %c0_i32, %c0_i32_0 : i32, i32
  }
  func.func @transform_19(%arg0: i32) -> (i32, i32, i32) {
    %c0_i32 = arith.constant 0 : i32
    %c0_i32_0 = arith.constant 0 : i32
    %c0_i32_1 = arith.constant 0 : i32
    return %arg0, %c0_i32, %c0_i32_0 : i32, i32, i32
  }
}

</mosaic_0001>

<llo_original>
// kernel: transformer_forward.1
$region0: #{transformer_forward.1}
  #allocation0 [shape = 'u32[]', space=smem, size = 0x4, offset = 0x4, fixed_abs, tag = 'smem constant byte address 0x4 - core index']
  #allocation1 [shape = 'u32[144,128]{1,0:T(1,128)}', space=vmem, size = 0x12000, scoped, tag = 'internal scratch']
  %s0 = inlined_call_operand.vmem [shape: f32[2,64,64], index: 0, kind: input, shape index: {}]
  %s1 = inlined_call_operand.vmem [shape: f32[64,512], index: 1, kind: input, shape index: {}]
  %s2 = inlined_call_operand.vmem [shape: f32[1,512], index: 2, kind: input, shape index: {}]
  %s3 = inlined_call_operand.vmem [shape: f32[512,16], index: 3, kind: input, shape index: {}]
  %s4 = inlined_call_operand.vmem [shape: f32[1,16], index: 4, kind: input, shape index: {}]
  %s5 = inlined_call_operand.vmem [shape: f32[64,16], index: 5, kind: input, shape index: {}]
  %s6 = inlined_call_operand.vmem [shape: f32[16,48], index: 6, kind: input, shape index: {}]
  %s7 = inlined_call_operand.vmem [shape: f32[8,1,16], index: 7, kind: input, shape index: {}]
  %s8 = inlined_call_operand.vmem [shape: f32[512,64], index: 8, kind: input, shape index: {}]
  %s9 = inlined_call_operand.vmem [shape: f32[1,16], index: 9, kind: input, shape index: {}]
  %s10 = inlined_call_operand.vmem [shape: f32[1,16], index: 10, kind: input, shape index: {}]
  %s11 = inlined_call_operand.vmem [shape: f32[1,16], index: 11, kind: input, shape index: {}]
  %s12 = inlined_call_operand.vmem [shape: f32[1,16], index: 12, kind: input, shape index: {}]
  %s13 = inlined_call_operand.vmem [shape: f32[16,64], index: 13, kind: input, shape index: {}]
  %s14 = inlined_call_operand.vmem [shape: f32[1,64], index: 14, kind: input, shape index: {}]
  %s15 = inlined_call_operand.vmem [shape: f32[64,16], index: 15, kind: input, shape index: {}]
  %s16 = inlined_call_operand.vmem [shape: f32[1,16], index: 16, kind: input, shape index: {}]
  %s17 = inlined_call_operand.vmem [shape: f32[1,16], index: 17, kind: input, shape index: {}]
  %s18 = inlined_call_operand.vmem [shape: f32[1,16], index: 18, kind: input, shape index: {}]
  %s19 = inlined_call_operand.vmem [shape: f32[2,64,16], index: 19, kind: output, shape index: {}]
  %s20 = sld [smem:[#allocation0]]
  $region109: #{transformer_forward.1} parent=0
    _
  %s22 = ssub.s32 1, %s20
  %s23 = scalar_select 0, %s22, %s20
  loop: start=0, step=1, limit=4
  $region2: #{transformer_forward.1} parent=0 // loop_pre_header
    _
  $region3: #{transformer_forward.1} parent=0 // loop_header
    %s25 = sphi 0, %s29
    %p26 = scmp.ge.s32.totalorder %s25, 4
    %s35 = sphi 0, %s37
    %s38 = sphi 0, %s35
    %s39 = sphi 0, %s38
    %s55 = sphi 0, %s39
    %s59 = sphi 0, %s59
    %s61 = sphi 0, %s59
    %s62 = sphi 0, %s61
    %s76 = sphi 0, %s62
    %s80 = sphi 0, %s80
    %s82 = sphi 0, %s80
    %s83 = sphi 0, %s82
    %s97 = sphi 0, %s83
    %s101 = sphi 0, %s101
    %s103 = sphi 0, %s101
    %s104 = sphi 0, %s103
    %s118 = sphi 0, %s104
    %s122 = sphi 0, %s122
    %s124 = sphi 0, %s122
    %s125 = sphi 0, %s124
    %s139 = sphi 0, %s125
    %s143 = sphi 0, %s143
    %s145 = sphi 0, %s143
    %s146 = sphi 0, %s145
    %s160 = sphi 0, %s146
    %s164 = sphi 0, %s164
    %s166 = sphi 0, %s164
    %s167 = sphi 0, %s166
    %s181 = sphi 0, %s167
    %s185 = sphi 0, %s185
    %s187 = sphi 0, %s185
    %s188 = sphi 0, %s187
    %s202 = sphi 0, %s188
    %s206 = sphi 0, %s206
    %s208 = sphi 0, %s206
    %s209 = sphi 0, %s208
    %s223 = sphi 0, %s209
    %s227 = sphi 0, %s227
    %s229 = sphi 0, %s227
    %s230 = sphi 0, %s229
    %s244 = sphi 0, %s230
    %s248 = sphi 0, %s248
    %s250 = sphi 0, %s248
    %s251 = sphi 0, %s250
    %s265 = sphi 0, %s251
    %s269 = sphi 0, %s269
    %s271 = sphi 0, %s269
    %s272 = sphi 0, %s271
    %s286 = sphi 0, %s272
    %s290 = sphi 0, %s290
    %s292 = sphi 0, %s290
    %s293 = sphi 0, %s292
    %s307 = sphi 0, %s293
    %s311 = sphi 0, %s311
    %s313 = sphi 0, %s311
    %s314 = sphi 0, %s313
    %s328 = sphi 0, %s314
    %s332 = sphi 0, %s332
    %s334 = sphi 0, %s332
    %s335 = sphi 0, %s334
    %s349 = sphi 0, %s335
    %s353 = sphi 0, %s353
    %s355 = sphi 0, %s353
    %s356 = sphi 0, %s355
    %s370 = sphi 0, %s356
    %s374 = sphi 0, %s374
    %s376 = sphi 0, %s374
    %s377 = sphi 0, %s376
    %s391 = sphi 0, %s377
    %s395 = sphi 0, %s395
    %s397 = sphi 0, %s395
    %s398 = sphi 0, %s397
    %s412 = sphi 0, %s398
    %s416 = sphi 0, %s416
    %s418 = sphi 0, %s416
    %s419 = sphi 0, %s418
    %s433 = sphi 0, %s419
    %s439 = sphi 0, %s441
    %s442 = sphi 0, %s439
    %s443 = sphi 0, %s442
    %s459 = sphi 0, %s443
  $region4: #{transformer_forward.1} parent=0 // loop_header_branch
    %28 = sbr.rel (%p26) target = $region8
  $region5: #{transformer_forward.1} parent=0 // loop_body
    %s30 = ssub.s32 %s25, 1
    %s31 = ssub.s32 %s25, 2
    %s32 = sadd.s32 %s25, 1
    %s33 = ssub.s32 %s25, %s32
    %p34 = scmp.eq.s32.totalorder %s33, 0
    %s36 = sadd.s32 %s35, 1
    %s37 = scalar_select %p34, %s35, %s36
    %p40 = pneg %p34
    %p41 = scmp.eq.s32.totalorder %s25, 1
    %p42 = por %p40, %p41
    %p43 = scmp.ne.s32.totalorder %s35, %s38
    %p44 = scmp.eq.s32.totalorder %s25, 0
    %p45 = por %p43, %p44
    %p46 = scmp.ne.s32.totalorder %s35, %s38
    %p47 = scmp.eq.s32.totalorder %s30, 1
    %p48 = por %p46, %p47
    %p49 = scmp.ne.s32.totalorder %s38, %s39
    %p50 = scmp.eq.s32.totalorder %s30, 0
    %p51 = por %p49, %p50
    %p52 = scmp.ne.s32.totalorder %s38, %s39
    %p53 = scmp.eq.s32.totalorder %s31, 1
    %p54 = por %p52, %p53
    %p56 = scmp.ne.s32.totalorder %s39, %s55
    %p57 = scmp.eq.s32.totalorder %s31, 0
    %p58 = por %p56, %p57
    %s60 = sadd.s32 %s59, 1
    %p63 = scmp.eq.s32.totalorder %s25, 1
    %p64 = scmp.ne.s32.totalorder %s59, %s61
    %p65 = scmp.eq.s32.totalorder %s25, 0
    %p66 = por %p64, %p65
    %p67 = scmp.ne.s32.totalorder %s59, %s61
    %p68 = scmp.eq.s32.totalorder %s30, 1
    %p69 = por %p67, %p68
    %p70 = scmp.ne.s32.totalorder %s61, %s62
    %p71 = scmp.eq.s32.totalorder %s30, 0
    %p72 = por %p70, %p71
    %p73 = scmp.ne.s32.totalorder %s61, %s62
    %p74 = scmp.eq.s32.totalorder %s31, 1
    %p75 = por %p73, %p74
    %p77 = scmp.ne.s32.totalorder %s62, %s76
    %p78 = scmp.eq.s32.totalorder %s31, 0
    %p79 = por %p77, %p78
    %s81 = sadd.s32 %s80, 1
    %p84 = scmp.eq.s32.totalorder %s25, 1
    %p85 = scmp.ne.s32.totalorder %s80, %s82
    %p86 = scmp.eq.s32.totalorder %s25, 0
    %p87 = por %p85, %p86
    %p88 = scmp.ne.s32.totalorder %s80, %s82
    %p89 = scmp.eq.s32.totalorder %s30, 1
    %p90 = por %p88, %p89
    %p91 = scmp.ne.s32.totalorder %s82, %s83
    %p92 = scmp.eq.s32.totalorder %s30, 0
    %p93 = por %p91, %p92
    %p94 = scmp.ne.s32.totalorder %s82, %s83
    %p95 = scmp.eq.s32.totalorder %s31, 1
    %p96 = por %p94, %p95
    %p98 = scmp.ne.s32.totalorder %s83, %s97
    %p99 = scmp.eq.s32.totalorder %s31, 0
    %p100 = por %p98, %p99
    %s102 = sadd.s32 %s101, 1
    %p105 = scmp.eq.s32.totalorder %s25, 1
    %p106 = scmp.ne.s32.totalorder %s101, %s103
    %p107 = scmp.eq.s32.totalorder %s25, 0
    %p108 = por %p106, %p107
    %p109 = scmp.ne.s32.totalorder %s101, %s103
    %p110 = scmp.eq.s32.totalorder %s30, 1
    %p111 = por %p109, %p110
    %p112 = scmp.ne.s32.totalorder %s103, %s104
    %p113 = scmp.eq.s32.totalorder %s30, 0
    %p114 = por %p112, %p113
    %p115 = scmp.ne.s32.totalorder %s103, %s104
    %p116 = scmp.eq.s32.totalorder %s31, 1
    %p117 = por %p115, %p116
    %p119 = scmp.ne.s32.totalorder %s104, %s118
    %p120 = scmp.eq.s32.totalorder %s31, 0
    %p121 = por %p119, %p120
    %s123 = sadd.s32 %s122, 1
    %p126 = scmp.eq.s32.totalorder %s25, 1
    %p127 = scmp.ne.s32.totalorder %s122, %s124
    %p128 = scmp.eq.s32.totalorder %s25, 0
    %p129 = por %p127, %p128
    %p130 = scmp.ne.s32.totalorder %s122, %s124
    %p131 = scmp.eq.s32.totalorder %s30, 1
    %p132 = por %p130, %p131
    %p133 = scmp.ne.s32.totalorder %s124, %s125
    %p134 = scmp.eq.s32.totalorder %s30, 0
    %p135 = por %p133, %p134
    %p136 = scmp.ne.s32.totalorder %s124, %s125
    %p137 = scmp.eq.s32.totalorder %s31, 1
    %p138 = por %p136, %p137
    %p140 = scmp.ne.s32.totalorder %s125, %s139
    %p141 = scmp.eq.s32.totalorder %s31, 0
    %p142 = por %p140, %p141
    %s144 = sadd.s32 %s143, 1
    %p147 = scmp.eq.s32.totalorder %s25, 1
    %p148 = scmp.ne.s32.totalorder %s143, %s145
    %p149 = scmp.eq.s32.totalorder %s25, 0
    %p150 = por %p148, %p149
    %p151 = scmp.ne.s32.totalorder %s143, %s145
    %p152 = scmp.eq.s32.totalorder %s30, 1
    %p153 = por %p151, %p152
    %p154 = scmp.ne.s32.totalorder %s145, %s146
    %p155 = scmp.eq.s32.totalorder %s30, 0
    %p156 = por %p154, %p155
    %p157 = scmp.ne.s32.totalorder %s145, %s146
    %p158 = scmp.eq.s32.totalorder %s31, 1
    %p159 = por %p157, %p158
    %p161 = scmp.ne.s32.totalorder %s146, %s160
    %p162 = scmp.eq.s32.totalorder %s31, 0
    %p163 = por %p161, %p162
    %s165 = sadd.s32 %s164, 1
    %p168 = scmp.eq.s32.totalorder %s25, 1
    %p169 = scmp.ne.s32.totalorder %s164, %s166
    %p170 = scmp.eq.s32.totalorder %s25, 0
    %p171 = por %p169, %p170
    %p172 = scmp.ne.s32.totalorder %s164, %s166
    %p173 = scmp.eq.s32.totalorder %s30, 1
    %p174 = por %p172, %p173
    %p175 = scmp.ne.s32.totalorder %s166, %s167
    %p176 = scmp.eq.s32.totalorder %s30, 0
    %p177 = por %p175, %p176
    %p178 = scmp.ne.s32.totalorder %s166, %s167
    %p179 = scmp.eq.s32.totalorder %s31, 1
    %p180 = por %p178, %p179
    %p182 = scmp.ne.s32.totalorder %s167, %s181
    %p183 = scmp.eq.s32.totalorder %s31, 0
    %p184 = por %p182, %p183
    %s186 = sadd.s32 %s185, 1
    %p189 = scmp.eq.s32.totalorder %s25, 1
    %p190 = scmp.ne.s32.totalorder %s185, %s187
    %p191 = scmp.eq.s32.totalorder %s25, 0
    %p192 = por %p190, %p191
    %p193 = scmp.ne.s32.totalorder %s185, %s187
    %p194 = scmp.eq.s32.totalorder %s30, 1
    %p195 = por %p193, %p194
    %p196 = scmp.ne.s32.totalorder %s187, %s188
    %p197 = scmp.eq.s32.totalorder %s30, 0
    %p198 = por %p196, %p197
    %p199 = scmp.ne.s32.totalorder %s187, %s188
    %p200 = scmp.eq.s32.totalorder %s31, 1
    %p201 = por %p199, %p200
    %p203 = scmp.ne.s32.totalorder %s188, %s202
    %p204 = scmp.eq.s32.totalorder %s31, 0
    %p205 = por %p203, %p204
    %s207 = sadd.s32 %s206, 1
    %p210 = scmp.eq.s32.totalorder %s25, 1
    %p211 = scmp.ne.s32.totalorder %s206, %s208
    %p212 = scmp.eq.s32.totalorder %s25, 0
    %p213 = por %p211, %p212
    %p214 = scmp.ne.s32.totalorder %s206, %s208
    %p215 = scmp.eq.s32.totalorder %s30, 1
    %p216 = por %p214, %p215
    %p217 = scmp.ne.s32.totalorder %s208, %s209
    %p218 = scmp.eq.s32.totalorder %s30, 0
    %p219 = por %p217, %p218
    %p220 = scmp.ne.s32.totalorder %s208, %s209
    %p221 = scmp.eq.s32.totalorder %s31, 1
    %p222 = por %p220, %p221
    %p224 = scmp.ne.s32.totalorder %s209, %s223
    %p225 = scmp.eq.s32.totalorder %s31, 0
    %p226 = por %p224, %p225
    %s228 = sadd.s32 %s227, 1
    %p231 = scmp.eq.s32.totalorder %s25, 1
    %p232 = scmp.ne.s32.totalorder %s227, %s229
    %p233 = scmp.eq.s32.totalorder %s25, 0
    %p234 = por %p232, %p233
    %p235 = scmp.ne.s32.totalorder %s227, %s229
    %p236 = scmp.eq.s32.totalorder %s30, 1
    %p237 = por %p235, %p236
    %p238 = scmp.ne.s32.totalorder %s229, %s230
    %p239 = scmp.eq.s32.totalorder %s30, 0
    %p240 = por %p238, %p239
    %p241 = scmp.ne.s32.totalorder %s229, %s230
    %p242 = scmp.eq.s32.totalorder %s31, 1
    %p243 = por %p241, %p242
    %p245 = scmp.ne.s32.totalorder %s230, %s244
    %p246 = scmp.eq.s32.totalorder %s31, 0
    %p247 = por %p245, %p246
    %s249 = sadd.s32 %s248, 1
    %p252 = scmp.eq.s32.totalorder %s25, 1
    %p253 = scmp.ne.s32.totalorder %s248, %s250
    %p254 = scmp.eq.s32.totalorder %s25, 0
    %p255 = por %p253, %p254
    %p256 = scmp.ne.s32.totalorder %s248, %s250
    %p257 = scmp.eq.s32.totalorder %s30, 1
    %p258 = por %p256, %p257
    %p259 = scmp.ne.s32.totalorder %s250, %s251
    %p260 = scmp.eq.s32.totalorder %s30, 0
    %p261 = por %p259, %p260
    %p262 = scmp.ne.s32.totalorder %s250, %s251
    %p263 = scmp.eq.s32.totalorder %s31, 1
    %p264 = por %p262, %p263
    %p266 = scmp.ne.s32.totalorder %s251, %s265
    %p267 = scmp.eq.s32.totalorder %s31, 0
    %p268 = por %p266, %p267
    %s270 = sadd.s32 %s269, 1
    %p273 = scmp.eq.s32.totalorder %s25, 1
    %p274 = scmp.ne.s32.totalorder %s269, %s271
    %p275 = scmp.eq.s32.totalorder %s25, 0
    %p276 = por %p274, %p275
    %p277 = scmp.ne.s32.totalorder %s269, %s271
    %p278 = scmp.eq.s32.totalorder %s30, 1
    %p279 = por %p277, %p278
    %p280 = scmp.ne.s32.totalorder %s271, %s272
    %p281 = scmp.eq.s32.totalorder %s30, 0
    %p282 = por %p280, %p281
    %p283 = scmp.ne.s32.totalorder %s271, %s272
    %p284 = scmp.eq.s32.totalorder %s31, 1
    %p285 = por %p283, %p284
    %p287 = scmp.ne.s32.totalorder %s272, %s286
    %p288 = scmp.eq.s32.totalorder %s31, 0
    %p289 = por %p287, %p288
    %s291 = sadd.s32 %s290, 1
    %p294 = scmp.eq.s32.totalorder %s25, 1
    %p295 = scmp.ne.s32.totalorder %s290, %s292
    %p296 = scmp.eq.s32.totalorder %s25, 0
    %p297 = por %p295, %p296
    %p298 = scmp.ne.s32.totalorder %s290, %s292
    %p299 = scmp.eq.s32.totalorder %s30, 1
    %p300 = por %p298, %p299
    %p301 = scmp.ne.s32.totalorder %s292, %s293
    %p302 = scmp.eq.s32.totalorder %s30, 0
    %p303 = por %p301, %p302
    %p304 = scmp.ne.s32.totalorder %s292, %s293
    %p305 = scmp.eq.s32.totalorder %s31, 1
    %p306 = por %p304, %p305
    %p308 = scmp.ne.s32.totalorder %s293, %s307
    %p309 = scmp.eq.s32.totalorder %s31, 0
    %p310 = por %p308, %p309
    %s312 = sadd.s32 %s311, 1
    %p315 = scmp.eq.s32.totalorder %s25, 1
    %p316 = scmp.ne.s32.totalorder %s311, %s313
    %p317 = scmp.eq.s32.totalorder %s25, 0
    %p318 = por %p316, %p317
    %p319 = scmp.ne.s32.totalorder %s311, %s313
    %p320 = scmp.eq.s32.totalorder %s30, 1
    %p321 = por %p319, %p320
    %p322 = scmp.ne.s32.totalorder %s313, %s314
    %p323 = scmp.eq.s32.totalorder %s30, 0
    %p324 = por %p322, %p323
    %p325 = scmp.ne.s32.totalorder %s313, %s314
    %p326 = scmp.eq.s32.totalorder %s31, 1
    %p327 = por %p325, %p326
    %p329 = scmp.ne.s32.totalorder %s314, %s328
    %p330 = scmp.eq.s32.totalorder %s31, 0
    %p331 = por %p329, %p330
    %s333 = sadd.s32 %s332, 1
    %p336 = scmp.eq.s32.totalorder %s25, 1
    %p337 = scmp.ne.s32.totalorder %s332, %s334
    %p338 = scmp.eq.s32.totalorder %s25, 0
    %p339 = por %p337, %p338
    %p340 = scmp.ne.s32.totalorder %s332, %s334
    %p341 = scmp.eq.s32.totalorder %s30, 1
    %p342 = por %p340, %p341
    %p343 = scmp.ne.s32.totalorder %s334, %s335
    %p344 = scmp.eq.s32.totalorder %s30, 0
    %p345 = por %p343, %p344
    %p346 = scmp.ne.s32.totalorder %s334, %s335
    %p347 = scmp.eq.s32.totalorder %s31, 1
    %p348 = por %p346, %p347
    %p350 = scmp.ne.s32.totalorder %s335, %s349
    %p351 = scmp.eq.s32.totalorder %s31, 0
    %p352 = por %p350, %p351
    %s354 = sadd.s32 %s353, 1
    %p357 = scmp.eq.s32.totalorder %s25, 1
    %p358 = scmp.ne.s32.totalorder %s353, %s355
    %p359 = scmp.eq.s32.totalorder %s25, 0
    %p360 = por %p358, %p359
    %p361 = scmp.ne.s32.totalorder %s353, %s355
    %p362 = scmp.eq.s32.totalorder %s30, 1
    %p363 = por %p361, %p362
    %p364 = scmp.ne.s32.totalorder %s355, %s356
    %p365 = scmp.eq.s32.totalorder %s30, 0
    %p366 = por %p364, %p365
    %p367 = scmp.ne.s32.totalorder %s355, %s356
    %p368 = scmp.eq.s32.totalorder %s31, 1
    %p369 = por %p367, %p368
    %p371 = scmp.ne.s32.totalorder %s356, %s370
    %p372 = scmp.eq.s32.totalorder %s31, 0
    %p373 = por %p371, %p372
    %s375 = sadd.s32 %s374, 1
    %p378 = scmp.eq.s32.totalorder %s25, 1
    %p379 = scmp.ne.s32.totalorder %s374, %s376
    %p380 = scmp.eq.s32.totalorder %s25, 0
    %p381 = por %p379, %p380
    %p382 = scmp.ne.s32.totalorder %s374, %s376
    %p383 = scmp.eq.s32.totalorder %s30, 1
    %p384 = por %p382, %p383
    %p385 = scmp.ne.s32.totalorder %s376, %s377
    %p386 = scmp.eq.s32.totalorder %s30, 0
    %p387 = por %p385, %p386
    %p388 = scmp.ne.s32.totalorder %s376, %s377
    %p389 = scmp.eq.s32.totalorder %s31, 1
    %p390 = por %p388, %p389
    %p392 = scmp.ne.s32.totalorder %s377, %s391
    %p393 = scmp.eq.s32.totalorder %s31, 0
    %p394 = por %p392, %p393
    %s396 = sadd.s32 %s395, 1
    %p399 = scmp.eq.s32.totalorder %s25, 1
    %p400 = scmp.ne.s32.totalorder %s395, %s397
    %p401 = scmp.eq.s32.totalorder %s25, 0
    %p402 = por %p400, %p401
    %p403 = scmp.ne.s32.totalorder %s395, %s397
    %p404 = scmp.eq.s32.totalorder %s30, 1
    %p405 = por %p403, %p404
    %p406 = scmp.ne.s32.totalorder %s397, %s398
    %p407 = scmp.eq.s32.totalorder %s30, 0
    %p408 = por %p406, %p407
    %p409 = scmp.ne.s32.totalorder %s397, %s398
    %p410 = scmp.eq.s32.totalorder %s31, 1
    %p411 = por %p409, %p410
    %p413 = scmp.ne.s32.totalorder %s398, %s412
    %p414 = scmp.eq.s32.totalorder %s31, 0
    %p415 = por %p413, %p414
    %s417 = sadd.s32 %s416, 1
    %p420 = scmp.eq.s32.totalorder %s25, 1
    %p421 = scmp.ne.s32.totalorder %s416, %s418
    %p422 = scmp.eq.s32.totalorder %s25, 0
    %p423 = por %p421, %p422
    %p424 = scmp.ne.s32.totalorder %s416, %s418
    %p425 = scmp.eq.s32.totalorder %s30, 1
    %p426 = por %p424, %p425
    %p427 = scmp.ne.s32.totalorder %s418, %s419
    %p428 = scmp.eq.s32.totalorder %s30, 0
    %p429 = por %p427, %p428
    %p430 = scmp.ne.s32.totalorder %s418, %s419
    %p431 = scmp.eq.s32.totalorder %s31, 1
    %p432 = por %p430, %p431
    %p434 = scmp.ne.s32.totalorder %s419, %s433
    %p435 = scmp.eq.s32.totalorder %s31, 0
    %p436 = por %p434, %p435
    %s437 = ssub.s32 %s25, %s32
    %p438 = scmp.eq.s32.totalorder %s437, 0
    %s440 = sadd.s32 %s439, 1
    %s441 = scalar_select %p438, %s439, %s440
    %p444 = pneg %p438
    %p445 = scmp.eq.s32.totalorder %s25, 1
    %p446 = por %p444, %p445
    %p447 = scmp.ne.s32.totalorder %s439, %s442
    %p448 = scmp.eq.s32.totalorder %s25, 0
    %p449 = por %p447, %p448
    %p450 = scmp.ne.s32.totalorder %s439, %s442
    %p451 = scmp.eq.s32.totalorder %s30, 1
    %p452 = por %p450, %p451
    %p453 = scmp.ne.s32.totalorder %s442, %s443
    %p454 = scmp.eq.s32.totalorder %s30, 0
    %p455 = por %p453, %p454
    %p456 = scmp.ne.s32.totalorder %s442, %s443
    %p457 = scmp.eq.s32.totalorder %s31, 1
    %p458 = por %p456, %p457
    %p460 = scmp.ne.s32.totalorder %s443, %s459
    %p461 = scmp.eq.s32.totalorder %s31, 0
    %p462 = por %p460, %p461
    %p463 = scmp.le.s32.totalorder 1, %s25
    %p464 = scmp.lt.s32.totalorder %s25, 3
    %p465 = pnand %p463, %p464
    %p466 = pneg %p465
    // Predicated region
    $region9: #{transformer_forward.1} parent=5 // pred_check
      _
    $region10: #{transformer_forward.1} parent=5 // pred_check_branch
      %468 = sbr.rel (%p465) target = $region12
    $region11: #{transformer_forward.1} parent=5 // pred_region
      %s469 = ssub.s32 %s25, 1
      // Predicated region
      $region13: #{transformer_forward.1} parent=11 // pred_check
        %p470 = pneg %p72
      $region14: #{transformer_forward.1} parent=11 // pred_check_branch
        %472 = sbr.rel (%p470) target = $region16
      $region15: #{transformer_forward.1} parent=11 // pred_region
        _
      $region16: #{transformer_forward.1} parent=11 // pred_fallthru
        _
      // Predicated region
      $region17: #{transformer_forward.1} parent=11 // pred_check
        %p473 = pneg %p93
      $region18: #{transformer_forward.1} parent=11 // pred_check_branch
        %475 = sbr.rel (%p473) target = $region20
      $region19: #{transformer_forward.1} parent=11 // pred_region
        _
      $region20: #{transformer_forward.1} parent=11 // pred_fallthru
        _
      // Predicated region
      $region21: #{transformer_forward.1} parent=11 // pred_check
        %p476 = pneg %p114
      $region22: #{transformer_forward.1} parent=11 // pred_check_branch
        %478 = sbr.rel (%p476) target = $region24
      $region23: #{transformer_forward.1} parent=11 // pred_region
        _
      $region24: #{transformer_forward.1} parent=11 // pred_fallthru
        _
      // Predicated region
      $region25: #{transformer_forward.1} parent=11 // pred_check
        %p479 = pneg %p135
      $region26: #{transformer_forward.1} parent=11 // pred_check_branch
        %481 = sbr.rel (%p479) target = $region28
      $region27: #{transformer_forward.1} parent=11 // pred_region
        _
      $region28: #{transformer_forward.1} parent=11 // pred_fallthru
        _
      // Predicated region
      $region29: #{transformer_forward.1} parent=11 // pred_check
        %p482 = pneg %p156
      $region30: #{transformer_forward.1} parent=11 // pred_check_branch
        %484 = sbr.rel (%p482) target = $region32
      $region31: #{transformer_forward.1} parent=11 // pred_region
        _
      $region32: #{transformer_forward.1} parent=11 // pred_fallthru
        _
      // Predicated region
      $region33: #{transformer_forward.1} parent=11 // pred_check
        %p485 = pneg %p177
      $region34: #{transformer_forward.1} parent=11 // pred_check_branch
        %487 = sbr.rel (%p485) target = $region36
      $region35: #{transformer_forward.1} parent=11 // pred_region
        _
      $region36: #{transformer_forward.1} parent=11 // pred_fallthru
        _
      // Predicated region
      $region37: #{transformer_forward.1} parent=11 // pred_check
        %p488 = pneg %p198
      $region38: #{transformer_forward.1} parent=11 // pred_check_branch
        %490 = sbr.rel (%p488) target = $region40
      $region39: #{transformer_forward.1} parent=11 // pred_region
        _
      $region40: #{transformer_forward.1} parent=11 // pred_fallthru
        _
      // Predicated region
      $region41: #{transformer_forward.1} parent=11 // pred_check
        %p491 = pneg %p219
      $region42: #{transformer_forward.1} parent=11 // pred_check_branch
        %493 = sbr.rel (%p491) target = $region44
      $region43: #{transformer_forward.1} parent=11 // pred_region
        _
      $region44: #{transformer_forward.1} parent=11 // pred_fallthru
        _
      // Predicated region
      $region45: #{transformer_forward.1} parent=11 // pred_check
        %p494 = pneg %p240
      $region46: #{transformer_forward.1} parent=11 // pred_check_branch
        %496 = sbr.rel (%p494) target = $region48
      $region47: #{transformer_forward.1} parent=11 // pred_region
        _
      $region48: #{transformer_forward.1} parent=11 // pred_fallthru
        _
      // Predicated region
      $region49: #{transformer_forward.1} parent=11 // pred_check
        %p497 = pneg %p261
      $region50: #{transformer_forward.1} parent=11 // pred_check_branch
        %499 = sbr.rel (%p497) target = $region52
      $region51: #{transformer_forward.1} parent=11 // pred_region
        _
      $region52: #{transformer_forward.1} parent=11 // pred_fallthru
        _
      // Predicated region
      $region53: #{transformer_forward.1} parent=11 // pred_check
        %p500 = pneg %p282
      $region54: #{transformer_forward.1} parent=11 // pred_check_branch
        %502 = sbr.rel (%p500) target = $region56
      $region55: #{transformer_forward.1} parent=11 // pred_region
        _
      $region56: #{transformer_forward.1} parent=11 // pred_fallthru
        _
      // Predicated region
      $region57: #{transformer_forward.1} parent=11 // pred_check
        %p503 = pneg %p303
      $region58: #{transformer_forward.1} parent=11 // pred_check_branch
        %505 = sbr.rel (%p503) target = $region60
      $region59: #{transformer_forward.1} parent=11 // pred_region
        _
      $region60: #{transformer_forward.1} parent=11 // pred_fallthru
        _
      // Predicated region
      $region61: #{transformer_forward.1} parent=11 // pred_check
        %p506 = pneg %p324
      $region62: #{transformer_forward.1} parent=11 // pred_check_branch
        %508 = sbr.rel (%p506) target = $region64
      $region63: #{transformer_forward.1} parent=11 // pred_region
        _
      $region64: #{transformer_forward.1} parent=11 // pred_fallthru
        _
      // Predicated region
      $region65: #{transformer_forward.1} parent=11 // pred_check
        %p509 = pneg %p345
      $region66: #{transformer_forward.1} parent=11 // pred_check_branch
        %511 = sbr.rel (%p509) target = $region68
      $region67: #{transformer_forward.1} parent=11 // pred_region
        _
      $region68: #{transformer_forward.1} parent=11 // pred_fallthru
        _
      // Predicated region
      $region69: #{transformer_forward.1} parent=11 // pred_check
        %p512 = pneg %p366
      $region70: #{transformer_forward.1} parent=11 // pred_check_branch
        %514 = sbr.rel (%p512) target = $region72
      $region71: #{transformer_forward.1} parent=11 // pred_region
        _
      $region72: #{transformer_forward.1} parent=11 // pred_fallthru
        _
      // Predicated region
      $region73: #{transformer_forward.1} parent=11 // pred_check
        %p515 = pneg %p387
      $region74: #{transformer_forward.1} parent=11 // pred_check_branch
        %517 = sbr.rel (%p515) target = $region76
      $region75: #{transformer_forward.1} parent=11 // pred_region
        _
      $region76: #{transformer_forward.1} parent=11 // pred_fallthru
        _
      // Predicated region
      $region77: #{transformer_forward.1} parent=11 // pred_check
        %p518 = pneg %p408
      $region78: #{transformer_forward.1} parent=11 // pred_check_branch
        %520 = sbr.rel (%p518) target = $region80
      $region79: #{transformer_forward.1} parent=11 // pred_region
        _
      $region80: #{transformer_forward.1} parent=11 // pred_fallthru
        _
      // Predicated region
      $region81: #{transformer_forward.1} parent=11 // pred_check
        %p521 = pneg %p429
      $region82: #{transformer_forward.1} parent=11 // pred_check_branch
        %523 = sbr.rel (%p521) target = $region84
      $region83: #{transformer_forward.1} parent=11 // pred_region
        _
      $region84: #{transformer_forward.1} parent=11 // pred_fallthru
        _
    $region12: #{transformer_forward.1} parent=5 // pred_fallthru
      _
    %p524 = scmp.lt.s32.totalorder %s25, 2
    // Predicated region
    $region85: #{transformer_forward.1} parent=5 // pred_check
      %p525 = pneg %p524
    $region86: #{transformer_forward.1} parent=5 // pred_check_branch
      %527 = sbr.rel (%p525) target = $region88
    $region87: #{transformer_forward.1} parent=5 // pred_region
      // Predicated region
      $region89: #{transformer_forward.1} parent=87 // pred_check
        %p528 = pneg %p45
      $region90: #{transformer_forward.1} parent=87 // pred_check_branch
        %530 = sbr.rel (%p528) target = $region92
      $region91: #{transformer_forward.1} parent=87 // pred_region
        %p531 = scmp.lt.s32.totalorder %s25, 1
        %s532 = scalar_select %p531, %s25, 1
        %s533 = smul.addr %s532, 8
        %s534 = smul.addr %s533, 8
        %s535 = scalar_lea.vmem %s0, %s534
      $region92: #{transformer_forward.1} parent=87 // pred_fallthru
        _
    $region88: #{transformer_forward.1} parent=5 // pred_fallthru
      _
    %p536 = scmp.le.s32.totalorder 1, %s25
    %p537 = scmp.lt.s32.totalorder %s25, 3
    %p538 = pnand %p536, %p537
    %p539 = pneg %p538
    // Predicated region
    $region93: #{transformer_forward.1} parent=5 // pred_check
      _
    $region94: #{transformer_forward.1} parent=5 // pred_check_branch
      %541 = sbr.rel (%p538) target = $region96
    $region95: #{transformer_forward.1} parent=5 // pred_region
      %s542 = ssub.s32 %s25, 1
      %p543 = scmp.lt.s32.totalorder %s30, 1
      %s544 = scalar_select %p543, %s30, 1
      %s545 = smul.addr %s544, 8
      %s546 = smul.addr %s545, 8
      %s547 = scalar_lea.vmem %s0, %s546
      %p548 = pneg %p51
      %p549 = pneg %p48
      %p550 = pneg %p72
      %p551 = pneg %p69
      %p552 = pneg %p93
      %p553 = pneg %p90
      %p554 = pneg %p114
      %p555 = pneg %p111
      %p556 = pneg %p135
      %p557 = pneg %p132
      %p558 = pneg %p156
      %p559 = pneg %p153
      %p560 = pneg %p177
      %p561 = pneg %p174
      %p562 = pneg %p198
      %p563 = pneg %p195
      %p564 = pneg %p219
      %p565 = pneg %p216
      %p566 = pneg %p240
      %p567 = pneg %p237
      %p568 = pneg %p261
      %p569 = pneg %p258
      %p570 = pneg %p282
      %p571 = pneg %p279
      %p572 = pneg %p303
      %p573 = pneg %p300
      %p574 = pneg %p324
      %p575 = pneg %p321
      %p576 = pneg %p345
      %p577 = pneg %p342
      %p578 = pneg %p366
      %p579 = pneg %p363
      %p580 = pneg %p387
      %p581 = pneg %p384
      %p582 = pneg %p408
      %p583 = pneg %p405
      %p584 = pneg %p429
      %p585 = pneg %p426
      %p586 = pneg %p455
      %p587 = pneg %p452
      %p588 = scmp.lt.s32.totalorder %s30, 1
      %s589 = scalar_select %p588, %s30, 1
      %s590 = smul.addr %s589, 8
      %s591 = smul.addr %s590, 8
      %s592 = scalar_lea.vmem %s19, %s591
      %p593 = scmp.lt.s32.totalorder %s30, 1
      %s594 = scalar_select %p593, %s30, 1
      %s595 = smul.addr %s594, 8
      %s596 = smul.addr %s595, 8
      %s597 = scalar_lea.vmem %s0, %s596
      %p598 = scmp.lt.s32.totalorder %s30, 1
      %s599 = scalar_select %p598, %s30, 1
      %s600 = smul.addr %s599, 8
      %s601 = smul.addr %s600, 8
      %s602 = scalar_lea.vmem %s19, %s601
      %v603 = vld [vmem:[%s597] sm:$0xff]
      %v604 = vld [vmem:[%s597 + $0x8] sm:$0xff]
      %v605 = vld [vmem:[%s597 + $0x10] sm:$0xff]
      %v606 = vld [vmem:[%s597 + $0x18] sm:$0xff]
      %v607 = vld [vmem:[%s597 + $0x20] sm:$0xff]
      %v608 = vld [vmem:[%s597 + $0x28] sm:$0xff]
      %v609 = vld [vmem:[%s597 + $0x30] sm:$0xff]
      %v610 = vld [vmem:[%s597 + $0x38] sm:$0xff]
      %v611 = vld [vmem:[%s1] sm:$0xff]
      %v612 = vld [vmem:[%s1 + $0x8] sm:$0xff]
      %v613 = vld [vmem:[%s1 + $0x10] sm:$0xff]
      %v614 = vld [vmem:[%s1 + $0x18] sm:$0xff]
      %v615 = vld [vmem:[%s1 + $0x20] sm:$0xff]
      %v616 = vld [vmem:[%s1 + $0x28] sm:$0xff]
      %v617 = vld [vmem:[%s1 + $0x30] sm:$0xff]
      %v618 = vld [vmem:[%s1 + $0x38] sm:$0xff]
      %v619 = vld [vmem:[%s1 + $0x40] sm:$0xff]
      %v620 = vld [vmem:[%s1 + $0x48] sm:$0xff]
      %v621 = vld [vmem:[%s1 + $0x50] sm:$0xff]
      %v622 = vld [vmem:[%s1 + $0x58] sm:$0xff]
      %v623 = vld [vmem:[%s1 + $0x60] sm:$0xff]
      %v624 = vld [vmem:[%s1 + $0x68] sm:$0xff]
      %v625 = vld [vmem:[%s1 + $0x70] sm:$0xff]
      %v626 = vld [vmem:[%s1 + $0x78] sm:$0xff]
      %v627 = vld [vmem:[%s1 + $0x80] sm:$0xff]
      %v628 = vld [vmem:[%s1 + $0x88] sm:$0xff]
      %v629 = vld [vmem:[%s1 + $0x90] sm:$0xff]
      %v630 = vld [vmem:[%s1 + $0x98] sm:$0xff]
      %v631 = vld [vmem:[%s1 + $0xa0] sm:$0xff]
      %v632 = vld [vmem:[%s1 + $0xa8] sm:$0xff]
      %v633 = vld [vmem:[%s1 + $0xb0] sm:$0xff]
      %v634 = vld [vmem:[%s1 + $0xb8] sm:$0xff]
      %v635 = vld [vmem:[%s1 + $0xc0] sm:$0xff]
      %v636 = vld [vmem:[%s1 + $0xc8] sm:$0xff]
      %v637 = vld [vmem:[%s1 + $0xd0] sm:$0xff]
      %v638 = vld [vmem:[%s1 + $0xd8] sm:$0xff]
      %v639 = vld [vmem:[%s1 + $0xe0] sm:$0xff]
      %v640 = vld [vmem:[%s1 + $0xe8] sm:$0xff]
      %v641 = vld [vmem:[%s1 + $0xf0] sm:$0xff]
      %v642 = vld [vmem:[%s1 + $0xf8] sm:$0xff]
      %v643 = vld [vmem:[%s2] sm:$0xf]
      %v645 = vlaneseq
      %v646 = vshrl.u32 %v645, 7
      %v647 = vsub.s32 0, %v646
      %v648 = vrot.slane %v643, %v647
      %v649 = vlaneseq
      %v650 = vshrl.u32 %v649, 7
      %v651 = vsub.s32 1, %v650
      %v652 = vrot.slane %v643, %v651
      %v653 = vlaneseq
      %v654 = vshrl.u32 %v653, 7
      %v655 = vsub.s32 2, %v654
      %v656 = vrot.slane %v643, %v655
      %v657 = vlaneseq
      %v658 = vshrl.u32 %v657, 7
      %v659 = vsub.s32 3, %v658
      %v660 = vrot.slane %v643, %v659
      %vm665 = vcmask 523264
      %v667 = vsel %vm665, %v603, 0
      %v670 = vsel %vm665, %v604, 0
      %v673 = vsel %vm665, %v605, 0
      %v676 = vsel %vm665, %v606, 0
      %v679 = vsel %vm665, %v607, 0
      %v682 = vsel %vm665, %v608, 0
      %v685 = vsel %vm665, %v609, 0
      %v688 = vsel %vm665, %v610, 0
      %690 = vmatprep.subr.mxu0 %v612
      %691 = vmatpush1.msra.mxu0 %v611
      %692 = vmatprep.subr.mxu0 %v616
      %693 = vmatpush1.msra.mxu0 %v615
      %694 = vmatprep.subr.mxu0 %v620
      %695 = vmatpush1.msra.mxu0 %v619
      %696 = vmatprep.subr.mxu0 %v624
      %697 = vmatpush1.msra.mxu0 %v623
      %698 = vmatprep.subr.mxu0 %v628
      %699 = vmatpush1.msra.mxu0 %v627
      %700 = vmatprep.subr.mxu0 %v632
      %701 = vmatpush1.msra.mxu0 %v631
      %702 = vmatprep.subr.mxu0 %v636
      %703 = vmatpush1.msra.mxu0 %v635
      %704 = vmatprep.subr.mxu0 %v640
      %705 = vmatpush1.msra.mxu0 %v639
      %706 = vmatprep.subr.mxu0 0.0
      %707 = vmatpush1.msra.mxu0 0.0
      %708 = vmatprep.subr.mxu0 0.0
      %709 = vmatpush1.msra.mxu0 0.0
      %710 = vmatprep.subr.mxu0 0.0
      %711 = vmatpush1.msra.mxu0 0.0
      %712 = vmatprep.subr.mxu0 0.0
      %713 = vmatpush1.msra.mxu0 0.0
      %714 = vmatprep.subr.mxu0 0.0
      %715 = vmatpush1.msra.mxu0 0.0
      %716 = vmatprep.subr.mxu0 0.0
      %717 = vmatpush1.msra.mxu0 0.0
      %718 = vmatprep.subr.mxu0 0.0
      %719 = vmatpush1.msra.mxu0 0.0
      %720 = vmatprep.subr.mxu0 0.0
      %721 = vmatpush1.msra.mxu0 0.0
      %722 = vmatprep.subr.mxu0 0.0
      %723 = vmatpush1.msra.mxu0 0.0
      %724 = vmatprep.subr.mxu0 0.0
      %725 = vmatpush1.msra.mxu0 0.0
      %726 = vmatprep.subr.mxu0 0.0
      %727 = vmatpush1.msra.mxu0 0.0
      %728 = vmatprep.subr.mxu0 0.0
      %729 = vmatpush1.msra.mxu0 0.0
      %730 = vmatprep.subr.mxu0 0.0
      %731 = vmatpush1.msra.mxu0 0.0
      %732 = vmatprep.subr.mxu0 0.0
      %733 = vmatpush1.msra.mxu0 0.0
      %734 = vmatprep.subr.mxu0 0.0
      %735 = vmatpush1.msra.mxu0 0.0
      %736 = vmatprep.subr.mxu0 0.0
      %737 = vmatpush1.msra.mxu0 0.0
      %738 = vmatprep.subr.mxu0 0.0
      %739 = vmatpush1.msra.mxu0 0.0
      %740 = vmatprep.subr.mxu0 0.0
      %741 = vmatpush1.msra.mxu0 0.0
      %742 = vmatprep.subr.mxu0 0.0
      %743 = vmatpush1.msra.mxu0 0.0
      %744 = vmatprep.subr.mxu0 0.0
      %745 = vmatpush1.msra.mxu0 0.0
      %746 = vmatprep.subr.mxu0 0.0
      %747 = vmatpush1.msra.mxu0 0.0
      %748 = vmatprep.subr.mxu0 0.0
      %749 = vmatpush1.msra.mxu0 0.0
      %750 = vmatprep.subr.mxu0 0.0
      %751 = vmatpush1.msra.mxu0 0.0
      %752 = vmatprep.subr.mxu0 0.0
      %753 = vmatpush1.msra.mxu0 0.0
      %754 = vmatprep.mubr.f32.mxu0 0.0
      %755 = vmatmul.mubr.f32.gmra.mrb[0].mxu0 %v667
      %v756 = vpop.f32.mrb[0].mxu0
      %v757 = vadd.f32 %v648, %v756
      %v758 = vpop.f32.mrb[0].mxu0
      %v759 = vadd.f32 %v652, %v758
      %760 = vmatprep.mubr.f32.mxu0 0.0
      %761 = vmatmul.mubr.f32.gmra.mrb[0].mxu0 %v670
      %v762 = vpop.f32.mrb[0].mxu0
      %v763 = vadd.f32 %v648, %v762
      %v764 = vpop.f32.mrb[0].mxu0
      %v765 = vadd.f32 %v652, %v764
      %766 = vmatprep.mubr.f32.mxu0 0.0
      %767 = vmatmul.mubr.f32.gmra.mrb[0].mxu0 %v673
      %v768 = vpop.f32.mrb[0].mxu0
      %v769 = vadd.f32 %v648, %v768
      %v770 = vpop.f32.mrb[0].mxu0
      %v771 = vadd.f32 %v652, %v770
      %772 = vmatprep.mubr.f32.mxu0 0.0
      %773 = vmatmul.mubr.f32.gmra.mrb[0].mxu0 %v676
      %v774 = vpop.f32.mrb[0].mxu0
      %v775 = vadd.f32 %v648, %v774
      %v776 = vpop.f32.mrb[0].mxu0
      %v777 = vadd.f32 %v652, %v776
      %778 = vmatprep.mubr.f32.mxu0 0.0
      %779 = vmatmul.mubr.f32.gmra.mrb[0].mxu0 %v679
      %v780 = vpop.f32.mrb[0].mxu0
      %v781 = vadd.f32 %v648, %v780
      %v782 = vpop.f32.mrb[0].mxu0
      %v783 = vadd.f32 %v652, %v782
      %784 = vmatprep.mubr.f32.mxu0 0.0
      %785 = vmatmul.mubr.f32.gmra.mrb[0].mxu0 %v682
      %v786 = vpop.f32.mrb[0].mxu0
      %v787 = vadd.f32 %v648, %v786
      %v788 = vpop.f32.mrb[0].mxu0
      %v789 = vadd.f32 %v652, %v788
      %790 = vmatprep.mubr.f32.mxu0 0.0
      %791 = vmatmul.mubr.f32.gmra.mrb[0].mxu0 %v685
      %v792 = vpop.f32.mrb[0].mxu0
      %v793 = vadd.f32 %v648, %v792
      %v794 = vpop.f32.mrb[0].mxu0
      %v795 = vadd.f32 %v652, %v794
      %796 = vmatprep.mubr.f32.mxu0 0.0
      %797 = vmatmul.mubr.f32.gmra.mrb[0].mxu0 %v688
      %v798 = vpop.f32.mrb[0].mxu0
      %v799 = vadd.f32 %v648, %v798
      %v800 = vpop.f32.mrb[0].mxu0
      %v801 = vadd.f32 %v652, %v800
      %802 = vdwg.mxu0
      %803 = vmatprep.subr.mxu0 %v614
      %804 = vmatpush1.msra.mxu0 %v613
      %805 = vmatprep.subr.mxu0 %v618
      %806 = vmatpush1.msra.mxu0 %v617
      %807 = vmatprep.subr.mxu0 %v622
      %808 = vmatpush1.msra.mxu0 %v621
      %809 = vmatprep.subr.mxu0 %v626
      %810 = vmatpush1.msra.mxu0 %v625
      %811 = vmatprep.subr.mxu0 %v630
      %812 = vmatpush1.msra.mxu0 %v629
      %813 = vmatprep.subr.mxu0 %v634
      %814 = vmatpush1.msra.mxu0 %v633
      %815 = vmatprep.subr.mxu0 %v638
      %816 = vmatpush1.msra.mxu0 %v637
      %817 = vmatprep.subr.mxu0 %v642
      %818 = vmatpush1.msra.mxu0 %v641
      %819 = vmatprep.subr.mxu0 0.0
      %820 = vmatpush1.msra.mxu0 0.0
      %821 = vmatprep.subr.mxu0 0.0
      %822 = vmatpush1.msra.mxu0 0.0
      %823 = vmatprep.subr.mxu0 0.0
      %824 = vmatpush1.msra.mxu0 0.0
      %825 = vmatprep.subr.mxu0 0.0
      %826 = vmatpush1.msra.mxu0 0.0
      %827 = vmatprep.subr.mxu0 0.0
      %828 = vmatpush1.msra.mxu0 0.0
      %829 = vmatprep.subr.mxu0 0.0
      %830 = vmatpush1.msra.mxu0 0.0
      %831 = vmatprep.subr.mxu0 0.0
      %832 = vmatpush1.msra.mxu0 0.0
      %833 = vmatprep.subr.mxu0 0.0
      %834 = vmatpush1.msra.mxu0 0.0
      %835 = vmatprep.subr.mxu0 0.0
      %836 = vmatpush1.msra.mxu0 0.0
      %837 = vmatprep.subr.mxu0 0.0
      %838 = vmatpush1.msra.mxu0 0.0
      %839 = vmatprep.subr.mxu0 0.0
      %840 = vmatpush1.msra.mxu0 0.0
      %841 = vmatprep.subr.mxu0 0.0
      %842 = vmatpush1.msra.mxu0 0.0
      %843 = vmatprep.subr.mxu0 0.0
      %844 = vmatpush1.msra.mxu0 0.0
      %845 = vmatprep.subr.mxu0 0.0
      %846 = vmatpush1.msra.mxu0 0.0
      %847 = vmatprep.subr.mxu0 0.0
      %848 = vmatpush1.msra.mxu0 0.0
      %849 = vmatprep.subr.mxu0 0.0
      %850 = vmatpush1.msra.mxu0 0.0
      %851 = vmatprep.subr.mxu0 0.0
      %852 = vmatpush1.msra.mxu0 0.0
      %853 = vmatprep.subr.mxu0 0.0
      %854 = vmatpush1.msra.mxu0 0.0
      %855 = vmatprep.subr.mxu0 0.0
      %856 = vmatpush1.msra.mxu0 0.0
      %857 = vmatprep.subr.mxu0 0.0
      %858 = vmatpush1.msra.mxu0 0.0
      %859 = vmatprep.subr.mxu0 0.0
      %860 = vmatpush1.msra.mxu0 0.0
      %861 = vmatprep.subr.mxu0 0.0
      %862 = vmatpush1.msra.mxu0 0.0
      %863 = vmatprep.subr.mxu0 0.0
      %864 = vmatpush1.msra.mxu0 0.0
      %865 = vmatprep.subr.mxu0 0.0
      %866 = vmatpush1.msra.mxu0 0.0
      %867 = vmatprep.mubr.f32.mxu0 0.0
      %868 = vmatmul.mubr.f32.gmra.mrb[0].mxu0 %v667
      %v869 = vpop.f32.mrb[0].mxu0
      %v870 = vadd.f32 %v656, %v869
      %v871 = vpop.f32.mrb[0].mxu0
      %v872 = vadd.f32 %v660, %v871
      %873 = vmatprep.mubr.f32.mxu0 0.0
      %874 = vmatmul.mubr.f32.gmra.mrb[0].mxu0 %v670
      %v875 = vpop.f32.mrb[0].mxu0
      %v876 = vadd.f32 %v656, %v875
      %v877 = vpop.f32.mrb[0].mxu0
      %v878 = vadd.f32 %v660, %v877
      %879 = vmatprep.mubr.f32.mxu0 0.0
      %880 = vmatmul.mubr.f32.gmra.mrb[0].mxu0 %v673
      %v881 = vpop.f32.mrb[0].mxu0
      %v882 = vadd.f32 %v656, %v881
      %v883 = vpop.f32.mrb[0].mxu0
      %v884 = vadd.f32 %v660, %v883
      %885 = vmatprep.mubr.f32.mxu0 0.0
      %886 = vmatmul.mubr.f32.gmra.mrb[0].mxu0 %v676
      %v887 = vpop.f32.mrb[0].mxu0
      %v888 = vadd.f32 %v656, %v887
      %v889 = vpop.f32.mrb[0].mxu0
      %v890 = vadd.f32 %v660, %v889
      %891 = vmatprep.mubr.f32.mxu0 0.0
      %892 = vmatmul.mubr.f32.gmra.mrb[0].mxu0 %v679
      %v893 = vpop.f32.mrb[0].mxu0
      %v894 = vadd.f32 %v656, %v893
      %v895 = vpop.f32.mrb[0].mxu0
      %v896 = vadd.f32 %v660, %v895
      %897 = vmatprep.mubr.f32.mxu0 0.0
      %898 = vmatmul.mubr.f32.gmra.mrb[0].mxu0 %v682
      %v899 = vpop.f32.mrb[0].mxu0
      %v900 = vadd.f32 %v656, %v899
      %v901 = vpop.f32.mrb[0].mxu0
      %v902 = vadd.f32 %v660, %v901
      %903 = vmatprep.mubr.f32.mxu0 0.0
      %904 = vmatmul.mubr.f32.gmra.mrb[0].mxu0 %v685
      %v905 = vpop.f32.mrb[0].mxu0
      %v906 = vadd.f32 %v656, %v905
      %v907 = vpop.f32.mrb[0].mxu0
      %v908 = vadd.f32 %v660, %v907
      %909 = vmatprep.mubr.f32.mxu0 0.0
      %910 = vmatmul.mubr.f32.gmra.mrb[0].mxu0 %v688
      %v911 = vpop.f32.mrb[0].mxu0
      %v912 = vadd.f32 %v656, %v911
      %v913 = vpop.f32.mrb[0].mxu0
      %v914 = vadd.f32 %v660, %v913
      %915 = vdwg.mxu0
      %v916 = vmul.f32 %v757, 0.5
      %v917 = vmul.f32 %v759, 0.5
      %v918 = vmul.f32 %v870, 0.5
      %v919 = vmul.f32 %v872, 0.5
      %v920 = vmul.f32 %v763, 0.5
      %v921 = vmul.f32 %v765, 0.5
      %v922 = vmul.f32 %v876, 0.5
      %v923 = vmul.f32 %v878, 0.5
      %v924 = vmul.f32 %v769, 0.5
      %v925 = vmul.f32 %v771, 0.5
      %v926 = vmul.f32 %v882, 0.5
      %v927 = vmul.f32 %v884, 0.5
      %v928 = vmul.f32 %v775, 0.5
      %v929 = vmul.f32 %v777, 0.5
      %v930 = vmul.f32 %v888, 0.5
      %v931 = vmul.f32 %v890, 0.5
      %v932 = vmul.f32 %v781, 0.5
      %v933 = vmul.f32 %v783, 0.5
      %v934 = vmul.f32 %v894, 0.5
      %v935 = vmul.f32 %v896, 0.5
      %v936 = vmul.f32 %v787, 0.5
      %v937 = vmul.f32 %v789, 0.5
      %v938 = vmul.f32 %v900, 0.5
      %v939 = vmul.f32 %v902, 0.5
      %v940 = vmul.f32 %v793, 0.5
      %v941 = vmul.f32 %v795, 0.5
      %v942 = vmul.f32 %v906, 0.5
      %v943 = vmul.f32 %v908, 0.5
      %v944 = vmul.f32 %v799, 0.5
      %v945 = vmul.f32 %v801, 0.5
      %v946 = vmul.f32 %v912, 0.5
      %v947 = vmul.f32 %v914, 0.5
      %v948 = vmul.f32 %v757, 0.70710677
      %v949 = vmul.f32 %v759, 0.70710677
      %v950 = vmul.f32 %v870, 0.70710677
      %v951 = vmul.f32 %v872, 0.70710677
      %v952 = vmul.f32 %v763, 0.70710677
      %v953 = vmul.f32 %v765, 0.70710677
      %v954 = vmul.f32 %v876, 0.70710677
      %v955 = vmul.f32 %v878, 0.70710677
      %v956 = vmul.f32 %v769, 0.70710677
      %v957 = vmul.f32 %v771, 0.70710677
      %v958 = vmul.f32 %v882, 0.70710677
      %v959 = vmul.f32 %v884, 0.70710677
      %v960 = vmul.f32 %v775, 0.70710677
      %v961 = vmul.f32 %v777, 0.70710677
      %v962 = vmul.f32 %v888, 0.70710677
      %v963 = vmul.f32 %v890, 0.70710677
      %v964 = vmul.f32 %v781, 0.70710677
      %v965 = vmul.f32 %v783, 0.70710677
      %v966 = vmul.f32 %v894, 0.70710677
      %v967 = vmul.f32 %v896, 0.70710677
      %v968 = vmul.f32 %v787, 0.70710677
      %v969 = vmul.f32 %v789, 0.70710677
      %v970 = vmul.f32 %v900, 0.70710677
      %v971 = vmul.f32 %v902, 0.70710677
      %v972 = vmul.f32 %v793, 0.70710677
      %v973 = vmul.f32 %v795, 0.70710677
      %v974 = vmul.f32 %v906, 0.70710677
      %v975 = vmul.f32 %v908, 0.70710677
      %v976 = vmul.f32 %v799, 0.70710677
      %v977 = vmul.f32 %v801, 0.70710677
      %v978 = vmul.f32 %v912, 0.70710677
      %v979 = vmul.f32 %v914, 0.70710677
      %vm980 = vcmp.ge.f32.partialorder %v948, 0.0
      %vm981 = vcmp.ge.f32.partialorder %v949, 0.0
      %vm982 = vcmp.ge.f32.partialorder %v950, 0.0
      %vm983 = vcmp.ge.f32.partialorder %v951, 0.0
      %vm984 = vcmp.ge.f32.partialorder %v952, 0.0
      %vm985 = vcmp.ge.f32.partialorder %v953, 0.0
      %vm986 = vcmp.ge.f32.partialorder %v954, 0.0
      %vm987 = vcmp.ge.f32.partialorder %v955, 0.0
      %vm988 = vcmp.ge.f32.partialorder %v956, 0.0
      %vm989 = vcmp.ge.f32.partialorder %v957, 0.0
      %vm990 = vcmp.ge.f32.partialorder %v958, 0.0
      %vm991 = vcmp.ge.f32.partialorder %v959, 0.0
      %vm992 = vcmp.ge.f32.partialorder %v960, 0.0
      %vm993 = vcmp.ge.f32.partialorder %v961, 0.0
      %vm994 = vcmp.ge.f32.partialorder %v962, 0.0
      %vm995 = vcmp.ge.f32.partialorder %v963, 0.0
      %vm996 = vcmp.ge.f32.partialorder %v964, 0.0
      %vm997 = vcmp.ge.f32.partialorder %v965, 0.0
      %vm998 = vcmp.ge.f32.partialorder %v966, 0.0
      %vm999 = vcmp.ge.f32.partialorder %v967, 0.0
      %vm1000 = vcmp.ge.f32.partialorder %v968, 0.0
      %vm1001 = vcmp.ge.f32.partialorder %v969, 0.0
      %vm1002 = vcmp.ge.f32.partialorder %v970, 0.0
      %vm1003 = vcmp.ge.f32.partialorder %v971, 0.0
      %vm1004 = vcmp.ge.f32.partialorder %v972, 0.0
      %vm1005 = vcmp.ge.f32.partialorder %v973, 0.0
      %vm1006 = vcmp.ge.f32.partialorder %v974, 0.0
      %vm1007 = vcmp.ge.f32.partialorder %v975, 0.0
      %vm1008 = vcmp.ge.f32.partialorder %v976, 0.0
      %vm1009 = vcmp.ge.f32.partialorder %v977, 0.0
      %vm1010 = vcmp.ge.f32.partialorder %v978, 0.0
      %vm1011 = vcmp.ge.f32.partialorder %v979, 0.0
      %v1012 = vsel %vm980, 1.0, -1.0
      %v1013 = vsel %vm981, 1.0, -1.0
      %v1014 = vsel %vm982, 1.0, -1.0
      %v1015 = vsel %vm983, 1.0, -1.0
      %v1016 = vsel %vm984, 1.0, -1.0
      %v1017 = vsel %vm985, 1.0, -1.0
      %v1018 = vsel %vm986, 1.0, -1.0
      %v1019 = vsel %vm987, 1.0, -1.0
      %v1020 = vsel %vm988, 1.0, -1.0
      %v1021 = vsel %vm989, 1.0, -1.0
      %v1022 = vsel %vm990, 1.0, -1.0
      %v1023 = vsel %vm991, 1.0, -1.0
      %v1024 = vsel %vm992, 1.0, -1.0
      %v1025 = vsel %vm993, 1.0, -1.0
      %v1026 = vsel %vm994, 1.0, -1.0
      %v1027 = vsel %vm995, 1.0, -1.0
      %v1028 = vsel %vm996, 1.0, -1.0
      %v1029 = vsel %vm997, 1.0, -1.0
      %v1030 = vsel %vm998, 1.0, -1.0
      %v1031 = vsel %vm999, 1.0, -1.0
      %v1032 = vsel %vm1000, 1.0, -1.0
      %v1033 = vsel %vm1001, 1.0, -1.0
      %v1034 = vsel %vm1002, 1.0, -1.0
      %v1035 = vsel %vm1003, 1.0, -1.0
      %v1036 = vsel %vm1004, 1.0, -1.0
      %v1037 = vsel %vm1005, 1.0, -1.0
      %v1038 = vsel %vm1006, 1.0, -1.0
      %v1039 = vsel %vm1007, 1.0, -1.0
      %v1040 = vsel %vm1008, 1.0, -1.0
      %v1041 = vsel %vm1009, 1.0, -1.0
      %v1042 = vsel %vm1010, 1.0, -1.0
      %v1043 = vsel %vm1011, 1.0, -1.0
      %v1044 = vand.u32 2147483647, %v948
      %v1045 = vand.u32 2147483647, %v949
      %v1046 = vand.u32 2147483647, %v950
      %v1047 = vand.u32 2147483647, %v951
      %v1048 = vand.u32 2147483647, %v952
      %v1049 = vand.u32 2147483647, %v953
      %v1050 = vand.u32 2147483647, %v954
      %v1051 = vand.u32 2147483647, %v955
      %v1052 = vand.u32 2147483647, %v956
      %v1053 = vand.u32 2147483647, %v957
      %v1054 = vand.u32 2147483647, %v958
      %v1055 = vand.u32 2147483647, %v959
      %v1056 = vand.u32 2147483647, %v960
      %v1057 = vand.u32 2147483647, %v961
      %v1058 = vand.u32 2147483647, %v962
      %v1059 = vand.u32 2147483647, %v963
      %v1060 = vand.u32 2147483647, %v964
      %v1061 = vand.u32 2147483647, %v965
      %v1062 = vand.u32 2147483647, %v966
      %v1063 = vand.u32 2147483647, %v967
      %v1064 = vand.u32 2147483647, %v968
      %v1065 = vand.u32 2147483647, %v969
      %v1066 = vand.u32 2147483647, %v970
      %v1067 = vand.u32 2147483647, %v971
      %v1068 = vand.u32 2147483647, %v972
      %v1069 = vand.u32 2147483647, %v973
      %v1070 = vand.u32 2147483647, %v974
      %v1071 = vand.u32 2147483647, %v975
      %v1072 = vand.u32 2147483647, %v976
      %v1073 = vand.u32 2147483647, %v977
      %v1074 = vand.u32 2147483647, %v978
      %v1075 = vand.u32 2147483647, %v979
      %v1076 = vmul.f32 %v1044, 0.3275911
      %v1077 = vmul.f32 %v1045, 0.3275911
      %v1078 = vmul.f32 %v1046, 0.3275911
      %v1079 = vmul.f32 %v1047, 0.3275911
      %v1080 = vmul.f32 %v1048, 0.3275911
      %v1081 = vmul.f32 %v1049, 0.3275911
      %v1082 = vmul.f32 %v1050, 0.3275911
      %v1083 = vmul.f32 %v1051, 0.3275911
      %v1084 = vmul.f32 %v1052, 0.3275911
      %v1085 = vmul.f32 %v1053, 0.3275911
      %v1086 = vmul.f32 %v1054, 0.3275911
      %v1087 = vmul.f32 %v1055, 0.3275911
      %v1088 = vmul.f32 %v1056, 0.3275911
      %v1089 = vmul.f32 %v1057, 0.3275911
      %v1090 = vmul.f32 %v1058, 0.3275911
      %v1091 = vmul.f32 %v1059, 0.3275911
      %v1092 = vmul.f32 %v1060, 0.3275911
      %v1093 = vmul.f32 %v1061, 0.3275911
      %v1094 = vmul.f32 %v1062, 0.3275911
      %v1095 = vmul.f32 %v1063, 0.3275911
      %v1096 = vmul.f32 %v1064, 0.3275911
      %v1097 = vmul.f32 %v1065, 0.3275911
      %v1098 = vmul.f32 %v1066, 0.3275911
      %v1099 = vmul.f32 %v1067, 0.3275911
      %v1100 = vmul.f32 %v1068, 0.3275911
      %v1101 = vmul.f32 %v1069, 0.3275911
      %v1102 = vmul.f32 %v1070, 0.3275911
      %v1103 = vmul.f32 %v1071, 0.3275911
      %v1104 = vmul.f32 %v1072, 0.3275911
      %v1105 = vmul.f32 %v1073, 0.3275911
      %v1106 = vmul.f32 %v1074, 0.3275911
      %v1107 = vmul.f32 %v1075, 0.3275911
      %v1108 = vadd.f32 %v1076, 1.0
      %v1109 = vadd.f32 %v1077, 1.0
      %v1110 = vadd.f32 %v1078, 1.0
      %v1111 = vadd.f32 %v1079, 1.0
      %v1112 = vadd.f32 %v1080, 1.0
      %v1113 = vadd.f32 %v1081, 1.0
      %v1114 = vadd.f32 %v1082, 1.0
      %v1115 = vadd.f32 %v1083, 1.0
      %v1116 = vadd.f32 %v1084, 1.0
      %v1117 = vadd.f32 %v1085, 1.0
      %v1118 = vadd.f32 %v1086, 1.0
      %v1119 = vadd.f32 %v1087, 1.0
      %v1120 = vadd.f32 %v1088, 1.0
      %v1121 = vadd.f32 %v1089, 1.0
      %v1122 = vadd.f32 %v1090, 1.0
      %v1123 = vadd.f32 %v1091, 1.0
      %v1124 = vadd.f32 %v1092, 1.0
      %v1125 = vadd.f32 %v1093, 1.0
      %v1126 = vadd.f32 %v1094, 1.0
      %v1127 = vadd.f32 %v1095, 1.0
      %v1128 = vadd.f32 %v1096, 1.0
      %v1129 = vadd.f32 %v1097, 1.0
      %v1130 = vadd.f32 %v1098, 1.0
      %v1131 = vadd.f32 %v1099, 1.0
      %v1132 = vadd.f32 %v1100, 1.0
      %v1133 = vadd.f32 %v1101, 1.0
      %v1134 = vadd.f32 %v1102, 1.0
      %v1135 = vadd.f32 %v1103, 1.0
      %v1136 = vadd.f32 %v1104, 1.0
      %v1137 = vadd.f32 %v1105, 1.0
      %v1138 = vadd.f32 %v1106, 1.0
      %v1139 = vadd.f32 %v1107, 1.0
      %v1140 = vrcp.pop %v1108
      %v1141 = vmul.f32 1.0, %v1140
      %v1142 = vrcp.pop %v1109
      %v1143 = vmul.f32 1.0, %v1142
      %v1144 = vrcp.pop %v1110
      %v1145 = vmul.f32 1.0, %v1144
      %v1146 = vrcp.pop %v1111
      %v1147 = vmul.f32 1.0, %v1146
      %v1148 = vrcp.pop %v1112
      %v1149 = vmul.f32 1.0, %v1148
      %v1150 = vrcp.pop %v1113
      %v1151 = vmul.f32 1.0, %v1150
      %v1152 = vrcp.pop %v1114
      %v1153 = vmul.f32 1.0, %v1152
      %v1154 = vrcp.pop %v1115
      %v1155 = vmul.f32 1.0, %v1154
      %v1156 = vrcp.pop %v1116
      %v1157 = vmul.f32 1.0, %v1156
      %v1158 = vrcp.pop %v1117
      %v1159 = vmul.f32 1.0, %v1158
      %v1160 = vrcp.pop %v1118
      %v1161 = vmul.f32 1.0, %v1160
      %v1162 = vrcp.pop %v1119
      %v1163 = vmul.f32 1.0, %v1162
      %v1164 = vrcp.pop %v1120
      %v1165 = vmul.f32 1.0, %v1164
      %v1166 = vrcp.pop %v1121
      %v1167 = vmul.f32 1.0, %v1166
      %v1168 = vrcp.pop %v1122
      %v1169 = vmul.f32 1.0, %v1168
      %v1170 = vrcp.pop %v1123
      %v1171 = vmul.f32 1.0, %v1170
      %v1172 = vrcp.pop %v1124
      %v1173 = vmul.f32 1.0, %v1172
      %v1174 = vrcp.pop %v1125
      %v1175 = vmul.f32 1.0, %v1174
      %v1176 = vrcp.pop %v1126
      %v1177 = vmul.f32 1.0, %v1176
      %v1178 = vrcp.pop %v1127
      %v1179 = vmul.f32 1.0, %v1178
      %v1180 = vrcp.pop %v1128
      %v1181 = vmul.f32 1.0, %v1180
      %v1182 = vrcp.pop %v1129
      %v1183 = vmul.f32 1.0, %v1182
      %v1184 = vrcp.pop %v1130
      %v1185 = vmul.f32 1.0, %v1184
      %v1186 = vrcp.pop %v1131
      %v1187 = vmul.f32 1.0, %v1186
      %v1188 = vrcp.pop %v1132
      %v1189 = vmul.f32 1.0, %v1188
      %v1190 = vrcp.pop %v1133
      %v1191 = vmul.f32 1.0, %v1190
      %v1192 = vrcp.pop %v1134
      %v1193 = vmul.f32 1.0, %v1192
      %v1194 = vrcp.pop %v1135
      %v1195 = vmul.f32 1.0, %v1194
      %v1196 = vrcp.pop %v1136
      %v1197 = vmul.f32 1.0, %v1196
      %v1198 = vrcp.pop %v1137
      %v1199 = vmul.f32 1.0, %v1198
      %v1200 = vrcp.pop %v1138
      %v1201 = vmul.f32 1.0, %v1200
      %v1202 = vrcp.pop %v1139
      %v1203 = vmul.f32 1.0, %v1202
      %v1204 = vmul.f32 %v1141, 1.0614054
      %v1205 = vmul.f32 %v1143, 1.0614054
      %v1206 = vmul.f32 %v1145, 1.0614054
      %v1207 = vmul.f32 %v1147, 1.0614054
      %v1208 = vmul.f32 %v1149, 1.0614054
      %v1209 = vmul.f32 %v1151, 1.0614054
      %v1210 = vmul.f32 %v1153, 1.0614054
      %v1211 = vmul.f32 %v1155, 1.0614054
      %v1212 = vmul.f32 %v1157, 1.0614054
      %v1213 = vmul.f32 %v1159, 1.0614054
      %v1214 = vmul.f32 %v1161, 1.0614054
      %v1215 = vmul.f32 %v1163, 1.0614054
      %v1216 = vmul.f32 %v1165, 1.0614054
      %v1217 = vmul.f32 %v1167, 1.0614054
      %v1218 = vmul.f32 %v1169, 1.0614054
      %v1219 = vmul.f32 %v1171, 1.0614054
      %v1220 = vmul.f32 %v1173, 1.0614054
      %v1221 = vmul.f32 %v1175, 1.0614054
      %v1222 = vmul.f32 %v1177, 1.0614054
      %v1223 = vmul.f32 %v1179, 1.0614054
      %v1224 = vmul.f32 %v1181, 1.0614054
      %v1225 = vmul.f32 %v1183, 1.0614054
      %v1226 = vmul.f32 %v1185, 1.0614054
      %v1227 = vmul.f32 %v1187, 1.0614054
      %v1228 = vmul.f32 %v1189, 1.0614054
      %v1229 = vmul.f32 %v1191, 1.0614054
      %v1230 = vmul.f32 %v1193, 1.0614054
      %v1231 = vmul.f32 %v1195, 1.0614054
      %v1232 = vmul.f32 %v1197, 1.0614054
      %v1233 = vmul.f32 %v1199, 1.0614054
      %v1234 = vmul.f32 %v1201, 1.0614054
      %v1235 = vmul.f32 %v1203, 1.0614054
      %v1236 = vadd.f32 %v1204, -1.4531521
      %v1237 = vadd.f32 %v1205, -1.4531521
      %v1238 = vadd.f32 %v1206, -1.4531521
      %v1239 = vadd.f32 %v1207, -1.4531521
      %v1240 = vadd.f32 %v1208, -1.4531521
      %v1241 = vadd.f32 %v1209, -1.4531521
      %v1242 = vadd.f32 %v1210, -1.4531521
      %v1243 = vadd.f32 %v1211, -1.4531521
      %v1244 = vadd.f32 %v1212, -1.4531521
      %v1245 = vadd.f32 %v1213, -1.4531521
      %v1246 = vadd.f32 %v1214, -1.4531521
      %v1247 = vadd.f32 %v1215, -1.4531521
      %v1248 = vadd.f32 %v1216, -1.4531521
      %v1249 = vadd.f32 %v1217, -1.4531521
      %v1250 = vadd.f32 %v1218, -1.4531521
      %v1251 = vadd.f32 %v1219, -1.4531521
      %v1252 = vadd.f32 %v1220, -1.4531521
      %v1253 = vadd.f32 %v1221, -1.4531521
      %v1254 = vadd.f32 %v1222, -1.4531521
      %v1255 = vadd.f32 %v1223, -1.4531521
      %v1256 = vadd.f32 %v1224, -1.4531521
      %v1257 = vadd.f32 %v1225, -1.4531521
      %v1258 = vadd.f32 %v1226, -1.4531521
      %v1259 = vadd.f32 %v1227, -1.4531521
      %v1260 = vadd.f32 %v1228, -1.4531521
      %v1261 = vadd.f32 %v1229, -1.4531521
      %v1262 = vadd.f32 %v1230, -1.4531521
      %v1263 = vadd.f32 %v1231, -1.4531521
      %v1264 = vadd.f32 %v1232, -1.4531521
      %v1265 = vadd.f32 %v1233, -1.4531521
      %v1266 = vadd.f32 %v1234, -1.4531521
      %v1267 = vadd.f32 %v1235, -1.4531521
      %v1268 = vmul.f32 %v1236, %v1141
      %v1269 = vmul.f32 %v1237, %v1143
      %v1270 = vmul.f32 %v1238, %v1145
      %v1271 = vmul.f32 %v1239, %v1147
      %v1272 = vmul.f32 %v1240, %v1149
      %v1273 = vmul.f32 %v1241, %v1151
      %v1274 = vmul.f32 %v1242, %v1153
      %v1275 = vmul.f32 %v1243, %v1155
      %v1276 = vmul.f32 %v1244, %v1157
      %v1277 = vmul.f32 %v1245, %v1159
      %v1278 = vmul.f32 %v1246, %v1161
      %v1279 = vmul.f32 %v1247, %v1163
      %v1280 = vmul.f32 %v1248, %v1165
      %v1281 = vmul.f32 %v1249, %v1167
      %v1282 = vmul.f32 %v1250, %v1169
      %v1283 = vmul.f32 %v1251, %v1171
      %v1284 = vmul.f32 %v1252, %v1173
      %v1285 = vmul.f32 %v1253, %v1175
      %v1286 = vmul.f32 %v1254, %v1177
      %v1287 = vmul.f32 %v1255, %v1179
      %v1288 = vmul.f32 %v1256, %v1181
      %v1289 = vmul.f32 %v1257, %v1183
      %v1290 = vmul.f32 %v1258, %v1185
      %v1291 = vmul.f32 %v1259, %v1187
      %v1292 = vmul.f32 %v1260, %v1189
      %v1293 = vmul.f32 %v1261, %v1191
      %v1294 = vmul.f32 %v1262, %v1193
      %v1295 = vmul.f32 %v1263, %v1195
      %v1296 = vmul.f32 %v1264, %v1197
      %v1297 = vmul.f32 %v1265, %v1199
      %v1298 = vmul.f32 %v1266, %v1201
      %v1299 = vmul.f32 %v1267, %v1203
      %v1300 = vadd.f32 %v1268, 1.4214138
      %v1301 = vadd.f32 %v1269, 1.4214138
      %v1302 = vadd.f32 %v1270, 1.4214138
      %v1303 = vadd.f32 %v1271, 1.4214138
      %v1304 = vadd.f32 %v1272, 1.4214138
      %v1305 = vadd.f32 %v1273, 1.4214138
      %v1306 = vadd.f32 %v1274, 1.4214138
      %v1307 = vadd.f32 %v1275, 1.4214138
      %v1308 = vadd.f32 %v1276, 1.4214138
      %v1309 = vadd.f32 %v1277, 1.4214138
      %v1310 = vadd.f32 %v1278, 1.4214138
      %v1311 = vadd.f32 %v1279, 1.4214138
      %v1312 = vadd.f32 %v1280, 1.4214138
      %v1313 = vadd.f32 %v1281, 1.4214138
      %v1314 = vadd.f32 %v1282, 1.4214138
      %v1315 = vadd.f32 %v1283, 1.4214138
      %v1316 = vadd.f32 %v1284, 1.4214138
      %v1317 = vadd.f32 %v1285, 1.4214138
      %v1318 = vadd.f32 %v1286, 1.4214138
      %v1319 = vadd.f32 %v1287, 1.4214138
      %v1320 = vadd.f32 %v1288, 1.4214138
      %v1321 = vadd.f32 %v1289, 1.4214138
      %v1322 = vadd.f32 %v1290, 1.4214138
      %v1323 = vadd.f32 %v1291, 1.4214138
      %v1324 = vadd.f32 %v1292, 1.4214138
      %v1325 = vadd.f32 %v1293, 1.4214138
      %v1326 = vadd.f32 %v1294, 1.4214138
      %v1327 = vadd.f32 %v1295, 1.4214138
      %v1328 = vadd.f32 %v1296, 1.4214138
      %v1329 = vadd.f32 %v1297, 1.4214138
      %v1330 = vadd.f32 %v1298, 1.4214138
      %v1331 = vadd.f32 %v1299, 1.4214138
      %v1332 = vmul.f32 %v1300, %v1141
      %v1333 = vmul.f32 %v1301, %v1143
      %v1334 = vmul.f32 %v1302, %v1145
      %v1335 = vmul.f32 %v1303, %v1147
      %v1336 = vmul.f32 %v1304, %v1149
      %v1337 = vmul.f32 %v1305, %v1151
      %v1338 = vmul.f32 %v1306, %v1153
      %v1339 = vmul.f32 %v1307, %v1155
      %v1340 = vmul.f32 %v1308, %v1157
      %v1341 = vmul.f32 %v1309, %v1159
      %v1342 = vmul.f32 %v1310, %v1161
      %v1343 = vmul.f32 %v1311, %v1163
      %v1344 = vmul.f32 %v1312, %v1165
      %v1345 = vmul.f32 %v1313, %v1167
      %v1346 = vmul.f32 %v1314, %v1169
      %v1347 = vmul.f32 %v1315, %v1171
      %v1348 = vmul.f32 %v1316, %v1173
      %v1349 = vmul.f32 %v1317, %v1175
      %v1350 = vmul.f32 %v1318, %v1177
      %v1351 = vmul.f32 %v1319, %v1179
      %v1352 = vmul.f32 %v1320, %v1181
      %v1353 = vmul.f32 %v1321, %v1183
      %v1354 = vmul.f32 %v1322, %v1185
      %v1355 = vmul.f32 %v1323, %v1187
      %v1356 = vmul.f32 %v1324, %v1189
      %v1357 = vmul.f32 %v1325, %v1191
      %v1358 = vmul.f32 %v1326, %v1193
      %v1359 = vmul.f32 %v1327, %v1195
      %v1360 = vmul.f32 %v1328, %v1197
      %v1361 = vmul.f32 %v1329, %v1199
      %v1362 = vmul.f32 %v1330, %v1201
      %v1363 = vmul.f32 %v1331, %v1203
      %v1364 = vadd.f32 %v1332, -0.28449672
      %v1365 = vadd.f32 %v1333, -0.28449672
      %v1366 = vadd.f32 %v1334, -0.28449672
      %v1367 = vadd.f32 %v1335, -0.28449672
      %v1368 = vadd.f32 %v1336, -0.28449672
      %v1369 = vadd.f32 %v1337, -0.28449672
      %v1370 = vadd.f32 %v1338, -0.28449672
      %v1371 = vadd.f32 %v1339, -0.28449672
      %v1372 = vadd.f32 %v1340, -0.28449672
      %v1373 = vadd.f32 %v1341, -0.28449672
      %v1374 = vadd.f32 %v1342, -0.28449672
      %v1375 = vadd.f32 %v1343, -0.28449672
      %v1376 = vadd.f32 %v1344, -0.28449672
      %v1377 = vadd.f32 %v1345, -0.28449672
      %v1378 = vadd.f32 %v1346, -0.28449672
      %v1379 = vadd.f32 %v1347, -0.28449672
      %v1380 = vadd.f32 %v1348, -0.28449672
      %v1381 = vadd.f32 %v1349, -0.28449672
      %v1382 = vadd.f32 %v1350, -0.28449672
      %v1383 = vadd.f32 %v1351, -0.28449672
      %v1384 = vadd.f32 %v1352, -0.28449672
      %v1385 = vadd.f32 %v1353, -0.28449672
      %v1386 = vadd.f32 %v1354, -0.28449672
      %v1387 = vadd.f32 %v1355, -0.28449672
      %v1388 = vadd.f32 %v1356, -0.28449672
      %v1389 = vadd.f32 %v1357, -0.28449672
      %v1390 = vadd.f32 %v1358, -0.28449672
      %v1391 = vadd.f32 %v1359, -0.28449672
      %v1392 = vadd.f32 %v1360, -0.28449672
      %v1393 = vadd.f32 %v1361, -0.28449672
      %v1394 = vadd.f32 %v1362, -0.28449672
      %v1395 = vadd.f32 %v1363, -0.28449672
      %v1396 = vmul.f32 %v1364, %v1141
      %v1397 = vmul.f32 %v1365, %v1143
      %v1398 = vmul.f32 %v1366, %v1145
      %v1399 = vmul.f32 %v1367, %v1147
      %v1400 = vmul.f32 %v1368, %v1149
      %v1401 = vmul.f32 %v1369, %v1151
      %v1402 = vmul.f32 %v1370, %v1153
      %v1403 = vmul.f32 %v1371, %v1155
      %v1404 = vmul.f32 %v1372, %v1157
      %v1405 = vmul.f32 %v1373, %v1159
      %v1406 = vmul.f32 %v1374, %v1161
      %v1407 = vmul.f32 %v1375, %v1163
      %v1408 = vmul.f32 %v1376, %v1165
      %v1409 = vmul.f32 %v1377, %v1167
      %v1410 = vmul.f32 %v1378, %v1169
      %v1411 = vmul.f32 %v1379, %v1171
      %v1412 = vmul.f32 %v1380, %v1173
      %v1413 = vmul.f32 %v1381, %v1175
      %v1414 = vmul.f32 %v1382, %v1177
      %v1415 = vmul.f32 %v1383, %v1179
      %v1416 = vmul.f32 %v1384, %v1181
      %v1417 = vmul.f32 %v1385, %v1183
      %v1418 = vmul.f32 %v1386, %v1185
      %v1419 = vmul.f32 %v1387, %v1187
      %v1420 = vmul.f32 %v1388, %v1189
      %v1421 = vmul.f32 %v1389, %v1191
      %v1422 = vmul.f32 %v1390, %v1193
      %v1423 = vmul.f32 %v1391, %v1195
      %v1424 = vmul.f32 %v1392, %v1197
      %v1425 = vmul.f32 %v1393, %v1199
      %v1426 = vmul.f32 %v1394, %v1201
      %v1427 = vmul.f32 %v1395, %v1203
      %v1428 = vadd.f32 %v1396, 0.2548296
      %v1429 = vadd.f32 %v1397, 0.2548296
      %v1430 = vadd.f32 %v1398, 0.2548296
      %v1431 = vadd.f32 %v1399, 0.2548296
      %v1432 = vadd.f32 %v1400, 0.2548296
      %v1433 = vadd.f32 %v1401, 0.2548296
      %v1434 = vadd.f32 %v1402, 0.2548296
      %v1435 = vadd.f32 %v1403, 0.2548296
      %v1436 = vadd.f32 %v1404, 0.2548296
      %v1437 = vadd.f32 %v1405, 0.2548296
      %v1438 = vadd.f32 %v1406, 0.2548296
      %v1439 = vadd.f32 %v1407, 0.2548296
      %v1440 = vadd.f32 %v1408, 0.2548296
      %v1441 = vadd.f32 %v1409, 0.2548296
      %v1442 = vadd.f32 %v1410, 0.2548296
      %v1443 = vadd.f32 %v1411, 0.2548296
      %v1444 = vadd.f32 %v1412, 0.2548296
      %v1445 = vadd.f32 %v1413, 0.2548296
      %v1446 = vadd.f32 %v1414, 0.2548296
      %v1447 = vadd.f32 %v1415, 0.2548296
      %v1448 = vadd.f32 %v1416, 0.2548296
      %v1449 = vadd.f32 %v1417, 0.2548296
      %v1450 = vadd.f32 %v1418, 0.2548296
      %v1451 = vadd.f32 %v1419, 0.2548296
      %v1452 = vadd.f32 %v1420, 0.2548296
      %v1453 = vadd.f32 %v1421, 0.2548296
      %v1454 = vadd.f32 %v1422, 0.2548296
      %v1455 = vadd.f32 %v1423, 0.2548296
      %v1456 = vadd.f32 %v1424, 0.2548296
      %v1457 = vadd.f32 %v1425, 0.2548296
      %v1458 = vadd.f32 %v1426, 0.2548296
      %v1459 = vadd.f32 %v1427, 0.2548296
      %v1460 = vmul.f32 %v1428, %v1141
      %v1461 = vmul.f32 %v1429, %v1143
      %v1462 = vmul.f32 %v1430, %v1145
      %v1463 = vmul.f32 %v1431, %v1147
      %v1464 = vmul.f32 %v1432, %v1149
      %v1465 = vmul.f32 %v1433, %v1151
      %v1466 = vmul.f32 %v1434, %v1153
      %v1467 = vmul.f32 %v1435, %v1155
      %v1468 = vmul.f32 %v1436, %v1157
      %v1469 = vmul.f32 %v1437, %v1159
      %v1470 = vmul.f32 %v1438, %v1161
      %v1471 = vmul.f32 %v1439, %v1163
      %v1472 = vmul.f32 %v1440, %v1165
      %v1473 = vmul.f32 %v1441, %v1167
      %v1474 = vmul.f32 %v1442, %v1169
      %v1475 = vmul.f32 %v1443, %v1171
      %v1476 = vmul.f32 %v1444, %v1173
      %v1477 = vmul.f32 %v1445, %v1175
      %v1478 = vmul.f32 %v1446, %v1177
      %v1479 = vmul.f32 %v1447, %v1179
      %v1480 = vmul.f32 %v1448, %v1181
      %v1481 = vmul.f32 %v1449, %v1183
      %v1482 = vmul.f32 %v1450, %v1185
      %v1483 = vmul.f32 %v1451, %v1187
      %v1484 = vmul.f32 %v1452, %v1189
      %v1485 = vmul.f32 %v1453, %v1191
      %v1486 = vmul.f32 %v1454, %v1193
      %v1487 = vmul.f32 %v1455, %v1195
      %v1488 = vmul.f32 %v1456, %v1197
      %v1489 = vmul.f32 %v1457, %v1199
      %v1490 = vmul.f32 %v1458, %v1201
      %v1491 = vmul.f32 %v1459, %v1203
      %v1492 = vsub.f32 0.0, %v1044
      %v1493 = vsub.f32 0.0, %v1045
      %v1494 = vsub.f32 0.0, %v1046
      %v1495 = vsub.f32 0.0, %v1047
      %v1496 = vsub.f32 0.0, %v1048
      %v1497 = vsub.f32 0.0, %v1049
      %v1498 = vsub.f32 0.0, %v1050
      %v1499 = vsub.f32 0.0, %v1051
      %v1500 = vsub.f32 0.0, %v1052
      %v1501 = vsub.f32 0.0, %v1053
      %v1502 = vsub.f32 0.0, %v1054
      %v1503 = vsub.f32 0.0, %v1055
      %v1504 = vsub.f32 0.0, %v1056
      %v1505 = vsub.f32 0.0, %v1057
      %v1506 = vsub.f32 0.0, %v1058
      %v1507 = vsub.f32 0.0, %v1059
      %v1508 = vsub.f32 0.0, %v1060
      %v1509 = vsub.f32 0.0, %v1061
      %v1510 = vsub.f32 0.0, %v1062
      %v1511 = vsub.f32 0.0, %v1063
      %v1512 = vsub.f32 0.0, %v1064
      %v1513 = vsub.f32 0.0, %v1065
      %v1514 = vsub.f32 0.0, %v1066
      %v1515 = vsub.f32 0.0, %v1067
      %v1516 = vsub.f32 0.0, %v1068
      %v1517 = vsub.f32 0.0, %v1069
      %v1518 = vsub.f32 0.0, %v1070
      %v1519 = vsub.f32 0.0, %v1071
      %v1520 = vsub.f32 0.0, %v1072
      %v1521 = vsub.f32 0.0, %v1073
      %v1522 = vsub.f32 0.0, %v1074
      %v1523 = vsub.f32 0.0, %v1075
      %v1524 = vmul.f32 %v1492, %v1044
      %v1525 = vmul.f32 %v1493, %v1045
      %v1526 = vmul.f32 %v1494, %v1046
      %v1527 = vmul.f32 %v1495, %v1047
      %v1528 = vmul.f32 %v1496, %v1048
      %v1529 = vmul.f32 %v1497, %v1049
      %v1530 = vmul.f32 %v1498, %v1050
      %v1531 = vmul.f32 %v1499, %v1051
      %v1532 = vmul.f32 %v1500, %v1052
      %v1533 = vmul.f32 %v1501, %v1053
      %v1534 = vmul.f32 %v1502, %v1054
      %v1535 = vmul.f32 %v1503, %v1055
      %v1536 = vmul.f32 %v1504, %v1056
      %v1537 = vmul.f32 %v1505, %v1057
      %v1538 = vmul.f32 %v1506, %v1058
      %v1539 = vmul.f32 %v1507, %v1059
      %v1540 = vmul.f32 %v1508, %v1060
      %v1541 = vmul.f32 %v1509, %v1061
      %v1542 = vmul.f32 %v1510, %v1062
      %v1543 = vmul.f32 %v1511, %v1063
      %v1544 = vmul.f32 %v1512, %v1064
      %v1545 = vmul.f32 %v1513, %v1065
      %v1546 = vmul.f32 %v1514, %v1066
      %v1547 = vmul.f32 %v1515, %v1067
      %v1548 = vmul.f32 %v1516, %v1068
      %v1549 = vmul.f32 %v1517, %v1069
      %v1550 = vmul.f32 %v1518, %v1070
      %v1551 = vmul.f32 %v1519, %v1071
      %v1552 = vmul.f32 %v1520, %v1072
      %v1553 = vmul.f32 %v1521, %v1073
      %v1554 = vmul.f32 %v1522, %v1074
      %v1555 = vmul.f32 %v1523, %v1075
      %v1556 = vmul.f32 %v1524, 1.442695
      %v1557 = vpow.pop %v1556
      %v1558 = vmul.f32 %v1525, 1.442695
      %v1559 = vpow.pop %v1558
      %v1560 = vmul.f32 %v1526, 1.442695
      %v1561 = vpow.pop %v1560
      %v1562 = vmul.f32 %v1527, 1.442695
      %v1563 = vpow.pop %v1562
      %v1564 = vmul.f32 %v1528, 1.442695
      %v1565 = vpow.pop %v1564
      %v1566 = vmul.f32 %v1529, 1.442695
      %v1567 = vpow.pop %v1566
      %v1568 = vmul.f32 %v1530, 1.442695
      %v1569 = vpow.pop %v1568
      %v1570 = vmul.f32 %v1531, 1.442695
      %v1571 = vpow.pop %v1570
      %v1572 = vmul.f32 %v1532, 1.442695
      %v1573 = vpow.pop %v1572
      %v1574 = vmul.f32 %v1533, 1.442695
      %v1575 = vpow.pop %v1574
      %v1576 = vmul.f32 %v1534, 1.442695
      %v1577 = vpow.pop %v1576
      %v1578 = vmul.f32 %v1535, 1.442695
      %v1579 = vpow.pop %v1578
      %v1580 = vmul.f32 %v1536, 1.442695
      %v1581 = vpow.pop %v1580
      %v1582 = vmul.f32 %v1537, 1.442695
      %v1583 = vpow.pop %v1582
      %v1584 = vmul.f32 %v1538, 1.442695
      %v1585 = vpow.pop %v1584
      %v1586 = vmul.f32 %v1539, 1.442695
      %v1587 = vpow.pop %v1586
      %v1588 = vmul.f32 %v1540, 1.442695
      %v1589 = vpow.pop %v1588
      %v1590 = vmul.f32 %v1541, 1.442695
      %v1591 = vpow.pop %v1590
      %v1592 = vmul.f32 %v1542, 1.442695
      %v1593 = vpow.pop %v1592
      %v1594 = vmul.f32 %v1543, 1.442695
      %v1595 = vpow.pop %v1594
      %v1596 = vmul.f32 %v1544, 1.442695
      %v1597 = vpow.pop %v1596
      %v1598 = vmul.f32 %v1545, 1.442695
      %v1599 = vpow.pop %v1598
      %v1600 = vmul.f32 %v1546, 1.442695
      %v1601 = vpow.pop %v1600
      %v1602 = vmul.f32 %v1547, 1.442695
      %v1603 = vpow.pop %v1602
      %v1604 = vmul.f32 %v1548, 1.442695
      %v1605 = vpow.pop %v1604
      %v1606 = vmul.f32 %v1549, 1.442695
      %v1607 = vpow.pop %v1606
      %v1608 = vmul.f32 %v1550, 1.442695
      %v1609 = vpow.pop %v1608
      %v1610 = vmul.f32 %v1551, 1.442695
      %v1611 = vpow.pop %v1610
      %v1612 = vmul.f32 %v1552, 1.442695
      %v1613 = vpow.pop %v1612
      %v1614 = vmul.f32 %v1553, 1.442695
      %v1615 = vpow.pop %v1614
      %v1616 = vmul.f32 %v1554, 1.442695
      %v1617 = vpow.pop %v1616
      %v1618 = vmul.f32 %v1555, 1.442695
      %v1619 = vpow.pop %v1618
      %v1620 = vmul.f32 %v1460, %v1557
      %v1621 = vmul.f32 %v1461, %v1559
      %v1622 = vmul.f32 %v1462, %v1561
      %v1623 = vmul.f32 %v1463, %v1563
      %v1624 = vmul.f32 %v1464, %v1565
      %v1625 = vmul.f32 %v1465, %v1567
      %v1626 = vmul.f32 %v1466, %v1569
      %v1627 = vmul.f32 %v1467, %v1571
      %v1628 = vmul.f32 %v1468, %v1573
      %v1629 = vmul.f32 %v1469, %v1575
      %v1630 = vmul.f32 %v1470, %v1577
      %v1631 = vmul.f32 %v1471, %v1579
      %v1632 = vmul.f32 %v1472, %v1581
      %v1633 = vmul.f32 %v1473, %v1583
      %v1634 = vmul.f32 %v1474, %v1585
      %v1635 = vmul.f32 %v1475, %v1587
      %v1636 = vmul.f32 %v1476, %v1589
      %v1637 = vmul.f32 %v1477, %v1591
      %v1638 = vmul.f32 %v1478, %v1593
      %v1639 = vmul.f32 %v1479, %v1595
      %v1640 = vmul.f32 %v1480, %v1597
      %v1641 = vmul.f32 %v1481, %v1599
      %v1642 = vmul.f32 %v1482, %v1601
      %v1643 = vmul.f32 %v1483, %v1603
      %v1644 = vmul.f32 %v1484, %v1605
      %v1645 = vmul.f32 %v1485, %v1607
      %v1646 = vmul.f32 %v1486, %v1609
      %v1647 = vmul.f32 %v1487, %v1611
      %v1648 = vmul.f32 %v1488, %v1613
      %v1649 = vmul.f32 %v1489, %v1615
      %v1650 = vmul.f32 %v1490, %v1617
      %v1651 = vmul.f32 %v1491, %v1619
      %v1652 = vsub.f32 1.0, %v1620
      %v1653 = vsub.f32 1.0, %v1621
      %v1654 = vsub.f32 1.0, %v1622
      %v1655 = vsub.f32 1.0, %v1623
      %v1656 = vsub.f32 1.0, %v1624
      %v1657 = vsub.f32 1.0, %v1625
      %v1658 = vsub.f32 1.0, %v1626
      %v1659 = vsub.f32 1.0, %v1627
      %v1660 = vsub.f32 1.0, %v1628
      %v1661 = vsub.f32 1.0, %v1629
      %v1662 = vsub.f32 1.0, %v1630
      %v1663 = vsub.f32 1.0, %v1631
      %v1664 = vsub.f32 1.0, %v1632
      %v1665 = vsub.f32 1.0, %v1633
      %v1666 = vsub.f32 1.0, %v1634
      %v1667 = vsub.f32 1.0, %v1635
      %v1668 = vsub.f32 1.0, %v1636
      %v1669 = vsub.f32 1.0, %v1637
      %v1670 = vsub.f32 1.0, %v1638
      %v1671 = vsub.f32 1.0, %v1639
      %v1672 = vsub.f32 1.0, %v1640
      %v1673 = vsub.f32 1.0, %v1641
      %v1674 = vsub.f32 1.0, %v1642
      %v1675 = vsub.f32 1.0, %v1643
      %v1676 = vsub.f32 1.0, %v1644
      %v1677 = vsub.f32 1.0, %v1645
      %v1678 = vsub.f32 1.0, %v1646
      %v1679 = vsub.f32 1.0, %v1647
      %v1680 = vsub.f32 1.0, %v1648
      %v1681 = vsub.f32 1.0, %v1649
      %v1682 = vsub.f32 1.0, %v1650
      %v1683 = vsub.f32 1.0, %v1651
      %v1684 = vmul.f32 %v1012, %v1652
      %v1685 = vmul.f32 %v1013, %v1653
      %v1686 = vmul.f32 %v1014, %v1654
      %v1687 = vmul.f32 %v1015, %v1655
      %v1688 = vmul.f32 %v1016, %v1656
      %v1689 = vmul.f32 %v1017, %v1657
      %v1690 = vmul.f32 %v1018, %v1658
      %v1691 = vmul.f32 %v1019, %v1659
      %v1692 = vmul.f32 %v1020, %v1660
      %v1693 = vmul.f32 %v1021, %v1661
      %v1694 = vmul.f32 %v1022, %v1662
      %v1695 = vmul.f32 %v1023, %v1663
      %v1696 = vmul.f32 %v1024, %v1664
      %v1697 = vmul.f32 %v1025, %v1665
      %v1698 = vmul.f32 %v1026, %v1666
      %v1699 = vmul.f32 %v1027, %v1667
      %v1700 = vmul.f32 %v1028, %v1668
      %v1701 = vmul.f32 %v1029, %v1669
      %v1702 = vmul.f32 %v1030, %v1670
      %v1703 = vmul.f32 %v1031, %v1671
      %v1704 = vmul.f32 %v1032, %v1672
      %v1705 = vmul.f32 %v1033, %v1673
      %v1706 = vmul.f32 %v1034, %v1674
      %v1707 = vmul.f32 %v1035, %v1675
      %v1708 = vmul.f32 %v1036, %v1676
      %v1709 = vmul.f32 %v1037, %v1677
      %v1710 = vmul.f32 %v1038, %v1678
      %v1711 = vmul.f32 %v1039, %v1679
      %v1712 = vmul.f32 %v1040, %v1680
      %v1713 = vmul.f32 %v1041, %v1681
      %v1714 = vmul.f32 %v1042, %v1682
      %v1715 = vmul.f32 %v1043, %v1683
      %v1716 = vadd.f32 %v1684, 1.0
      %v1717 = vadd.f32 %v1685, 1.0
      %v1718 = vadd.f32 %v1686, 1.0
      %v1719 = vadd.f32 %v1687, 1.0
      %v1720 = vadd.f32 %v1688, 1.0
      %v1721 = vadd.f32 %v1689, 1.0
      %v1722 = vadd.f32 %v1690, 1.0
      %v1723 = vadd.f32 %v1691, 1.0
      %v1724 = vadd.f32 %v1692, 1.0
      %v1725 = vadd.f32 %v1693, 1.0
      %v1726 = vadd.f32 %v1694, 1.0
      %v1727 = vadd.f32 %v1695, 1.0
      %v1728 = vadd.f32 %v1696, 1.0
      %v1729 = vadd.f32 %v1697, 1.0
      %v1730 = vadd.f32 %v1698, 1.0
      %v1731 = vadd.f32 %v1699, 1.0
      %v1732 = vadd.f32 %v1700, 1.0
      %v1733 = vadd.f32 %v1701, 1.0
      %v1734 = vadd.f32 %v1702, 1.0
      %v1735 = vadd.f32 %v1703, 1.0
      %v1736 = vadd.f32 %v1704, 1.0
      %v1737 = vadd.f32 %v1705, 1.0
      %v1738 = vadd.f32 %v1706, 1.0
      %v1739 = vadd.f32 %v1707, 1.0
      %v1740 = vadd.f32 %v1708, 1.0
      %v1741 = vadd.f32 %v1709, 1.0
      %v1742 = vadd.f32 %v1710, 1.0
      %v1743 = vadd.f32 %v1711, 1.0
      %v1744 = vadd.f32 %v1712, 1.0
      %v1745 = vadd.f32 %v1713, 1.0
      %v1746 = vadd.f32 %v1714, 1.0
      %v1747 = vadd.f32 %v1715, 1.0
      %v1748 = vmul.f32 %v916, %v1716
      %v1749 = vmul.f32 %v917, %v1717
      %v1750 = vmul.f32 %v918, %v1718
      %v1751 = vmul.f32 %v919, %v1719
      %v1752 = vmul.f32 %v920, %v1720
      %v1753 = vmul.f32 %v921, %v1721
      %v1754 = vmul.f32 %v922, %v1722
      %v1755 = vmul.f32 %v923, %v1723
      %v1756 = vmul.f32 %v924, %v1724
      %v1757 = vmul.f32 %v925, %v1725
      %v1758 = vmul.f32 %v926, %v1726
      %v1759 = vmul.f32 %v927, %v1727
      %v1760 = vmul.f32 %v928, %v1728
      %v1761 = vmul.f32 %v929, %v1729
      %v1762 = vmul.f32 %v930, %v1730
      %v1763 = vmul.f32 %v931, %v1731
      %v1764 = vmul.f32 %v932, %v1732
      %v1765 = vmul.f32 %v933, %v1733
      %v1766 = vmul.f32 %v934, %v1734
      %v1767 = vmul.f32 %v935, %v1735
      %v1768 = vmul.f32 %v936, %v1736
      %v1769 = vmul.f32 %v937, %v1737
      %v1770 = vmul.f32 %v938, %v1738
      %v1771 = vmul.f32 %v939, %v1739
      %v1772 = vmul.f32 %v940, %v1740
      %v1773 = vmul.f32 %v941, %v1741
      %v1774 = vmul.f32 %v942, %v1742
      %v1775 = vmul.f32 %v943, %v1743
      %v1776 = vmul.f32 %v944, %v1744
      %v1777 = vmul.f32 %v945, %v1745
      %v1778 = vmul.f32 %v946, %v1746
      %v1779 = vmul.f32 %v947, %v1747
      %v1780 = vld [vmem:[%s3] sm:$0xff]
      %v1781 = vld [vmem:[%s3 + $0x8] sm:$0xff]
      %v1782 = vld [vmem:[%s3 + $0x10] sm:$0xff]
      %v1783 = vld [vmem:[%s3 + $0x18] sm:$0xff]
      %v1784 = vld [vmem:[%s3 + $0x20] sm:$0xff]
      %v1785 = vld [vmem:[%s3 + $0x28] sm:$0xff]
      %v1786 = vld [vmem:[%s3 + $0x30] sm:$0xff]
      %v1787 = vld [vmem:[%s3 + $0x38] sm:$0xff]
      %v1788 = vld [vmem:[%s3 + $0x40] sm:$0xff]
      %v1789 = vld [vmem:[%s3 + $0x48] sm:$0xff]
      %v1790 = vld [vmem:[%s3 + $0x50] sm:$0xff]
      %v1791 = vld [vmem:[%s3 + $0x58] sm:$0xff]
      %v1792 = vld [vmem:[%s3 + $0x60] sm:$0xff]
      %v1793 = vld [vmem:[%s3 + $0x68] sm:$0xff]
      %v1794 = vld [vmem:[%s3 + $0x70] sm:$0xff]
      %v1795 = vld [vmem:[%s3 + $0x78] sm:$0xff]
      %v1796 = vld [vmem:[%s3 + $0x80] sm:$0xff]
      %v1797 = vld [vmem:[%s3 + $0x88] sm:$0xff]
      %v1798 = vld [vmem:[%s3 + $0x90] sm:$0xff]
      %v1799 = vld [vmem:[%s3 + $0x98] sm:$0xff]
      %v1800 = vld [vmem:[%s3 + $0xa0] sm:$0xff]
      %v1801 = vld [vmem:[%s3 + $0xa8] sm:$0xff]
      %v1802 = vld [vmem:[%s3 + $0xb0] sm:$0xff]
      %v1803 = vld [vmem:[%s3 + $0xb8] sm:$0xff]
      %v1804 = vld [vmem:[%s3 + $0xc0] sm:$0xff]
      %v1805 = vld [vmem:[%s3 + $0xc8] sm:$0xff]
      %v1806 = vld [vmem:[%s3 + $0xd0] sm:$0xff]
      %v1807 = vld [vmem:[%s3 + $0xd8] sm:$0xff]
      %v1808 = vld [vmem:[%s3 + $0xe0] sm:$0xff]
      %v1809 = vld [vmem:[%s3 + $0xe8] sm:$0xff]
      %v1810 = vld [vmem:[%s3 + $0xf0] sm:$0xff]
      %v1811 = vld [vmem:[%s3 + $0xf8] sm:$0xff]
      %v1812 = vld [vmem:[%s3 + $0x100] sm:$0xff]
      %v1813 = vld [vmem:[%s3 + $0x108] sm:$0xff]
      %v1814 = vld [vmem:[%s3 + $0x110] sm:$0xff]
      %v1815 = vld [vmem:[%s3 + $0x118] sm:$0xff]
      %v1816 = vld [vmem:[%s3 + $0x120] sm:$0xff]
      %v1817 = vld [vmem:[%s3 + $0x128] sm:$0xff]
      %v1818 = vld [vmem:[%s3 + $0x130] sm:$0xff]
      %v1819 = vld [vmem:[%s3 + $0x138] sm:$0xff]
      %v1820 = vld [vmem:[%s3 + $0x140] sm:$0xff]
      %v1821 = vld [vmem:[%s3 + $0x148] sm:$0xff]
      %v1822 = vld [vmem:[%s3 + $0x150] sm:$0xff]
      %v1823 = vld [vmem:[%s3 + $0x158] sm:$0xff]
      %v1824 = vld [vmem:[%s3 + $0x160] sm:$0xff]
      %v1825 = vld [vmem:[%s3 + $0x168] sm:$0xff]
      %v1826 = vld [vmem:[%s3 + $0x170] sm:$0xff]
      %v1827 = vld [vmem:[%s3 + $0x178] sm:$0xff]
      %v1828 = vld [vmem:[%s3 + $0x180] sm:$0xff]
      %v1829 = vld [vmem:[%s3 + $0x188] sm:$0xff]
      %v1830 = vld [vmem:[%s3 + $0x190] sm:$0xff]
      %v1831 = vld [vmem:[%s3 + $0x198] sm:$0xff]
      %v1832 = vld [vmem:[%s3 + $0x1a0] sm:$0xff]
      %v1833 = vld [vmem:[%s3 + $0x1a8] sm:$0xff]
      %v1834 = vld [vmem:[%s3 + $0x1b0] sm:$0xff]
      %v1835 = vld [vmem:[%s3 + $0x1b8] sm:$0xff]
      %v1836 = vld [vmem:[%s3 + $0x1c0] sm:$0xff]
      %v1837 = vld [vmem:[%s3 + $0x1c8] sm:$0xff]
      %v1838 = vld [vmem:[%s3 + $0x1d0] sm:$0xff]
      %v1839 = vld [vmem:[%s3 + $0x1d8] sm:$0xff]
      %v1840 = vld [vmem:[%s3 + $0x1e0] sm:$0xff]
      %v1841 = vld [vmem:[%s3 + $0x1e8] sm:$0xff]
      %v1842 = vld [vmem:[%s3 + $0x1f0] sm:$0xff]
      %v1843 = vld [vmem:[%s3 + $0x1f8] sm:$0xff]
      %v1844 = vld [vmem:[%s4] sm:$0x1]
      %v1846 = vlaneseq
      %v1847 = vshrl.u32 %v1846, 7
      %v1848 = vsub.s32 0, %v1847
      %v1849 = vrot.slane %v1844, %v1848
      %1851 = vmatprep.subr.mxu0 0.0
      %1852 = vmatpush1.msra.mxu0 %v1780
      %1853 = vmatprep.subr.mxu0 0.0
      %1854 = vmatpush1.msra.mxu0 %v1781
      %1855 = vmatprep.subr.mxu0 0.0
      %1856 = vmatpush1.msra.mxu0 %v1782
      %1857 = vmatprep.subr.mxu0 0.0
      %1858 = vmatpush1.msra.mxu0 %v1783
      %1859 = vmatprep.subr.mxu0 0.0
      %1860 = vmatpush1.msra.mxu0 %v1784
      %1861 = vmatprep.subr.mxu0 0.0
      %1862 = vmatpush1.msra.mxu0 %v1785
      %1863 = vmatprep.subr.mxu0 0.0
      %1864 = vmatpush1.msra.mxu0 %v1786
      %1865 = vmatprep.subr.mxu0 0.0
      %1866 = vmatpush1.msra.mxu0 %v1787
      %1867 = vmatprep.subr.mxu0 0.0
      %1868 = vmatpush1.msra.mxu0 %v1788
      %1869 = vmatprep.subr.mxu0 0.0
      %1870 = vmatpush1.msra.mxu0 %v1789
      %1871 = vmatprep.subr.mxu0 0.0
      %1872 = vmatpush1.msra.mxu0 %v1790
      %1873 = vmatprep.subr.mxu0 0.0
      %1874 = vmatpush1.msra.mxu0 %v1791
      %1875 = vmatprep.subr.mxu0 0.0
      %1876 = vmatpush1.msra.mxu0 %v1792
      %1877 = vmatprep.subr.mxu0 0.0
      %1878 = vmatpush1.msra.mxu0 %v1793
      %1879 = vmatprep.subr.mxu0 0.0
      %1880 = vmatpush1.msra.mxu0 %v1794
      %1881 = vmatprep.subr.mxu0 0.0
      %1882 = vmatpush1.msra.mxu0 %v1795
      %1883 = vmatprep.subr.mxu0 0.0
      %1884 = vmatpush1.msra.mxu0 %v1796
      %1885 = vmatprep.subr.mxu0 0.0
      %1886 = vmatpush1.msra.mxu0 %v1797
      %1887 = vmatprep.subr.mxu0 0.0
      %1888 = vmatpush1.msra.mxu0 %v1798
      %1889 = vmatprep.subr.mxu0 0.0
      %1890 = vmatpush1.msra.mxu0 %v1799
      %1891 = vmatprep.subr.mxu0 0.0
      %1892 = vmatpush1.msra.mxu0 %v1800
      %1893 = vmatprep.subr.mxu0 0.0
      %1894 = vmatpush1.msra.mxu0 %v1801
      %1895 = vmatprep.subr.mxu0 0.0
      %1896 = vmatpush1.msra.mxu0 %v1802
      %1897 = vmatprep.subr.mxu0 0.0
      %1898 = vmatpush1.msra.mxu0 %v1803
      %1899 = vmatprep.subr.mxu0 0.0
      %1900 = vmatpush1.msra.mxu0 %v1804
      %1901 = vmatprep.subr.mxu0 0.0
      %1902 = vmatpush1.msra.mxu0 %v1805
      %1903 = vmatprep.subr.mxu0 0.0
      %1904 = vmatpush1.msra.mxu0 %v1806
      %1905 = vmatprep.subr.mxu0 0.0
      %1906 = vmatpush1.msra.mxu0 %v1807
      %1907 = vmatprep.subr.mxu0 0.0
      %1908 = vmatpush1.msra.mxu0 %v1808
      %1909 = vmatprep.subr.mxu0 0.0
      %1910 = vmatpush1.msra.mxu0 %v1809
      %1911 = vmatprep.subr.mxu0 0.0
      %1912 = vmatpush1.msra.mxu0 %v1810
      %1913 = vmatprep.subr.mxu0 0.0
      %1914 = vmatpush1.msra.mxu0 %v1811
      %1915 = vmatprep.mubr.f32.mxu0 %v1749
      %1916 = vmatmul.mubr.f32.gmra.mrb[0].mxu0 %v1748
      %v1917 = vpop.f32.mrb[0].mxu0
      %v1918 = vadd.f32 %v1849, %v1917
      %v1919 = vpop.f32.mrb[0].mxu0
      %1920 = vmatprep.mubr.f32.mxu0 %v1753
      %1921 = vmatmul.mubr.f32.gmra.mrb[0].mxu0 %v1752
      %v1922 = vpop.f32.mrb[0].mxu0
      %v1923 = vadd.f32 %v1849, %v1922
      %v1924 = vpop.f32.mrb[0].mxu0
      %1925 = vmatprep.mubr.f32.mxu0 %v1757
      %1926 = vmatmul.mubr.f32.gmra.mrb[0].mxu0 %v1756
      %v1927 = vpop.f32.mrb[0].mxu0
      %v1928 = vadd.f32 %v1849, %v1927
      %v1929 = vpop.f32.mrb[0].mxu0
      %1930 = vmatprep.mubr.f32.mxu0 %v1761
      %1931 = vmatmul.mubr.f32.gmra.mrb[0].mxu0 %v1760
      %v1932 = vpop.f32.mrb[0].mxu0
      %v1933 = vadd.f32 %v1849, %v1932
      %v1934 = vpop.f32.mrb[0].mxu0
      %1935 = vmatprep.mubr.f32.mxu0 %v1765
      %1936 = vmatmul.mubr.f32.gmra.mrb[0].mxu0 %v1764
      %v1937 = vpop.f32.mrb[0].mxu0
      %v1938 = vadd.f32 %v1849, %v1937
      %v1939 = vpop.f32.mrb[0].mxu0
      %1940 = vmatprep.mubr.f32.mxu0 %v1769
      %1941 = vmatmul.mubr.f32.gmra.mrb[0].mxu0 %v1768
      %v1942 = vpop.f32.mrb[0].mxu0
      %v1943 = vadd.f32 %v1849, %v1942
      %v1944 = vpop.f32.mrb[0].mxu0
      %1945 = vmatprep.mubr.f32.mxu0 %v1773
      %1946 = vmatmul.mubr.f32.gmra.mrb[0].mxu0 %v1772
      %v1947 = vpop.f32.mrb[0].mxu0
      %v1948 = vadd.f32 %v1849, %v1947
      %v1949 = vpop.f32.mrb[0].mxu0
      %1950 = vmatprep.mubr.f32.mxu0 %v1777
      %1951 = vmatmul.mubr.f32.gmra.mrb[0].mxu0 %v1776
      %v1952 = vpop.f32.mrb[0].mxu0
      %v1953 = vadd.f32 %v1849, %v1952
      %v1954 = vpop.f32.mrb[0].mxu0
      %1955 = vdwg.mxu0
      %1956 = vmatprep.subr.mxu0 0.0
      %1957 = vmatpush1.msra.mxu0 %v1812
      %1958 = vmatprep.subr.mxu0 0.0
      %1959 = vmatpush1.msra.mxu0 %v1813
      %1960 = vmatprep.subr.mxu0 0.0
      %1961 = vmatpush1.msra.mxu0 %v1814
      %1962 = vmatprep.subr.mxu0 0.0
      %1963 = vmatpush1.msra.mxu0 %v1815
      %1964 = vmatprep.subr.mxu0 0.0
      %1965 = vmatpush1.msra.mxu0 %v1816
      %1966 = vmatprep.subr.mxu0 0.0
      %1967 = vmatpush1.msra.mxu0 %v1817
      %1968 = vmatprep.subr.mxu0 0.0
      %1969 = vmatpush1.msra.mxu0 %v1818
      %1970 = vmatprep.subr.mxu0 0.0
      %1971 = vmatpush1.msra.mxu0 %v1819
      %1972 = vmatprep.subr.mxu0 0.0
      %1973 = vmatpush1.msra.mxu0 %v1820
      %1974 = vmatprep.subr.mxu0 0.0
      %1975 = vmatpush1.msra.mxu0 %v1821
      %1976 = vmatprep.subr.mxu0 0.0
      %1977 = vmatpush1.msra.mxu0 %v1822
      %1978 = vmatprep.subr.mxu0 0.0
      %1979 = vmatpush1.msra.mxu0 %v1823
      %1980 = vmatprep.subr.mxu0 0.0
      %1981 = vmatpush1.msra.mxu0 %v1824
      %1982 = vmatprep.subr.mxu0 0.0
      %1983 = vmatpush1.msra.mxu0 %v1825
      %1984 = vmatprep.subr.mxu0 0.0
      %1985 = vmatpush1.msra.mxu0 %v1826
      %1986 = vmatprep.subr.mxu0 0.0
      %1987 = vmatpush1.msra.mxu0 %v1827
      %1988 = vmatprep.subr.mxu0 0.0
      %1989 = vmatpush1.msra.mxu0 %v1828
      %1990 = vmatprep.subr.mxu0 0.0
      %1991 = vmatpush1.msra.mxu0 %v1829
      %1992 = vmatprep.subr.mxu0 0.0
      %1993 = vmatpush1.msra.mxu0 %v1830
      %1994 = vmatprep.subr.mxu0 0.0
      %1995 = vmatpush1.msra.mxu0 %v1831
      %1996 = vmatprep.subr.mxu0 0.0
      %1997 = vmatpush1.msra.mxu0 %v1832
      %1998 = vmatprep.subr.mxu0 0.0
      %1999 = vmatpush1.msra.mxu0 %v1833
      %2000 = vmatprep.subr.mxu0 0.0
      %2001 = vmatpush1.msra.mxu0 %v1834
      %2002 = vmatprep.subr.mxu0 0.0
      %2003 = vmatpush1.msra.mxu0 %v1835
      %2004 = vmatprep.subr.mxu0 0.0
      %2005 = vmatpush1.msra.mxu0 %v1836
      %2006 = vmatprep.subr.mxu0 0.0
      %2007 = vmatpush1.msra.mxu0 %v1837
      %2008 = vmatprep.subr.mxu0 0.0
      %2009 = vmatpush1.msra.mxu0 %v1838
      %2010 = vmatprep.subr.mxu0 0.0
      %2011 = vmatpush1.msra.mxu0 %v1839
      %2012 = vmatprep.subr.mxu0 0.0
      %2013 = vmatpush1.msra.mxu0 %v1840
      %2014 = vmatprep.subr.mxu0 0.0
      %2015 = vmatpush1.msra.mxu0 %v1841
      %2016 = vmatprep.subr.mxu0 0.0
      %2017 = vmatpush1.msra.mxu0 %v1842
      %2018 = vmatprep.subr.mxu0 0.0
      %2019 = vmatpush1.msra.mxu0 %v1843
      %2020 = vmatprep.mubr.f32.mxu0 %v1751
      %2021 = vmatmul.mubr.f32.gmra.mrb[0].mxu0 %v1750
      %v2022 = vpop.f32.mrb[0].mxu0
      %v2023 = vadd.f32 %v1918, %v2022
      %v2024 = vpop.f32.mrb[0].mxu0
      %2025 = vmatprep.mubr.f32.mxu0 %v1755
      %2026 = vmatmul.mubr.f32.gmra.mrb[0].mxu0 %v1754
      %v2027 = vpop.f32.mrb[0].mxu0
      %v2028 = vadd.f32 %v1923, %v2027
      %v2029 = vpop.f32.mrb[0].mxu0
      %2030 = vmatprep.mubr.f32.mxu0 %v1759
      %2031 = vmatmul.mubr.f32.gmra.mrb[0].mxu0 %v1758
      %v2032 = vpop.f32.mrb[0].mxu0
      %v2033 = vadd.f32 %v1928, %v2032
      %v2034 = vpop.f32.mrb[0].mxu0
      %2035 = vmatprep.mubr.f32.mxu0 %v1763
      %2036 = vmatmul.mubr.f32.gmra.mrb[0].mxu0 %v1762
      %v2037 = vpop.f32.mrb[0].mxu0
      %v2038 = vadd.f32 %v1933, %v2037
      %v2039 = vpop.f32.mrb[0].mxu0
      %2040 = vmatprep.mubr.f32.mxu0 %v1767
      %2041 = vmatmul.mubr.f32.gmra.mrb[0].mxu0 %v1766
      %v2042 = vpop.f32.mrb[0].mxu0
      %v2043 = vadd.f32 %v1938, %v2042
      %v2044 = vpop.f32.mrb[0].mxu0
      %2045 = vmatprep.mubr.f32.mxu0 %v1771
      %2046 = vmatmul.mubr.f32.gmra.mrb[0].mxu0 %v1770
      %v2047 = vpop.f32.mrb[0].mxu0
      %v2048 = vadd.f32 %v1943, %v2047
      %v2049 = vpop.f32.mrb[0].mxu0
      %2050 = vmatprep.mubr.f32.mxu0 %v1775
      %2051 = vmatmul.mubr.f32.gmra.mrb[0].mxu0 %v1774
      %v2052 = vpop.f32.mrb[0].mxu0
      %v2053 = vadd.f32 %v1948, %v2052
      %v2054 = vpop.f32.mrb[0].mxu0
      %2055 = vmatprep.mubr.f32.mxu0 %v1779
      %2056 = vmatmul.mubr.f32.gmra.mrb[0].mxu0 %v1778
      %v2057 = vpop.f32.mrb[0].mxu0
      %v2058 = vadd.f32 %v1953, %v2057
      %v2059 = vpop.f32.mrb[0].mxu0
      %2060 = vdwg.mxu0
      %v2061 = vmul.f32 %v2023, 0.5
      %v2062 = vmul.f32 %v2028, 0.5
      %v2063 = vmul.f32 %v2033, 0.5
      %v2064 = vmul.f32 %v2038, 0.5
      %v2065 = vmul.f32 %v2043, 0.5
      %v2066 = vmul.f32 %v2048, 0.5
      %v2067 = vmul.f32 %v2053, 0.5
      %v2068 = vmul.f32 %v2058, 0.5
      %v2069 = vmul.f32 %v2023, 0.70710677
      %v2070 = vmul.f32 %v2028, 0.70710677
      %v2071 = vmul.f32 %v2033, 0.70710677
      %v2072 = vmul.f32 %v2038, 0.70710677
      %v2073 = vmul.f32 %v2043, 0.70710677
      %v2074 = vmul.f32 %v2048, 0.70710677
      %v2075 = vmul.f32 %v2053, 0.70710677
      %v2076 = vmul.f32 %v2058, 0.70710677
      %vm2077 = vcmp.ge.f32.partialorder %v2069, 0.0
      %vm2078 = vcmp.ge.f32.partialorder %v2070, 0.0
      %vm2079 = vcmp.ge.f32.partialorder %v2071, 0.0
      %vm2080 = vcmp.ge.f32.partialorder %v2072, 0.0
      %vm2081 = vcmp.ge.f32.partialorder %v2073, 0.0
      %vm2082 = vcmp.ge.f32.partialorder %v2074, 0.0
      %vm2083 = vcmp.ge.f32.partialorder %v2075, 0.0
      %vm2084 = vcmp.ge.f32.partialorder %v2076, 0.0
      %v2085 = vsel %vm2077, 1.0, -1.0
      %v2086 = vsel %vm2078, 1.0, -1.0
      %v2087 = vsel %vm2079, 1.0, -1.0
      %v2088 = vsel %vm2080, 1.0, -1.0
      %v2089 = vsel %vm2081, 1.0, -1.0
      %v2090 = vsel %vm2082, 1.0, -1.0
      %v2091 = vsel %vm2083, 1.0, -1.0
      %v2092 = vsel %vm2084, 1.0, -1.0
      %v2093 = vand.u32 2147483647, %v2069
      %v2094 = vand.u32 2147483647, %v2070
      %v2095 = vand.u32 2147483647, %v2071
      %v2096 = vand.u32 2147483647, %v2072
      %v2097 = vand.u32 2147483647, %v2073
      %v2098 = vand.u32 2147483647, %v2074
      %v2099 = vand.u32 2147483647, %v2075
      %v2100 = vand.u32 2147483647, %v2076
      %v2101 = vmul.f32 %v2093, 0.3275911
      %v2102 = vmul.f32 %v2094, 0.3275911
      %v2103 = vmul.f32 %v2095, 0.3275911
      %v2104 = vmul.f32 %v2096, 0.3275911
      %v2105 = vmul.f32 %v2097, 0.3275911
      %v2106 = vmul.f32 %v2098, 0.3275911
      %v2107 = vmul.f32 %v2099, 0.3275911
      %v2108 = vmul.f32 %v2100, 0.3275911
      %v2109 = vadd.f32 %v2101, 1.0
      %v2110 = vadd.f32 %v2102, 1.0
      %v2111 = vadd.f32 %v2103, 1.0
      %v2112 = vadd.f32 %v2104, 1.0
      %v2113 = vadd.f32 %v2105, 1.0
      %v2114 = vadd.f32 %v2106, 1.0
      %v2115 = vadd.f32 %v2107, 1.0
      %v2116 = vadd.f32 %v2108, 1.0
      %v2117 = vrcp.pop %v2109
      %v2118 = vmul.f32 1.0, %v2117
      %v2119 = vrcp.pop %v2110
      %v2120 = vmul.f32 1.0, %v2119
      %v2121 = vrcp.pop %v2111
      %v2122 = vmul.f32 1.0, %v2121
      %v2123 = vrcp.pop %v2112
      %v2124 = vmul.f32 1.0, %v2123
      %v2125 = vrcp.pop %v2113
      %v2126 = vmul.f32 1.0, %v2125
      %v2127 = vrcp.pop %v2114
      %v2128 = vmul.f32 1.0, %v2127
      %v2129 = vrcp.pop %v2115
      %v2130 = vmul.f32 1.0, %v2129
      %v2131 = vrcp.pop %v2116
      %v2132 = vmul.f32 1.0, %v2131
      %v2133 = vmul.f32 %v2118, 1.0614054
      %v2134 = vmul.f32 %v2120, 1.0614054
      %v2135 = vmul.f32 %v2122, 1.0614054
      %v2136 = vmul.f32 %v2124, 1.0614054
      %v2137 = vmul.f32 %v2126, 1.0614054
      %v2138 = vmul.f32 %v2128, 1.0614054
      %v2139 = vmul.f32 %v2130, 1.0614054
      %v2140 = vmul.f32 %v2132, 1.0614054
      %v2141 = vadd.f32 %v2133, -1.4531521
      %v2142 = vadd.f32 %v2134, -1.4531521
      %v2143 = vadd.f32 %v2135, -1.4531521
      %v2144 = vadd.f32 %v2136, -1.4531521
      %v2145 = vadd.f32 %v2137, -1.4531521
      %v2146 = vadd.f32 %v2138, -1.4531521
      %v2147 = vadd.f32 %v2139, -1.4531521
      %v2148 = vadd.f32 %v2140, -1.4531521
      %v2149 = vmul.f32 %v2141, %v2118
      %v2150 = vmul.f32 %v2142, %v2120
      %v2151 = vmul.f32 %v2143, %v2122
      %v2152 = vmul.f32 %v2144, %v2124
      %v2153 = vmul.f32 %v2145, %v2126
      %v2154 = vmul.f32 %v2146, %v2128
      %v2155 = vmul.f32 %v2147, %v2130
      %v2156 = vmul.f32 %v2148, %v2132
      %v2157 = vadd.f32 %v2149, 1.4214138
      %v2158 = vadd.f32 %v2150, 1.4214138
      %v2159 = vadd.f32 %v2151, 1.4214138
      %v2160 = vadd.f32 %v2152, 1.4214138
      %v2161 = vadd.f32 %v2153, 1.4214138
      %v2162 = vadd.f32 %v2154, 1.4214138
      %v2163 = vadd.f32 %v2155, 1.4214138
      %v2164 = vadd.f32 %v2156, 1.4214138
      %v2165 = vmul.f32 %v2157, %v2118
      %v2166 = vmul.f32 %v2158, %v2120
      %v2167 = vmul.f32 %v2159, %v2122
      %v2168 = vmul.f32 %v2160, %v2124
      %v2169 = vmul.f32 %v2161, %v2126
      %v2170 = vmul.f32 %v2162, %v2128
      %v2171 = vmul.f32 %v2163, %v2130
      %v2172 = vmul.f32 %v2164, %v2132
      %v2173 = vadd.f32 %v2165, -0.28449672
      %v2174 = vadd.f32 %v2166, -0.28449672
      %v2175 = vadd.f32 %v2167, -0.28449672
      %v2176 = vadd.f32 %v2168, -0.28449672
      %v2177 = vadd.f32 %v2169, -0.28449672
      %v2178 = vadd.f32 %v2170, -0.28449672
      %v2179 = vadd.f32 %v2171, -0.28449672
      %v2180 = vadd.f32 %v2172, -0.28449672
      %v2181 = vmul.f32 %v2173, %v2118
      %v2182 = vmul.f32 %v2174, %v2120
      %v2183 = vmul.f32 %v2175, %v2122
      %v2184 = vmul.f32 %v2176, %v2124
      %v2185 = vmul.f32 %v2177, %v2126
      %v2186 = vmul.f32 %v2178, %v2128
      %v2187 = vmul.f32 %v2179, %v2130
      %v2188 = vmul.f32 %v2180, %v2132
      %v2189 = vadd.f32 %v2181, 0.2548296
      %v2190 = vadd.f32 %v2182, 0.2548296
      %v2191 = vadd.f32 %v2183, 0.2548296
      %v2192 = vadd.f32 %v2184, 0.2548296
      %v2193 = vadd.f32 %v2185, 0.2548296
      %v2194 = vadd.f32 %v2186, 0.2548296
      %v2195 = vadd.f32 %v2187, 0.2548296
      %v2196 = vadd.f32 %v2188, 0.2548296
      %v2197 = vmul.f32 %v2189, %v2118
      %v2198 = vmul.f32 %v2190, %v2120
      %v2199 = vmul.f32 %v2191, %v2122
      %v2200 = vmul.f32 %v2192, %v2124
      %v2201 = vmul.f32 %v2193, %v2126
      %v2202 = vmul.f32 %v2194, %v2128
      %v2203 = vmul.f32 %v2195, %v2130
      %v2204 = vmul.f32 %v2196, %v2132
      %v2205 = vsub.f32 0.0, %v2093
      %v2206 = vsub.f32 0.0, %v2094
      %v2207 = vsub.f32 0.0, %v2095
      %v2208 = vsub.f32 0.0, %v2096
      %v2209 = vsub.f32 0.0, %v2097
      %v2210 = vsub.f32 0.0, %v2098
      %v2211 = vsub.f32 0.0, %v2099
      %v2212 = vsub.f32 0.0, %v2100
      %v2213 = vmul.f32 %v2205, %v2093
      %v2214 = vmul.f32 %v2206, %v2094
      %v2215 = vmul.f32 %v2207, %v2095
      %v2216 = vmul.f32 %v2208, %v2096
      %v2217 = vmul.f32 %v2209, %v2097
      %v2218 = vmul.f32 %v2210, %v2098
      %v2219 = vmul.f32 %v2211, %v2099
      %v2220 = vmul.f32 %v2212, %v2100
      %v2221 = vmul.f32 %v2213, 1.442695
      %v2222 = vpow.pop %v2221
      %v2223 = vmul.f32 %v2214, 1.442695
      %v2224 = vpow.pop %v2223
      %v2225 = vmul.f32 %v2215, 1.442695
      %v2226 = vpow.pop %v2225
      %v2227 = vmul.f32 %v2216, 1.442695
      %v2228 = vpow.pop %v2227
      %v2229 = vmul.f32 %v2217, 1.442695
      %v2230 = vpow.pop %v2229
      %v2231 = vmul.f32 %v2218, 1.442695
      %v2232 = vpow.pop %v2231
      %v2233 = vmul.f32 %v2219, 1.442695
      %v2234 = vpow.pop %v2233
      %v2235 = vmul.f32 %v2220, 1.442695
      %v2236 = vpow.pop %v2235
      %v2237 = vmul.f32 %v2197, %v2222
      %v2238 = vmul.f32 %v2198, %v2224
      %v2239 = vmul.f32 %v2199, %v2226
      %v2240 = vmul.f32 %v2200, %v2228
      %v2241 = vmul.f32 %v2201, %v2230
      %v2242 = vmul.f32 %v2202, %v2232
      %v2243 = vmul.f32 %v2203, %v2234
      %v2244 = vmul.f32 %v2204, %v2236
      %v2245 = vsub.f32 1.0, %v2237
      %v2246 = vsub.f32 1.0, %v2238
      %v2247 = vsub.f32 1.0, %v2239
      %v2248 = vsub.f32 1.0, %v2240
      %v2249 = vsub.f32 1.0, %v2241
      %v2250 = vsub.f32 1.0, %v2242
      %v2251 = vsub.f32 1.0, %v2243
      %v2252 = vsub.f32 1.0, %v2244
      %v2253 = vmul.f32 %v2085, %v2245
      %v2254 = vmul.f32 %v2086, %v2246
      %v2255 = vmul.f32 %v2087, %v2247
      %v2256 = vmul.f32 %v2088, %v2248
      %v2257 = vmul.f32 %v2089, %v2249
      %v2258 = vmul.f32 %v2090, %v2250
      %v2259 = vmul.f32 %v2091, %v2251
      %v2260 = vmul.f32 %v2092, %v2252
      %v2261 = vadd.f32 %v2253, 1.0
      %v2262 = vadd.f32 %v2254, 1.0
      %v2263 = vadd.f32 %v2255, 1.0
      %v2264 = vadd.f32 %v2256, 1.0
      %v2265 = vadd.f32 %v2257, 1.0
      %v2266 = vadd.f32 %v2258, 1.0
      %v2267 = vadd.f32 %v2259, 1.0
      %v2268 = vadd.f32 %v2260, 1.0
      %v2269 = vmul.f32 %v2061, %v2261
      %v2270 = vmul.f32 %v2062, %v2262
      %v2271 = vmul.f32 %v2063, %v2263
      %v2272 = vmul.f32 %v2064, %v2264
      %v2273 = vmul.f32 %v2065, %v2265
      %v2274 = vmul.f32 %v2066, %v2266
      %v2275 = vmul.f32 %v2067, %v2267
      %v2276 = vmul.f32 %v2068, %v2268
      %v2277 = vld [vmem:[%s5] sm:$0xff]
      %v2278 = vld [vmem:[%s5 + $0x8] sm:$0xff]
      %v2279 = vld [vmem:[%s5 + $0x10] sm:$0xff]
      %v2280 = vld [vmem:[%s5 + $0x18] sm:$0xff]
      %v2281 = vld [vmem:[%s5 + $0x20] sm:$0xff]
      %v2282 = vld [vmem:[%s5 + $0x28] sm:$0xff]
      %v2283 = vld [vmem:[%s5 + $0x30] sm:$0xff]
      %v2284 = vld [vmem:[%s5 + $0x38] sm:$0xff]
      %v2285 = vadd.f32 %v2269, %v2277
      %v2286 = vadd.f32 %v2270, %v2278
      %v2287 = vadd.f32 %v2271, %v2279
      %v2288 = vadd.f32 %v2272, %v2280
      %v2289 = vadd.f32 %v2273, %v2281
      %v2290 = vadd.f32 %v2274, %v2282
      %v2291 = vadd.f32 %v2275, %v2283
      %v2292 = vadd.f32 %v2276, %v2284
      %v2293 = vld [vmem:[%s6] sm:$0xff]
      %v2294 = vld [vmem:[%s6 + $0x8] sm:$0xff]
      %vm2295 = vcmask 130048
      %v2297 = vsel %vm2295, %v2285, 0
      %v2300 = vsel %vm2295, %v2286, 0
      %v2303 = vsel %vm2295, %v2287, 0
      %v2306 = vsel %vm2295, %v2288, 0
      %v2309 = vsel %vm2295, %v2289, 0
      %v2312 = vsel %vm2295, %v2290, 0
      %v2315 = vsel %vm2295, %v2291, 0
      %v2318 = vsel %vm2295, %v2292, 0
      %2320 = vmatprep.subr.mxu0 0.0
      %2321 = vmatpush1.msra.mxu0 %v2293
      %2322 = vmatprep.subr.mxu0 0.0
      %2323 = vmatpush1.msra.mxu0 %v2294
      %2324 = vmatprep.subr.mxu0 0.0
      %2325 = vmatpush1.msra.mxu0 0.0
      %2326 = vmatprep.subr.mxu0 0.0
      %2327 = vmatpush1.msra.mxu0 0.0
      %2328 = vmatprep.subr.mxu0 0.0
      %2329 = vmatpush1.msra.mxu0 0.0
      %2330 = vmatprep.subr.mxu0 0.0
      %2331 = vmatpush1.msra.mxu0 0.0
      %2332 = vmatprep.subr.mxu0 0.0
      %2333 = vmatpush1.msra.mxu0 0.0
      %2334 = vmatprep.subr.mxu0 0.0
      %2335 = vmatpush1.msra.mxu0 0.0
      %2336 = vmatprep.subr.mxu0 0.0
      %2337 = vmatpush1.msra.mxu0 0.0
      %2338 = vmatprep.subr.mxu0 0.0
      %2339 = vmatpush1.msra.mxu0 0.0
      %2340 = vmatprep.subr.mxu0 0.0
      %2341 = vmatpush1.msra.mxu0 0.0
      %2342 = vmatprep.subr.mxu0 0.0
      %2343 = vmatpush1.msra.mxu0 0.0
      %2344 = vmatprep.subr.mxu0 0.0
      %2345 = vmatpush1.msra.mxu0 0.0
      %2346 = vmatprep.subr.mxu0 0.0
      %2347 = vmatpush1.msra.mxu0 0.0
      %2348 = vmatprep.subr.mxu0 0.0
      %2349 = vmatpush1.msra.mxu0 0.0
      %2350 = vmatprep.subr.mxu0 0.0
      %2351 = vmatpush1.msra.mxu0 0.0
      %2352 = vmatprep.subr.mxu0 0.0
      %2353 = vmatpush1.msra.mxu0 0.0
      %2354 = vmatprep.subr.mxu0 0.0
      %2355 = vmatpush1.msra.mxu0 0.0
      %2356 = vmatprep.subr.mxu0 0.0
      %2357 = vmatpush1.msra.mxu0 0.0
      %2358 = vmatprep.subr.mxu0 0.0
      %2359 = vmatpush1.msra.mxu0 0.0
      %2360 = vmatprep.subr.mxu0 0.0
      %2361 = vmatpush1.msra.mxu0 0.0
      %2362 = vmatprep.subr.mxu0 0.0
      %2363 = vmatpush1.msra.mxu0 0.0
      %2364 = vmatprep.subr.mxu0 0.0
      %2365 = vmatpush1.msra.mxu0 0.0
      %2366 = vmatprep.subr.mxu0 0.0
      %2367 = vmatpush1.msra.mxu0 0.0
      %2368 = vmatprep.subr.mxu0 0.0
      %2369 = vmatpush1.msra.mxu0 0.0
      %2370 = vmatprep.subr.mxu0 0.0
      %2371 = vmatpush1.msra.mxu0 0.0
      %2372 = vmatprep.subr.mxu0 0.0
      %2373 = vmatpush1.msra.mxu0 0.0
      %2374 = vmatprep.subr.mxu0 0.0
      %2375 = vmatpush1.msra.mxu0 0.0
      %2376 = vmatprep.subr.mxu0 0.0
      %2377 = vmatpush1.msra.mxu0 0.0
      %2378 = vmatprep.subr.mxu0 0.0
      %2379 = vmatpush1.msra.mxu0 0.0
      %2380 = vmatprep.subr.mxu0 0.0
      %2381 = vmatpush1.msra.mxu0 0.0
      %2382 = vmatprep.subr.mxu0 0.0
      %2383 = vmatpush1.msra.mxu0 0.0
      %2384 = vmatprep.mubr.f32.mxu0 0.0
      %2385 = vmatmul.mubr.f32.gmra.mrb[0].mxu0 %v2297
      %v2386 = vpop.f32.mrb[0].mxu0
      %v2387 = vadd.f32 0.0, %v2386
      %v2388 = vpop.f32.mrb[0].mxu0
      %2389 = vmatprep.mubr.f32.mxu0 0.0
      %2390 = vmatmul.mubr.f32.gmra.mrb[0].mxu0 %v2300
      %v2391 = vpop.f32.mrb[0].mxu0
      %v2392 = vadd.f32 0.0, %v2391
      %v2393 = vpop.f32.mrb[0].mxu0
      %2394 = vmatprep.mubr.f32.mxu0 0.0
      %2395 = vmatmul.mubr.f32.gmra.mrb[0].mxu0 %v2303
      %v2396 = vpop.f32.mrb[0].mxu0
      %v2397 = vadd.f32 0.0, %v2396
      %v2398 = vpop.f32.mrb[0].mxu0
      %2399 = vmatprep.mubr.f32.mxu0 0.0
      %2400 = vmatmul.mubr.f32.gmra.mrb[0].mxu0 %v2306
      %v2401 = vpop.f32.mrb[0].mxu0
      %v2402 = vadd.f32 0.0, %v2401
      %v2403 = vpop.f32.mrb[0].mxu0
      %2404 = vmatprep.mubr.f32.mxu0 0.0
      %2405 = vmatmul.mubr.f32.gmra.mrb[0].mxu0 %v2309
      %v2406 = vpop.f32.mrb[0].mxu0
      %v2407 = vadd.f32 0.0, %v2406
      %v2408 = vpop.f32.mrb[0].mxu0
      %2409 = vmatprep.mubr.f32.mxu0 0.0
      %2410 = vmatmul.mubr.f32.gmra.mrb[0].mxu0 %v2312
      %v2411 = vpop.f32.mrb[0].mxu0
      %v2412 = vadd.f32 0.0, %v2411
      %v2413 = vpop.f32.mrb[0].mxu0
      %2414 = vmatprep.mubr.f32.mxu0 0.0
      %2415 = vmatmul.mubr.f32.gmra.mrb[0].mxu0 %v2315
      %v2416 = vpop.f32.mrb[0].mxu0
      %v2417 = vadd.f32 0.0, %v2416
      %v2418 = vpop.f32.mrb[0].mxu0
      %2419 = vmatprep.mubr.f32.mxu0 0.0
      %2420 = vmatmul.mubr.f32.gmra.mrb[0].mxu0 %v2318
      %v2421 = vpop.f32.mrb[0].mxu0
      %v2422 = vadd.f32 0.0, %v2421
      %v2423 = vpop.f32.mrb[0].mxu0
      %2424 = vdwg.mxu0
      %v2425 = vld [vmem:[%s7] sm:$0x1]
      %v2426 = vld [vmem:[%s7 + $0x1] sm:$0x1]
      %v2427 = vld [vmem:[%s7 + $0x2] sm:$0x1]
      %v2428 = vld [vmem:[%s7 + $0x3] sm:$0x1]
      %v2429 = vld [vmem:[%s7 + $0x4] sm:$0x1]
      %v2430 = vld [vmem:[%s7 + $0x5] sm:$0x1]
      %v2431 = vld [vmem:[%s7 + $0x6] sm:$0x1]
      %v2432 = vld [vmem:[%s7 + $0x7] sm:$0x1]
      %v2441 = vlaneseq
      %v2442 = vshrl.u32 %v2441, 7
      %v2443 = vsub.s32 0, %v2442
      %v2444 = vrot.slane %v2425, %v2443
      %v2445 = vlaneseq
      %v2446 = vshrl.u32 %v2445, 7
      %v2447 = vsub.s32 0, %v2446
      %v2448 = vrot.slane %v2426, %v2447
      %v2449 = vlaneseq
      %v2450 = vshrl.u32 %v2449, 7
      %v2451 = vsub.s32 0, %v2450
      %v2452 = vrot.slane %v2427, %v2451
      %v2453 = vlaneseq
      %v2454 = vshrl.u32 %v2453, 7
      %v2455 = vsub.s32 0, %v2454
      %v2456 = vrot.slane %v2428, %v2455
      %v2457 = vlaneseq
      %v2458 = vshrl.u32 %v2457, 7
      %v2459 = vsub.s32 0, %v2458
      %v2460 = vrot.slane %v2429, %v2459
      %v2461 = vlaneseq
      %v2462 = vshrl.u32 %v2461, 7
      %v2463 = vsub.s32 0, %v2462
      %v2464 = vrot.slane %v2430, %v2463
      %v2465 = vlaneseq
      %v2466 = vshrl.u32 %v2465, 7
      %v2467 = vsub.s32 0, %v2466
      %v2468 = vrot.slane %v2431, %v2467
      %v2469 = vlaneseq
      %v2470 = vshrl.u32 %v2469, 7
      %v2471 = vsub.s32 0, %v2470
      %v2472 = vrot.slane %v2432, %v2471
      %v2481 = vmul.f32 %v2387, %v2444
      %v2482 = vmul.f32 %v2392, %v2444
      %v2483 = vmul.f32 %v2397, %v2444
      %v2484 = vmul.f32 %v2402, %v2444
      %v2485 = vmul.f32 %v2407, %v2444
      %v2486 = vmul.f32 %v2412, %v2444
      %v2487 = vmul.f32 %v2417, %v2444
      %v2488 = vmul.f32 %v2422, %v2444
      %v2489 = vmul.f32 %v2387, %v2448
      %v2490 = vmul.f32 %v2392, %v2448
      %v2491 = vmul.f32 %v2397, %v2448
      %v2492 = vmul.f32 %v2402, %v2448
      %v2493 = vmul.f32 %v2407, %v2448
      %v2494 = vmul.f32 %v2412, %v2448
      %v2495 = vmul.f32 %v2417, %v2448
      %v2496 = vmul.f32 %v2422, %v2448
      %v2497 = vmul.f32 %v2387, %v2452
      %v2498 = vmul.f32 %v2392, %v2452
      %v2499 = vmul.f32 %v2397, %v2452
      %v2500 = vmul.f32 %v2402, %v2452
      %v2501 = vmul.f32 %v2407, %v2452
      %v2502 = vmul.f32 %v2412, %v2452
      %v2503 = vmul.f32 %v2417, %v2452
      %v2504 = vmul.f32 %v2422, %v2452
      %v2505 = vmul.f32 %v2387, %v2456
      %v2506 = vmul.f32 %v2392, %v2456
      %v2507 = vmul.f32 %v2397, %v2456
      %v2508 = vmul.f32 %v2402, %v2456
      %v2509 = vmul.f32 %v2407, %v2456
      %v2510 = vmul.f32 %v2412, %v2456
      %v2511 = vmul.f32 %v2417, %v2456
      %v2512 = vmul.f32 %v2422, %v2456
      %v2513 = vmul.f32 %v2387, %v2460
      %v2514 = vmul.f32 %v2392, %v2460
      %v2515 = vmul.f32 %v2397, %v2460
      %v2516 = vmul.f32 %v2402, %v2460
      %v2517 = vmul.f32 %v2407, %v2460
      %v2518 = vmul.f32 %v2412, %v2460
      %v2519 = vmul.f32 %v2417, %v2460
      %v2520 = vmul.f32 %v2422, %v2460
      %v2521 = vmul.f32 %v2387, %v2464
      %v2522 = vmul.f32 %v2392, %v2464
      %v2523 = vmul.f32 %v2397, %v2464
      %v2524 = vmul.f32 %v2402, %v2464
      %v2525 = vmul.f32 %v2407, %v2464
      %v2526 = vmul.f32 %v2412, %v2464
      %v2527 = vmul.f32 %v2417, %v2464
      %v2528 = vmul.f32 %v2422, %v2464
      %v2529 = vmul.f32 %v2387, %v2468
      %v2530 = vmul.f32 %v2392, %v2468
      %v2531 = vmul.f32 %v2397, %v2468
      %v2532 = vmul.f32 %v2402, %v2468
      %v2533 = vmul.f32 %v2407, %v2468
      %v2534 = vmul.f32 %v2412, %v2468
      %v2535 = vmul.f32 %v2417, %v2468
      %v2536 = vmul.f32 %v2422, %v2468
      %v2537 = vmul.f32 %v2387, %v2472
      %v2538 = vmul.f32 %v2392, %v2472
      %v2539 = vmul.f32 %v2397, %v2472
      %v2540 = vmul.f32 %v2402, %v2472
      %v2541 = vmul.f32 %v2407, %v2472
      %v2542 = vmul.f32 %v2412, %v2472
      %v2543 = vmul.f32 %v2417, %v2472
      %v2544 = vmul.f32 %v2422, %v2472
      %2553 = vrot.lane.b32.xlu0 %v2387, 112
      %v2554 = vpop.permute.xlu0 %2553
      %2555 = vrot.lane.b32.xlu0 %v2392, 112
      %v2556 = vpop.permute.xlu0 %2555
      %2557 = vrot.lane.b32.xlu0 %v2397, 112
      %v2558 = vpop.permute.xlu0 %2557
      %2559 = vrot.lane.b32.xlu0 %v2402, 112
      %v2560 = vpop.permute.xlu0 %2559
      %2561 = vrot.lane.b32.xlu0 %v2407, 112
      %v2562 = vpop.permute.xlu0 %2561
      %2563 = vrot.lane.b32.xlu0 %v2412, 112
      %v2564 = vpop.permute.xlu0 %2563
      %2565 = vrot.lane.b32.xlu0 %v2417, 112
      %v2566 = vpop.permute.xlu0 %2565
      %2567 = vrot.lane.b32.xlu0 %v2422, 112
      %v2568 = vpop.permute.xlu0 %2567
      %v2570 = vsel %vm2295, %v2481, 0
      %v2573 = vsel %vm2295, %v2482, 0
      %v2576 = vsel %vm2295, %v2483, 0
      %v2579 = vsel %vm2295, %v2484, 0
      %v2582 = vsel %vm2295, %v2485, 0
      %v2585 = vsel %vm2295, %v2486, 0
      %v2588 = vsel %vm2295, %v2487, 0
      %v2591 = vsel %vm2295, %v2488, 0
      %v2594 = vsel %vm2295, %v2489, 0
      %v2597 = vsel %vm2295, %v2490, 0
      %v2600 = vsel %vm2295, %v2491, 0
      %v2603 = vsel %vm2295, %v2492, 0
      %v2606 = vsel %vm2295, %v2493, 0
      %v2609 = vsel %vm2295, %v2494, 0
      %v2612 = vsel %vm2295, %v2495, 0
      %v2615 = vsel %vm2295, %v2496, 0
      %v2618 = vsel %vm2295, %v2497, 0
      %v2621 = vsel %vm2295, %v2498, 0
      %v2624 = vsel %vm2295, %v2499, 0
      %v2627 = vsel %vm2295, %v2500, 0
      %v2630 = vsel %vm2295, %v2501, 0
      %v2633 = vsel %vm2295, %v2502, 0
      %v2636 = vsel %vm2295, %v2503, 0
      %v2639 = vsel %vm2295, %v2504, 0
      %v2642 = vsel %vm2295, %v2505, 0
      %v2645 = vsel %vm2295, %v2506, 0
      %v2648 = vsel %vm2295, %v2507, 0
      %v2651 = vsel %vm2295, %v2508, 0
      %v2654 = vsel %vm2295, %v2509, 0
      %v2657 = vsel %vm2295, %v2510, 0
      %v2660 = vsel %vm2295, %v2511, 0
      %v2663 = vsel %vm2295, %v2512, 0
      %v2666 = vsel %vm2295, %v2513, 0
      %v2669 = vsel %vm2295, %v2514, 0
      %v2672 = vsel %vm2295, %v2515, 0
      %v2675 = vsel %vm2295, %v2516, 0
      %v2678 = vsel %vm2295, %v2517, 0
      %v2681 = vsel %vm2295, %v2518, 0
      %v2684 = vsel %vm2295, %v2519, 0
      %v2687 = vsel %vm2295, %v2520, 0
      %v2690 = vsel %vm2295, %v2521, 0
      %v2693 = vsel %vm2295, %v2522, 0
      %v2696 = vsel %vm2295, %v2523, 0
      %v2699 = vsel %vm2295, %v2524, 0
      %v2702 = vsel %vm2295, %v2525, 0
      %v2705 = vsel %vm2295, %v2526, 0
      %v2708 = vsel %vm2295, %v2527, 0
      %v2711 = vsel %vm2295, %v2528, 0
      %v2714 = vsel %vm2295, %v2529, 0
      %v2717 = vsel %vm2295, %v2530, 0
      %v2720 = vsel %vm2295, %v2531, 0
      %v2723 = vsel %vm2295, %v2532, 0
      %v2726 = vsel %vm2295, %v2533, 0
      %v2729 = vsel %vm2295, %v2534, 0
      %v2732 = vsel %vm2295, %v2535, 0
      %v2735 = vsel %vm2295, %v2536, 0
      %v2738 = vsel %vm2295, %v2537, 0
      %v2741 = vsel %vm2295, %v2538, 0
      %v2744 = vsel %vm2295, %v2539, 0
      %v2747 = vsel %vm2295, %v2540, 0
      %v2750 = vsel %vm2295, %v2541, 0
      %v2753 = vsel %vm2295, %v2542, 0
      %v2756 = vsel %vm2295, %v2543, 0
      %v2759 = vsel %vm2295, %v2544, 0
      %v2761 = vsel %vm2295, %v2554, 0
      %v2763 = vsel %vm2295, %v2556, 0
      %v2765 = vsel %vm2295, %v2558, 0
      %v2767 = vsel %vm2295, %v2560, 0
      %v2769 = vsel %vm2295, %v2562, 0
      %v2771 = vsel %vm2295, %v2564, 0
      %v2773 = vsel %vm2295, %v2566, 0
      %v2775 = vsel %vm2295, %v2568, 0
      %2777 = vmatprep.subr.mxu0 0.0
      %2778 = vmatpush1.xpose.msra.mxu0 %v2761
      %2779 = vmatprep.subr.mxu0 0.0
      %2780 = vmatpush1.xpose.msra.mxu0 %v2763
      %2781 = vmatprep.subr.mxu0 0.0
      %2782 = vmatpush1.xpose.msra.mxu0 %v2765
      %2783 = vmatprep.subr.mxu0 0.0
      %2784 = vmatpush1.xpose.msra.mxu0 %v2767
      %2785 = vmatprep.subr.mxu0 0.0
      %2786 = vmatpush1.xpose.msra.mxu0 %v2769
      %2787 = vmatprep.subr.mxu0 0.0
      %2788 = vmatpush1.xpose.msra.mxu0 %v2771
      %2789 = vmatprep.subr.mxu0 0.0
      %2790 = vmatpush1.xpose.msra.mxu0 %v2773
      %2791 = vmatprep.subr.mxu0 0.0
      %2792 = vmatpush1.xpose.msra.mxu0 %v2775
      %2793 = vmatprep.subr.mxu0 0.0
      %2794 = vmatpush1.xpose.msra.mxu0 0.0
      %2795 = vmatprep.subr.mxu0 0.0
      %2796 = vmatpush1.xpose.msra.mxu0 0.0
      %2797 = vmatprep.subr.mxu0 0.0
      %2798 = vmatpush1.xpose.msra.mxu0 0.0
      %2799 = vmatprep.subr.mxu0 0.0
      %2800 = vmatpush1.xpose.msra.mxu0 0.0
      %2801 = vmatprep.subr.mxu0 0.0
      %2802 = vmatpush1.xpose.msra.mxu0 0.0
      %2803 = vmatprep.subr.mxu0 0.0
      %2804 = vmatpush1.xpose.msra.mxu0 0.0
      %2805 = vmatprep.subr.mxu0 0.0
      %2806 = vmatpush1.xpose.msra.mxu0 0.0
      %2807 = vmatprep.subr.mxu0 0.0
      %2808 = vmatpush1.xpose.msra.mxu0 0.0
      %2809 = vmatprep.subr.mxu0 0.0
      %2810 = vmatpush1.xpose.msra.mxu0 0.0
      %2811 = vmatprep.subr.mxu0 0.0
      %2812 = vmatpush1.xpose.msra.mxu0 0.0
      %2813 = vmatprep.subr.mxu0 0.0
      %2814 = vmatpush1.xpose.msra.mxu0 0.0
      %2815 = vmatprep.subr.mxu0 0.0
      %2816 = vmatpush1.xpose.msra.mxu0 0.0
      %2817 = vmatprep.subr.mxu0 0.0
      %2818 = vmatpush1.xpose.msra.mxu0 0.0
      %2819 = vmatprep.subr.mxu0 0.0
      %2820 = vmatpush1.xpose.msra.mxu0 0.0
      %2821 = vmatprep.subr.mxu0 0.0
      %2822 = vmatpush1.xpose.msra.mxu0 0.0
      %2823 = vmatprep.subr.mxu0 0.0
      %2824 = vmatpush1.xpose.msra.mxu0 0.0
      %2825 = vmatprep.subr.mxu0 0.0
      %2826 = vmatpush1.xpose.msra.mxu0 0.0
      %2827 = vmatprep.subr.mxu0 0.0
      %2828 = vmatpush1.xpose.msra.mxu0 0.0
      %2829 = vmatprep.subr.mxu0 0.0
      %2830 = vmatpush1.xpose.msra.mxu0 0.0
      %2831 = vmatprep.subr.mxu0 0.0
      %2832 = vmatpush1.xpose.msra.mxu0 0.0
      %2833 = vmatprep.subr.mxu0 0.0
      %2834 = vmatpush1.xpose.msra.mxu0 0.0
      %2835 = vmatprep.subr.mxu0 0.0
      %2836 = vmatpush1.xpose.msra.mxu0 0.0
      %2837 = vmatprep.subr.mxu0 0.0
      %2838 = vmatpush1.xpose.msra.mxu0 0.0
      %2839 = vmatprep.subr.mxu0 0.0
      %2840 = vmatpush1.xpose.msra.mxu0 0.0
      %2841 = vmatprep.mubr.f32.mxu0 0.0
      %2842 = vmatmul.mubr.f32.gmra.mrb[0].mxu0 %v2570
      %v2843 = vpop.f32.mrb[0].mxu0
      %v2844 = vadd.f32 0.0, %v2843
      %v2845 = vpop.f32.mrb[0].mxu0
      %2846 = vmatprep.mubr.f32.mxu0 0.0
      %2847 = vmatmul.mubr.f32.gmra.mrb[0].mxu0 %v2573
      %v2848 = vpop.f32.mrb[0].mxu0
      %v2849 = vadd.f32 0.0, %v2848
      %v2850 = vpop.f32.mrb[0].mxu0
      %2851 = vmatprep.mubr.f32.mxu0 0.0
      %2852 = vmatmul.mubr.f32.gmra.mrb[0].mxu0 %v2576
      %v2853 = vpop.f32.mrb[0].mxu0
      %v2854 = vadd.f32 0.0, %v2853
      %v2855 = vpop.f32.mrb[0].mxu0
      %2856 = vmatprep.mubr.f32.mxu0 0.0
      %2857 = vmatmul.mubr.f32.gmra.mrb[0].mxu0 %v2579
      %v2858 = vpop.f32.mrb[0].mxu0
      %v2859 = vadd.f32 0.0, %v2858
      %v2860 = vpop.f32.mrb[0].mxu0
      %2861 = vmatprep.mubr.f32.mxu0 0.0
      %2862 = vmatmul.mubr.f32.gmra.mrb[0].mxu0 %v2582
      %v2863 = vpop.f32.mrb[0].mxu0
      %v2864 = vadd.f32 0.0, %v2863
      %v2865 = vpop.f32.mrb[0].mxu0
      %2866 = vmatprep.mubr.f32.mxu0 0.0
      %2867 = vmatmul.mubr.f32.gmra.mrb[0].mxu0 %v2585
      %v2868 = vpop.f32.mrb[0].mxu0
      %v2869 = vadd.f32 0.0, %v2868
      %v2870 = vpop.f32.mrb[0].mxu0
      %2871 = vmatprep.mubr.f32.mxu0 0.0
      %2872 = vmatmul.mubr.f32.gmra.mrb[0].mxu0 %v2588
      %v2873 = vpop.f32.mrb[0].mxu0
      %v2874 = vadd.f32 0.0, %v2873
      %v2875 = vpop.f32.mrb[0].mxu0
      %2876 = vmatprep.mubr.f32.mxu0 0.0
      %2877 = vmatmul.mubr.f32.gmra.mrb[0].mxu0 %v2591
      %v2878 = vpop.f32.mrb[0].mxu0
      %v2879 = vadd.f32 0.0, %v2878
      %v2880 = vpop.f32.mrb[0].mxu0
      %2881 = vmatprep.mubr.f32.mxu0 0.0
      %2882 = vmatmul.mubr.f32.gmra.mrb[0].mxu0 %v2594
      %v2883 = vpop.f32.mrb[0].mxu0
      %v2884 = vadd.f32 0.0, %v2883
      %v2885 = vpop.f32.mrb[0].mxu0
      %2886 = vmatprep.mubr.f32.mxu0 0.0
      %2887 = vmatmul.mubr.f32.gmra.mrb[0].mxu0 %v2597
      %v2888 = vpop.f32.mrb[0].mxu0
      %v2889 = vadd.f32 0.0, %v2888
      %v2890 = vpop.f32.mrb[0].mxu0
      %2891 = vmatprep.mubr.f32.mxu0 0.0
      %2892 = vmatmul.mubr.f32.gmra.mrb[0].mxu0 %v2600
      %v2893 = vpop.f32.mrb[0].mxu0
      %v2894 = vadd.f32 0.0, %v2893
      %v2895 = vpop.f32.mrb[0].mxu0
      %2896 = vmatprep.mubr.f32.mxu0 0.0
      %2897 = vmatmul.mubr.f32.gmra.mrb[0].mxu0 %v2603
      %v2898 = vpop.f32.mrb[0].mxu0
      %v2899 = vadd.f32 0.0, %v2898
      %v2900 = vpop.f32.mrb[0].mxu0
      %2901 = vmatprep.mubr.f32.mxu0 0.0
      %2902 = vmatmul.mubr.f32.gmra.mrb[0].mxu0 %v2606
      %v2903 = vpop.f32.mrb[0].mxu0
      %v2904 = vadd.f32 0.0, %v2903
      %v2905 = vpop.f32.mrb[0].mxu0
      %2906 = vmatprep.mubr.f32.mxu0 0.0
      %2907 = vmatmul.mubr.f32.gmra.mrb[0].mxu0 %v2609
      %v2908 = vpop.f32.mrb[0].mxu0
      %v2909 = vadd.f32 0.0, %v2908
      %v2910 = vpop.f32.mrb[0].mxu0
      %2911 = vmatprep.mubr.f32.mxu0 0.0
      %2912 = vmatmul.mubr.f32.gmra.mrb[0].mxu0 %v2612
      %v2913 = vpop.f32.mrb[0].mxu0
      %v2914 = vadd.f32 0.0, %v2913
      %v2915 = vpop.f32.mrb[0].mxu0
      %2916 = vmatprep.mubr.f32.mxu0 0.0
      %2917 = vmatmul.mubr.f32.gmra.mrb[0].mxu0 %v2615
      %v2918 = vpop.f32.mrb[0].mxu0
      %v2919 = vadd.f32 0.0, %v2918
      %v2920 = vpop.f32.mrb[0].mxu0
      %2921 = vmatprep.mubr.f32.mxu0 0.0
      %2922 = vmatmul.mubr.f32.gmra.mrb[0].mxu0 %v2618
      %v2923 = vpop.f32.mrb[0].mxu0
      %v2924 = vadd.f32 0.0, %v2923
      %v2925 = vpop.f32.mrb[0].mxu0
      %2926 = vmatprep.mubr.f32.mxu0 0.0
      %2927 = vmatmul.mubr.f32.gmra.mrb[0].mxu0 %v2621
      %v2928 = vpop.f32.mrb[0].mxu0
      %v2929 = vadd.f32 0.0, %v2928
      %v2930 = vpop.f32.mrb[0].mxu0
      %2931 = vmatprep.mubr.f32.mxu0 0.0
      %2932 = vmatmul.mubr.f32.gmra.mrb[0].mxu0 %v2624
      %v2933 = vpop.f32.mrb[0].mxu0
      %v2934 = vadd.f32 0.0, %v2933
      %v2935 = vpop.f32.mrb[0].mxu0
      %2936 = vmatprep.mubr.f32.mxu0 0.0
      %2937 = vmatmul.mubr.f32.gmra.mrb[0].mxu0 %v2627
      %v2938 = vpop.f32.mrb[0].mxu0
      %v2939 = vadd.f32 0.0, %v2938
      %v2940 = vpop.f32.mrb[0].mxu0
      %2941 = vmatprep.mubr.f32.mxu0 0.0
      %2942 = vmatmul.mubr.f32.gmra.mrb[0].mxu0 %v2630
      %v2943 = vpop.f32.mrb[0].mxu0
      %v2944 = vadd.f32 0.0, %v2943
      %v2945 = vpop.f32.mrb[0].mxu0
      %2946 = vmatprep.mubr.f32.mxu0 0.0
      %2947 = vmatmul.mubr.f32.gmra.mrb[0].mxu0 %v2633
      %v2948 = vpop.f32.mrb[0].mxu0
      %v2949 = vadd.f32 0.0, %v2948
      %v2950 = vpop.f32.mrb[0].mxu0
      %2951 = vmatprep.mubr.f32.mxu0 0.0
      %2952 = vmatmul.mubr.f32.gmra.mrb[0].mxu0 %v2636
      %v2953 = vpop.f32.mrb[0].mxu0
      %v2954 = vadd.f32 0.0, %v2953
      %v2955 = vpop.f32.mrb[0].mxu0
      %2956 = vmatprep.mubr.f32.mxu0 0.0
      %2957 = vmatmul.mubr.f32.gmra.mrb[0].mxu0 %v2639
      %v2958 = vpop.f32.mrb[0].mxu0
      %v2959 = vadd.f32 0.0, %v2958
      %v2960 = vpop.f32.mrb[0].mxu0
      %2961 = vmatprep.mubr.f32.mxu0 0.0
      %2962 = vmatmul.mubr.f32.gmra.mrb[0].mxu0 %v2642
      %v2963 = vpop.f32.mrb[0].mxu0
      %v2964 = vadd.f32 0.0, %v2963
      %v2965 = vpop.f32.mrb[0].mxu0
      %2966 = vmatprep.mubr.f32.mxu0 0.0
      %2967 = vmatmul.mubr.f32.gmra.mrb[0].mxu0 %v2645
      %v2968 = vpop.f32.mrb[0].mxu0
      %v2969 = vadd.f32 0.0, %v2968
      %v2970 = vpop.f32.mrb[0].mxu0
      %2971 = vmatprep.mubr.f32.mxu0 0.0
      %2972 = vmatmul.mubr.f32.gmra.mrb[0].mxu0 %v2648
      %v2973 = vpop.f32.mrb[0].mxu0
      %v2974 = vadd.f32 0.0, %v2973
      %v2975 = vpop.f32.mrb[0].mxu0
      %2976 = vmatprep.mubr.f32.mxu0 0.0
      %2977 = vmatmul.mubr.f32.gmra.mrb[0].mxu0 %v2651
      %v2978 = vpop.f32.mrb[0].mxu0
      %v2979 = vadd.f32 0.0, %v2978
      %v2980 = vpop.f32.mrb[0].mxu0
      %2981 = vmatprep.mubr.f32.mxu0 0.0
      %2982 = vmatmul.mubr.f32.gmra.mrb[0].mxu0 %v2654
      %v2983 = vpop.f32.mrb[0].mxu0
      %v2984 = vadd.f32 0.0, %v2983
      %v2985 = vpop.f32.mrb[0].mxu0
      %2986 = vmatprep.mubr.f32.mxu0 0.0
      %2987 = vmatmul.mubr.f32.gmra.mrb[0].mxu0 %v2657
      %v2988 = vpop.f32.mrb[0].mxu0
      %v2989 = vadd.f32 0.0, %v2988
      %v2990 = vpop.f32.mrb[0].mxu0
      %2991 = vmatprep.mubr.f32.mxu0 0.0
      %2992 = vmatmul.mubr.f32.gmra.mrb[0].mxu0 %v2660
      %v2993 = vpop.f32.mrb[0].mxu0
      %v2994 = vadd.f32 0.0, %v2993
      %v2995 = vpop.f32.mrb[0].mxu0
      %2996 = vmatprep.mubr.f32.mxu0 0.0
      %2997 = vmatmul.mubr.f32.gmra.mrb[0].mxu0 %v2663
      %v2998 = vpop.f32.mrb[0].mxu0
      %v2999 = vadd.f32 0.0, %v2998
      %v3000 = vpop.f32.mrb[0].mxu0
      %3001 = vmatprep.mubr.f32.mxu0 0.0
      %3002 = vmatmul.mubr.f32.gmra.mrb[0].mxu0 %v2666
      %v3003 = vpop.f32.mrb[0].mxu0
      %v3004 = vadd.f32 0.0, %v3003
      %v3005 = vpop.f32.mrb[0].mxu0
      %3006 = vmatprep.mubr.f32.mxu0 0.0
      %3007 = vmatmul.mubr.f32.gmra.mrb[0].mxu0 %v2669
      %v3008 = vpop.f32.mrb[0].mxu0
      %v3009 = vadd.f32 0.0, %v3008
      %v3010 = vpop.f32.mrb[0].mxu0
      %3011 = vmatprep.mubr.f32.mxu0 0.0
      %3012 = vmatmul.mubr.f32.gmra.mrb[0].mxu0 %v2672
      %v3013 = vpop.f32.mrb[0].mxu0
      %v3014 = vadd.f32 0.0, %v3013
      %v3015 = vpop.f32.mrb[0].mxu0
      %3016 = vmatprep.mubr.f32.mxu0 0.0
      %3017 = vmatmul.mubr.f32.gmra.mrb[0].mxu0 %v2675
      %v3018 = vpop.f32.mrb[0].mxu0
      %v3019 = vadd.f32 0.0, %v3018
      %v3020 = vpop.f32.mrb[0].mxu0
      %3021 = vmatprep.mubr.f32.mxu0 0.0
      %3022 = vmatmul.mubr.f32.gmra.mrb[0].mxu0 %v2678
      %v3023 = vpop.f32.mrb[0].mxu0
      %v3024 = vadd.f32 0.0, %v3023
      %v3025 = vpop.f32.mrb[0].mxu0
      %3026 = vmatprep.mubr.f32.mxu0 0.0
      %3027 = vmatmul.mubr.f32.gmra.mrb[0].mxu0 %v2681
      %v3028 = vpop.f32.mrb[0].mxu0
      %v3029 = vadd.f32 0.0, %v3028
      %v3030 = vpop.f32.mrb[0].mxu0
      %3031 = vmatprep.mubr.f32.mxu0 0.0
      %3032 = vmatmul.mubr.f32.gmra.mrb[0].mxu0 %v2684
      %v3033 = vpop.f32.mrb[0].mxu0
      %v3034 = vadd.f32 0.0, %v3033
      %v3035 = vpop.f32.mrb[0].mxu0
      %3036 = vmatprep.mubr.f32.mxu0 0.0
      %3037 = vmatmul.mubr.f32.gmra.mrb[0].mxu0 %v2687
      %v3038 = vpop.f32.mrb[0].mxu0
      %v3039 = vadd.f32 0.0, %v3038
      %v3040 = vpop.f32.mrb[0].mxu0
      %3041 = vmatprep.mubr.f32.mxu0 0.0
      %3042 = vmatmul.mubr.f32.gmra.mrb[0].mxu0 %v2690
      %v3043 = vpop.f32.mrb[0].mxu0
      %v3044 = vadd.f32 0.0, %v3043
      %v3045 = vpop.f32.mrb[0].mxu0
      %3046 = vmatprep.mubr.f32.mxu0 0.0
      %3047 = vmatmul.mubr.f32.gmra.mrb[0].mxu0 %v2693
      %v3048 = vpop.f32.mrb[0].mxu0
      %v3049 = vadd.f32 0.0, %v3048
      %v3050 = vpop.f32.mrb[0].mxu0
      %3051 = vmatprep.mubr.f32.mxu0 0.0
      %3052 = vmatmul.mubr.f32.gmra.mrb[0].mxu0 %v2696
      %v3053 = vpop.f32.mrb[0].mxu0
      %v3054 = vadd.f32 0.0, %v3053
      %v3055 = vpop.f32.mrb[0].mxu0
      %3056 = vmatprep.mubr.f32.mxu0 0.0
      %3057 = vmatmul.mubr.f32.gmra.mrb[0].mxu0 %v2699
      %v3058 = vpop.f32.mrb[0].mxu0
      %v3059 = vadd.f32 0.0, %v3058
      %v3060 = vpop.f32.mrb[0].mxu0
      %3061 = vmatprep.mubr.f32.mxu0 0.0
      %3062 = vmatmul.mubr.f32.gmra.mrb[0].mxu0 %v2702
      %v3063 = vpop.f32.mrb[0].mxu0
      %v3064 = vadd.f32 0.0, %v3063
      %v3065 = vpop.f32.mrb[0].mxu0
      %3066 = vmatprep.mubr.f32.mxu0 0.0
      %3067 = vmatmul.mubr.f32.gmra.mrb[0].mxu0 %v2705
      %v3068 = vpop.f32.mrb[0].mxu0
      %v3069 = vadd.f32 0.0, %v3068
      %v3070 = vpop.f32.mrb[0].mxu0
      %3071 = vmatprep.mubr.f32.mxu0 0.0
      %3072 = vmatmul.mubr.f32.gmra.mrb[0].mxu0 %v2708
      %v3073 = vpop.f32.mrb[0].mxu0
      %v3074 = vadd.f32 0.0, %v3073
      %v3075 = vpop.f32.mrb[0].mxu0
      %3076 = vmatprep.mubr.f32.mxu0 0.0
      %3077 = vmatmul.mubr.f32.gmra.mrb[0].mxu0 %v2711
      %v3078 = vpop.f32.mrb[0].mxu0
      %v3079 = vadd.f32 0.0, %v3078
      %v3080 = vpop.f32.mrb[0].mxu0
      %3081 = vmatprep.mubr.f32.mxu0 0.0
      %3082 = vmatmul.mubr.f32.gmra.mrb[0].mxu0 %v2714
      %v3083 = vpop.f32.mrb[0].mxu0
      %v3084 = vadd.f32 0.0, %v3083
      %v3085 = vpop.f32.mrb[0].mxu0
      %3086 = vmatprep.mubr.f32.mxu0 0.0
      %3087 = vmatmul.mubr.f32.gmra.mrb[0].mxu0 %v2717
      %v3088 = vpop.f32.mrb[0].mxu0
      %v3089 = vadd.f32 0.0, %v3088
      %v3090 = vpop.f32.mrb[0].mxu0
      %3091 = vmatprep.mubr.f32.mxu0 0.0
      %3092 = vmatmul.mubr.f32.gmra.mrb[0].mxu0 %v2720
      %v3093 = vpop.f32.mrb[0].mxu0
      %v3094 = vadd.f32 0.0, %v3093
      %v3095 = vpop.f32.mrb[0].mxu0
      %3096 = vmatprep.mubr.f32.mxu0 0.0
      %3097 = vmatmul.mubr.f32.gmra.mrb[0].mxu0 %v2723
      %v3098 = vpop.f32.mrb[0].mxu0
      %v3099 = vadd.f32 0.0, %v3098
      %v3100 = vpop.f32.mrb[0].mxu0
      %3101 = vmatprep.mubr.f32.mxu0 0.0
      %3102 = vmatmul.mubr.f32.gmra.mrb[0].mxu0 %v2726
      %v3103 = vpop.f32.mrb[0].mxu0
      %v3104 = vadd.f32 0.0, %v3103
      %v3105 = vpop.f32.mrb[0].mxu0
      %3106 = vmatprep.mubr.f32.mxu0 0.0
      %3107 = vmatmul.mubr.f32.gmra.mrb[0].mxu0 %v2729
      %v3108 = vpop.f32.mrb[0].mxu0
      %v3109 = vadd.f32 0.0, %v3108
      %v3110 = vpop.f32.mrb[0].mxu0
      %3111 = vmatprep.mubr.f32.mxu0 0.0
      %3112 = vmatmul.mubr.f32.gmra.mrb[0].mxu0 %v2732
      %v3113 = vpop.f32.mrb[0].mxu0
      %v3114 = vadd.f32 0.0, %v3113
      %v3115 = vpop.f32.mrb[0].mxu0
      %3116 = vmatprep.mubr.f32.mxu0 0.0
      %3117 = vmatmul.mubr.f32.gmra.mrb[0].mxu0 %v2735
      %v3118 = vpop.f32.mrb[0].mxu0
      %v3119 = vadd.f32 0.0, %v3118
      %v3120 = vpop.f32.mrb[0].mxu0
      %3121 = vmatprep.mubr.f32.mxu0 0.0
      %3122 = vmatmul.mubr.f32.gmra.mrb[0].mxu0 %v2738
      %v3123 = vpop.f32.mrb[0].mxu0
      %v3124 = vadd.f32 0.0, %v3123
      %v3125 = vpop.f32.mrb[0].mxu0
      %3126 = vmatprep.mubr.f32.mxu0 0.0
      %3127 = vmatmul.mubr.f32.gmra.mrb[0].mxu0 %v2741
      %v3128 = vpop.f32.mrb[0].mxu0
      %v3129 = vadd.f32 0.0, %v3128
      %v3130 = vpop.f32.mrb[0].mxu0
      %3131 = vmatprep.mubr.f32.mxu0 0.0
      %3132 = vmatmul.mubr.f32.gmra.mrb[0].mxu0 %v2744
      %v3133 = vpop.f32.mrb[0].mxu0
      %v3134 = vadd.f32 0.0, %v3133
      %v3135 = vpop.f32.mrb[0].mxu0
      %3136 = vmatprep.mubr.f32.mxu0 0.0
      %3137 = vmatmul.mubr.f32.gmra.mrb[0].mxu0 %v2747
      %v3138 = vpop.f32.mrb[0].mxu0
      %v3139 = vadd.f32 0.0, %v3138
      %v3140 = vpop.f32.mrb[0].mxu0
      %3141 = vmatprep.mubr.f32.mxu0 0.0
      %3142 = vmatmul.mubr.f32.gmra.mrb[0].mxu0 %v2750
      %v3143 = vpop.f32.mrb[0].mxu0
      %v3144 = vadd.f32 0.0, %v3143
      %v3145 = vpop.f32.mrb[0].mxu0
      %3146 = vmatprep.mubr.f32.mxu0 0.0
      %3147 = vmatmul.mubr.f32.gmra.mrb[0].mxu0 %v2753
      %v3148 = vpop.f32.mrb[0].mxu0
      %v3149 = vadd.f32 0.0, %v3148
      %v3150 = vpop.f32.mrb[0].mxu0
      %3151 = vmatprep.mubr.f32.mxu0 0.0
      %3152 = vmatmul.mubr.f32.gmra.mrb[0].mxu0 %v2756
      %v3153 = vpop.f32.mrb[0].mxu0
      %v3154 = vadd.f32 0.0, %v3153
      %v3155 = vpop.f32.mrb[0].mxu0
      %3156 = vmatprep.mubr.f32.mxu0 0.0
      %3157 = vmatmul.mubr.f32.gmra.mrb[0].mxu0 %v2759
      %v3158 = vpop.f32.mrb[0].mxu0
      %v3159 = vadd.f32 0.0, %v3158
      %v3160 = vpop.f32.mrb[0].mxu0
      %3161 = vdwg.mxu0
      %v3162 = vsel %vm665, %v2844, -inf
      %3163 = vmax.xlane.f32.xlu0 %v3162
      %v3164 = vpop.xlane.xlu0 %3163
      %v3165 = vsel %vm665, %v2849, -inf
      %3166 = vmax.xlane.f32.xlu0 %v3165
      %v3167 = vpop.xlane.xlu0 %3166
      %v3168 = vsel %vm665, %v2854, -inf
      %3169 = vmax.xlane.f32.xlu0 %v3168
      %v3170 = vpop.xlane.xlu0 %3169
      %v3171 = vsel %vm665, %v2859, -inf
      %3172 = vmax.xlane.f32.xlu0 %v3171
      %v3173 = vpop.xlane.xlu0 %3172
      %v3174 = vsel %vm665, %v2864, -inf
      %3175 = vmax.xlane.f32.xlu0 %v3174
      %v3176 = vpop.xlane.xlu0 %3175
      %v3177 = vsel %vm665, %v2869, -inf
      %3178 = vmax.xlane.f32.xlu0 %v3177
      %v3179 = vpop.xlane.xlu0 %3178
      %v3180 = vsel %vm665, %v2874, -inf
      %3181 = vmax.xlane.f32.xlu0 %v3180
      %v3182 = vpop.xlane.xlu0 %3181
      %v3183 = vsel %vm665, %v2879, -inf
      %3184 = vmax.xlane.f32.xlu0 %v3183
      %v3185 = vpop.xlane.xlu0 %3184
      %v3186 = vsel %vm665, %v2884, -inf
      %3187 = vmax.xlane.f32.xlu0 %v3186
      %v3188 = vpop.xlane.xlu0 %3187
      %v3189 = vsel %vm665, %v2889, -inf
      %3190 = vmax.xlane.f32.xlu0 %v3189
      %v3191 = vpop.xlane.xlu0 %3190
      %v3192 = vsel %vm665, %v2894, -inf
      %3193 = vmax.xlane.f32.xlu0 %v3192
      %v3194 = vpop.xlane.xlu0 %3193
      %v3195 = vsel %vm665, %v2899, -inf
      %3196 = vmax.xlane.f32.xlu0 %v3195
      %v3197 = vpop.xlane.xlu0 %3196
      %v3198 = vsel %vm665, %v2904, -inf
      %3199 = vmax.xlane.f32.xlu0 %v3198
      %v3200 = vpop.xlane.xlu0 %3199
      %v3201 = vsel %vm665, %v2909, -inf
      %3202 = vmax.xlane.f32.xlu0 %v3201
      %v3203 = vpop.xlane.xlu0 %3202
      %v3204 = vsel %vm665, %v2914, -inf
      %3205 = vmax.xlane.f32.xlu0 %v3204
      %v3206 = vpop.xlane.xlu0 %3205
      %v3207 = vsel %vm665, %v2919, -inf
      %3208 = vmax.xlane.f32.xlu0 %v3207
      %v3209 = vpop.xlane.xlu0 %3208
      %v3210 = vsel %vm665, %v2924, -inf
      %3211 = vmax.xlane.f32.xlu0 %v3210
      %v3212 = vpop.xlane.xlu0 %3211
      %v3213 = vsel %vm665, %v2929, -inf
      %3214 = vmax.xlane.f32.xlu0 %v3213
      %v3215 = vpop.xlane.xlu0 %3214
      %v3216 = vsel %vm665, %v2934, -inf
      %3217 = vmax.xlane.f32.xlu0 %v3216
      %v3218 = vpop.xlane.xlu0 %3217
      %v3219 = vsel %vm665, %v2939, -inf
      %3220 = vmax.xlane.f32.xlu0 %v3219
      %v3221 = vpop.xlane.xlu0 %3220
      %v3222 = vsel %vm665, %v2944, -inf
      %3223 = vmax.xlane.f32.xlu0 %v3222
      %v3224 = vpop.xlane.xlu0 %3223
      %v3225 = vsel %vm665, %v2949, -inf
      %3226 = vmax.xlane.f32.xlu0 %v3225
      %v3227 = vpop.xlane.xlu0 %3226
      %v3228 = vsel %vm665, %v2954, -inf
      %3229 = vmax.xlane.f32.xlu0 %v3228
      %v3230 = vpop.xlane.xlu0 %3229
      %v3231 = vsel %vm665, %v2959, -inf
      %3232 = vmax.xlane.f32.xlu0 %v3231
      %v3233 = vpop.xlane.xlu0 %3232
      %v3234 = vsel %vm665, %v2964, -inf
      %3235 = vmax.xlane.f32.xlu0 %v3234
      %v3236 = vpop.xlane.xlu0 %3235
      %v3237 = vsel %vm665, %v2969, -inf
      %3238 = vmax.xlane.f32.xlu0 %v3237
      %v3239 = vpop.xlane.xlu0 %3238
      %v3240 = vsel %vm665, %v2974, -inf
      %3241 = vmax.xlane.f32.xlu0 %v3240
      %v3242 = vpop.xlane.xlu0 %3241
      %v3243 = vsel %vm665, %v2979, -inf
      %3244 = vmax.xlane.f32.xlu0 %v3243
      %v3245 = vpop.xlane.xlu0 %3244
      %v3246 = vsel %vm665, %v2984, -inf
      %3247 = vmax.xlane.f32.xlu0 %v3246
      %v3248 = vpop.xlane.xlu0 %3247
      %v3249 = vsel %vm665, %v2989, -inf
      %3250 = vmax.xlane.f32.xlu0 %v3249
      %v3251 = vpop.xlane.xlu0 %3250
      %v3252 = vsel %vm665, %v2994, -inf
      %3253 = vmax.xlane.f32.xlu0 %v3252
      %v3254 = vpop.xlane.xlu0 %3253
      %v3255 = vsel %vm665, %v2999, -inf
      %3256 = vmax.xlane.f32.xlu0 %v3255
      %v3257 = vpop.xlane.xlu0 %3256
      %v3258 = vsel %vm665, %v3004, -inf
      %3259 = vmax.xlane.f32.xlu0 %v3258
      %v3260 = vpop.xlane.xlu0 %3259
      %v3261 = vsel %vm665, %v3009, -inf
      %3262 = vmax.xlane.f32.xlu0 %v3261
      %v3263 = vpop.xlane.xlu0 %3262
      %v3264 = vsel %vm665, %v3014, -inf
      %3265 = vmax.xlane.f32.xlu0 %v3264
      %v3266 = vpop.xlane.xlu0 %3265
      %v3267 = vsel %vm665, %v3019, -inf
      %3268 = vmax.xlane.f32.xlu0 %v3267
      %v3269 = vpop.xlane.xlu0 %3268
      %v3270 = vsel %vm665, %v3024, -inf
      %3271 = vmax.xlane.f32.xlu0 %v3270
      %v3272 = vpop.xlane.xlu0 %3271
      %v3273 = vsel %vm665, %v3029, -inf
      %3274 = vmax.xlane.f32.xlu0 %v3273
      %v3275 = vpop.xlane.xlu0 %3274
      %v3276 = vsel %vm665, %v3034, -inf
      %3277 = vmax.xlane.f32.xlu0 %v3276
      %v3278 = vpop.xlane.xlu0 %3277
      %v3279 = vsel %vm665, %v3039, -inf
      %3280 = vmax.xlane.f32.xlu0 %v3279
      %v3281 = vpop.xlane.xlu0 %3280
      %v3282 = vsel %vm665, %v3044, -inf
      %3283 = vmax.xlane.f32.xlu0 %v3282
      %v3284 = vpop.xlane.xlu0 %3283
      %v3285 = vsel %vm665, %v3049, -inf
      %3286 = vmax.xlane.f32.xlu0 %v3285
      %v3287 = vpop.xlane.xlu0 %3286
      %v3288 = vsel %vm665, %v3054, -inf
      %3289 = vmax.xlane.f32.xlu0 %v3288
      %v3290 = vpop.xlane.xlu0 %3289
      %v3291 = vsel %vm665, %v3059, -inf
      %3292 = vmax.xlane.f32.xlu0 %v3291
      %v3293 = vpop.xlane.xlu0 %3292
      %v3294 = vsel %vm665, %v3064, -inf
      %3295 = vmax.xlane.f32.xlu0 %v3294
      %v3296 = vpop.xlane.xlu0 %3295
      %v3297 = vsel %vm665, %v3069, -inf
      %3298 = vmax.xlane.f32.xlu0 %v3297
      %v3299 = vpop.xlane.xlu0 %3298
      %v3300 = vsel %vm665, %v3074, -inf
      %3301 = vmax.xlane.f32.xlu0 %v3300
      %v3302 = vpop.xlane.xlu0 %3301
      %v3303 = vsel %vm665, %v3079, -inf
      %3304 = vmax.xlane.f32.xlu0 %v3303
      %v3305 = vpop.xlane.xlu0 %3304
      %v3306 = vsel %vm665, %v3084, -inf
      %3307 = vmax.xlane.f32.xlu0 %v3306
      %v3308 = vpop.xlane.xlu0 %3307
      %v3309 = vsel %vm665, %v3089, -inf
      %3310 = vmax.xlane.f32.xlu0 %v3309
      %v3311 = vpop.xlane.xlu0 %3310
      %v3312 = vsel %vm665, %v3094, -inf
      %3313 = vmax.xlane.f32.xlu0 %v3312
      %v3314 = vpop.xlane.xlu0 %3313
      %v3315 = vsel %vm665, %v3099, -inf
      %3316 = vmax.xlane.f32.xlu0 %v3315
      %v3317 = vpop.xlane.xlu0 %3316
      %v3318 = vsel %vm665, %v3104, -inf
      %3319 = vmax.xlane.f32.xlu0 %v3318
      %v3320 = vpop.xlane.xlu0 %3319
      %v3321 = vsel %vm665, %v3109, -inf
      %3322 = vmax.xlane.f32.xlu0 %v3321
      %v3323 = vpop.xlane.xlu0 %3322
      %v3324 = vsel %vm665, %v3114, -inf
      %3325 = vmax.xlane.f32.xlu0 %v3324
      %v3326 = vpop.xlane.xlu0 %3325
      %v3327 = vsel %vm665, %v3119, -inf
      %3328 = vmax.xlane.f32.xlu0 %v3327
      %v3329 = vpop.xlane.xlu0 %3328
      %v3330 = vsel %vm665, %v3124, -inf
      %3331 = vmax.xlane.f32.xlu0 %v3330
      %v3332 = vpop.xlane.xlu0 %3331
      %v3333 = vsel %vm665, %v3129, -inf
      %3334 = vmax.xlane.f32.xlu0 %v3333
      %v3335 = vpop.xlane.xlu0 %3334
      %v3336 = vsel %vm665, %v3134, -inf
      %3337 = vmax.xlane.f32.xlu0 %v3336
      %v3338 = vpop.xlane.xlu0 %3337
      %v3339 = vsel %vm665, %v3139, -inf
      %3340 = vmax.xlane.f32.xlu0 %v3339
      %v3341 = vpop.xlane.xlu0 %3340
      %v3342 = vsel %vm665, %v3144, -inf
      %3343 = vmax.xlane.f32.xlu0 %v3342
      %v3344 = vpop.xlane.xlu0 %3343
      %v3345 = vsel %vm665, %v3149, -inf
      %3346 = vmax.xlane.f32.xlu0 %v3345
      %v3347 = vpop.xlane.xlu0 %3346
      %v3348 = vsel %vm665, %v3154, -inf
      %3349 = vmax.xlane.f32.xlu0 %v3348
      %v3350 = vpop.xlane.xlu0 %3349
      %v3351 = vsel %vm665, %v3159, -inf
      %3352 = vmax.xlane.f32.xlu0 %v3351
      %v3353 = vpop.xlane.xlu0 %3352
      %v3354 = vsub.f32 %v2844, %v3164
      %v3355 = vsub.f32 %v2849, %v3167
      %v3356 = vsub.f32 %v2854, %v3170
      %v3357 = vsub.f32 %v2859, %v3173
      %v3358 = vsub.f32 %v2864, %v3176
      %v3359 = vsub.f32 %v2869, %v3179
      %v3360 = vsub.f32 %v2874, %v3182
      %v3361 = vsub.f32 %v2879, %v3185
      %v3362 = vsub.f32 %v2884, %v3188
      %v3363 = vsub.f32 %v2889, %v3191
      %v3364 = vsub.f32 %v2894, %v3194
      %v3365 = vsub.f32 %v2899, %v3197
      %v3366 = vsub.f32 %v2904, %v3200
      %v3367 = vsub.f32 %v2909, %v3203
      %v3368 = vsub.f32 %v2914, %v3206
      %v3369 = vsub.f32 %v2919, %v3209
      %v3370 = vsub.f32 %v2924, %v3212
      %v3371 = vsub.f32 %v2929, %v3215
      %v3372 = vsub.f32 %v2934, %v3218
      %v3373 = vsub.f32 %v2939, %v3221
      %v3374 = vsub.f32 %v2944, %v3224
      %v3375 = vsub.f32 %v2949, %v3227
      %v3376 = vsub.f32 %v2954, %v3230
      %v3377 = vsub.f32 %v2959, %v3233
      %v3378 = vsub.f32 %v2964, %v3236
      %v3379 = vsub.f32 %v2969, %v3239
      %v3380 = vsub.f32 %v2974, %v3242
      %v3381 = vsub.f32 %v2979, %v3245
      %v3382 = vsub.f32 %v2984, %v3248
      %v3383 = vsub.f32 %v2989, %v3251
      %v3384 = vsub.f32 %v2994, %v3254
      %v3385 = vsub.f32 %v2999, %v3257
      %v3386 = vsub.f32 %v3004, %v3260
      %v3387 = vsub.f32 %v3009, %v3263
      %v3388 = vsub.f32 %v3014, %v3266
      %v3389 = vsub.f32 %v3019, %v3269
      %v3390 = vsub.f32 %v3024, %v3272
      %v3391 = vsub.f32 %v3029, %v3275
      %v3392 = vsub.f32 %v3034, %v3278
      %v3393 = vsub.f32 %v3039, %v3281
      %v3394 = vsub.f32 %v3044, %v3284
      %v3395 = vsub.f32 %v3049, %v3287
      %v3396 = vsub.f32 %v3054, %v3290
      %v3397 = vsub.f32 %v3059, %v3293
      %v3398 = vsub.f32 %v3064, %v3296
      %v3399 = vsub.f32 %v3069, %v3299
      %v3400 = vsub.f32 %v3074, %v3302
      %v3401 = vsub.f32 %v3079, %v3305
      %v3402 = vsub.f32 %v3084, %v3308
      %v3403 = vsub.f32 %v3089, %v3311
      %v3404 = vsub.f32 %v3094, %v3314
      %v3405 = vsub.f32 %v3099, %v3317
      %v3406 = vsub.f32 %v3104, %v3320
      %v3407 = vsub.f32 %v3109, %v3323
      %v3408 = vsub.f32 %v3114, %v3326
      %v3409 = vsub.f32 %v3119, %v3329
      %v3410 = vsub.f32 %v3124, %v3332
      %v3411 = vsub.f32 %v3129, %v3335
      %v3412 = vsub.f32 %v3134, %v3338
      %v3413 = vsub.f32 %v3139, %v3341
      %v3414 = vsub.f32 %v3144, %v3344
      %v3415 = vsub.f32 %v3149, %v3347
      %v3416 = vsub.f32 %v3154, %v3350
      %v3417 = vsub.f32 %v3159, %v3353
      %v3418 = vmul.f32 %v3354, 1.442695
      %v3419 = vpow.pop %v3418
      %v3420 = vmul.f32 %v3355, 1.442695
      %v3421 = vpow.pop %v3420
      %v3422 = vmul.f32 %v3356, 1.442695
      %v3423 = vpow.pop %v3422
      %v3424 = vmul.f32 %v3357, 1.442695
      %v3425 = vpow.pop %v3424
      %v3426 = vmul.f32 %v3358, 1.442695
      %v3427 = vpow.pop %v3426
      %v3428 = vmul.f32 %v3359, 1.442695
      %v3429 = vpow.pop %v3428
      %v3430 = vmul.f32 %v3360, 1.442695
      %v3431 = vpow.pop %v3430
      %v3432 = vmul.f32 %v3361, 1.442695
      %v3433 = vpow.pop %v3432
      %v3434 = vmul.f32 %v3362, 1.442695
      %v3435 = vpow.pop %v3434
      %v3436 = vmul.f32 %v3363, 1.442695
      %v3437 = vpow.pop %v3436
      %v3438 = vmul.f32 %v3364, 1.442695
      %v3439 = vpow.pop %v3438
      %v3440 = vmul.f32 %v3365, 1.442695
      %v3441 = vpow.pop %v3440
      %v3442 = vmul.f32 %v3366, 1.442695
      %v3443 = vpow.pop %v3442
      %v3444 = vmul.f32 %v3367, 1.442695
      %v3445 = vpow.pop %v3444
      %v3446 = vmul.f32 %v3368, 1.442695
      %v3447 = vpow.pop %v3446
      %v3448 = vmul.f32 %v3369, 1.442695
      %v3449 = vpow.pop %v3448
      %v3450 = vmul.f32 %v3370, 1.442695
      %v3451 = vpow.pop %v3450
      %v3452 = vmul.f32 %v3371, 1.442695
      %v3453 = vpow.pop %v3452
      %v3454 = vmul.f32 %v3372, 1.442695
      %v3455 = vpow.pop %v3454
      %v3456 = vmul.f32 %v3373, 1.442695
      %v3457 = vpow.pop %v3456
      %v3458 = vmul.f32 %v3374, 1.442695
      %v3459 = vpow.pop %v3458
      %v3460 = vmul.f32 %v3375, 1.442695
      %v3461 = vpow.pop %v3460
      %v3462 = vmul.f32 %v3376, 1.442695
      %v3463 = vpow.pop %v3462
      %v3464 = vmul.f32 %v3377, 1.442695
      %v3465 = vpow.pop %v3464
      %v3466 = vmul.f32 %v3378, 1.442695
      %v3467 = vpow.pop %v3466
      %v3468 = vmul.f32 %v3379, 1.442695
      %v3469 = vpow.pop %v3468
      %v3470 = vmul.f32 %v3380, 1.442695
      %v3471 = vpow.pop %v3470
      %v3472 = vmul.f32 %v3381, 1.442695
      %v3473 = vpow.pop %v3472
      %v3474 = vmul.f32 %v3382, 1.442695
      %v3475 = vpow.pop %v3474
      %v3476 = vmul.f32 %v3383, 1.442695
      %v3477 = vpow.pop %v3476
      %v3478 = vmul.f32 %v3384, 1.442695
      %v3479 = vpow.pop %v3478
      %v3480 = vmul.f32 %v3385, 1.442695
      %v3481 = vpow.pop %v3480
      %v3482 = vmul.f32 %v3386, 1.442695
      %v3483 = vpow.pop %v3482
      %v3484 = vmul.f32 %v3387, 1.442695
      %v3485 = vpow.pop %v3484
      %v3486 = vmul.f32 %v3388, 1.442695
      %v3487 = vpow.pop %v3486
      %v3488 = vmul.f32 %v3389, 1.442695
      %v3489 = vpow.pop %v3488
      %v3490 = vmul.f32 %v3390, 1.442695
      %v3491 = vpow.pop %v3490
      %v3492 = vmul.f32 %v3391, 1.442695
      %v3493 = vpow.pop %v3492
      %v3494 = vmul.f32 %v3392, 1.442695
      %v3495 = vpow.pop %v3494
      %v3496 = vmul.f32 %v3393, 1.442695
      %v3497 = vpow.pop %v3496
      %v3498 = vmul.f32 %v3394, 1.442695
      %v3499 = vpow.pop %v3498
      %v3500 = vmul.f32 %v3395, 1.442695
      %v3501 = vpow.pop %v3500
      %v3502 = vmul.f32 %v3396, 1.442695
      %v3503 = vpow.pop %v3502
      %v3504 = vmul.f32 %v3397, 1.442695
      %v3505 = vpow.pop %v3504
      %v3506 = vmul.f32 %v3398, 1.442695
      %v3507 = vpow.pop %v3506
      %v3508 = vmul.f32 %v3399, 1.442695
      %v3509 = vpow.pop %v3508
      %v3510 = vmul.f32 %v3400, 1.442695
      %v3511 = vpow.pop %v3510
      %v3512 = vmul.f32 %v3401, 1.442695
      %v3513 = vpow.pop %v3512
      %v3514 = vmul.f32 %v3402, 1.442695
      %v3515 = vpow.pop %v3514
      %v3516 = vmul.f32 %v3403, 1.442695
      %v3517 = vpow.pop %v3516
      %v3518 = vmul.f32 %v3404, 1.442695
      %v3519 = vpow.pop %v3518
      %v3520 = vmul.f32 %v3405, 1.442695
      %v3521 = vpow.pop %v3520
      %v3522 = vmul.f32 %v3406, 1.442695
      %v3523 = vpow.pop %v3522
      %v3524 = vmul.f32 %v3407, 1.442695
      %v3525 = vpow.pop %v3524
      %v3526 = vmul.f32 %v3408, 1.442695
      %v3527 = vpow.pop %v3526
      %v3528 = vmul.f32 %v3409, 1.442695
      %v3529 = vpow.pop %v3528
      %v3530 = vmul.f32 %v3410, 1.442695
      %v3531 = vpow.pop %v3530
      %v3532 = vmul.f32 %v3411, 1.442695
      %v3533 = vpow.pop %v3532
      %v3534 = vmul.f32 %v3412, 1.442695
      %v3535 = vpow.pop %v3534
      %v3536 = vmul.f32 %v3413, 1.442695
      %v3537 = vpow.pop %v3536
      %v3538 = vmul.f32 %v3414, 1.442695
      %v3539 = vpow.pop %v3538
      %v3540 = vmul.f32 %v3415, 1.442695
      %v3541 = vpow.pop %v3540
      %v3542 = vmul.f32 %v3416, 1.442695
      %v3543 = vpow.pop %v3542
      %v3544 = vmul.f32 %v3417, 1.442695
      %v3545 = vpow.pop %v3544
      %v3546 = vsel %vm665, %v3419, 0.0
      %3547 = vadd.xlane.f32.xlu0 %v3546
      %v3548 = vpop.xlane.xlu0 %3547
      %v3549 = vsel %vm665, %v3421, 0.0
      %3550 = vadd.xlane.f32.xlu0 %v3549
      %v3551 = vpop.xlane.xlu0 %3550
      %v3552 = vsel %vm665, %v3423, 0.0
      %3553 = vadd.xlane.f32.xlu0 %v3552
      %v3554 = vpop.xlane.xlu0 %3553
      %v3555 = vsel %vm665, %v3425, 0.0
      %3556 = vadd.xlane.f32.xlu0 %v3555
      %v3557 = vpop.xlane.xlu0 %3556
      %v3558 = vsel %vm665, %v3427, 0.0
      %3559 = vadd.xlane.f32.xlu0 %v3558
      %v3560 = vpop.xlane.xlu0 %3559
      %v3561 = vsel %vm665, %v3429, 0.0
      %3562 = vadd.xlane.f32.xlu0 %v3561
      %v3563 = vpop.xlane.xlu0 %3562
      %v3564 = vsel %vm665, %v3431, 0.0
      %3565 = vadd.xlane.f32.xlu0 %v3564
      %v3566 = vpop.xlane.xlu0 %3565
      %v3567 = vsel %vm665, %v3433, 0.0
      %3568 = vadd.xlane.f32.xlu0 %v3567
      %v3569 = vpop.xlane.xlu0 %3568
      %v3570 = vsel %vm665, %v3435, 0.0
      %3571 = vadd.xlane.f32.xlu0 %v3570
      %v3572 = vpop.xlane.xlu0 %3571
      %v3573 = vsel %vm665, %v3437, 0.0
      %3574 = vadd.xlane.f32.xlu0 %v3573
      %v3575 = vpop.xlane.xlu0 %3574
      %v3576 = vsel %vm665, %v3439, 0.0
      %3577 = vadd.xlane.f32.xlu0 %v3576
      %v3578 = vpop.xlane.xlu0 %3577
      %v3579 = vsel %vm665, %v3441, 0.0
      %3580 = vadd.xlane.f32.xlu0 %v3579
      %v3581 = vpop.xlane.xlu0 %3580
      %v3582 = vsel %vm665, %v3443, 0.0
      %3583 = vadd.xlane.f32.xlu0 %v3582
      %v3584 = vpop.xlane.xlu0 %3583
      %v3585 = vsel %vm665, %v3445, 0.0
      %3586 = vadd.xlane.f32.xlu0 %v3585
      %v3587 = vpop.xlane.xlu0 %3586
      %v3588 = vsel %vm665, %v3447, 0.0
      %3589 = vadd.xlane.f32.xlu0 %v3588
      %v3590 = vpop.xlane.xlu0 %3589
      %v3591 = vsel %vm665, %v3449, 0.0
      %3592 = vadd.xlane.f32.xlu0 %v3591
      %v3593 = vpop.xlane.xlu0 %3592
      %v3594 = vsel %vm665, %v3451, 0.0
      %3595 = vadd.xlane.f32.xlu0 %v3594
      %v3596 = vpop.xlane.xlu0 %3595
      %v3597 = vsel %vm665, %v3453, 0.0
      %3598 = vadd.xlane.f32.xlu0 %v3597
      %v3599 = vpop.xlane.xlu0 %3598
      %v3600 = vsel %vm665, %v3455, 0.0
      %3601 = vadd.xlane.f32.xlu0 %v3600
      %v3602 = vpop.xlane.xlu0 %3601
      %v3603 = vsel %vm665, %v3457, 0.0
      %3604 = vadd.xlane.f32.xlu0 %v3603
      %v3605 = vpop.xlane.xlu0 %3604
      %v3606 = vsel %vm665, %v3459, 0.0
      %3607 = vadd.xlane.f32.xlu0 %v3606
      %v3608 = vpop.xlane.xlu0 %3607
      %v3609 = vsel %vm665, %v3461, 0.0
      %3610 = vadd.xlane.f32.xlu0 %v3609
      %v3611 = vpop.xlane.xlu0 %3610
      %v3612 = vsel %vm665, %v3463, 0.0
      %3613 = vadd.xlane.f32.xlu0 %v3612
      %v3614 = vpop.xlane.xlu0 %3613
      %v3615 = vsel %vm665, %v3465, 0.0
      %3616 = vadd.xlane.f32.xlu0 %v3615
      %v3617 = vpop.xlane.xlu0 %3616
      %v3618 = vsel %vm665, %v3467, 0.0
      %3619 = vadd.xlane.f32.xlu0 %v3618
      %v3620 = vpop.xlane.xlu0 %3619
      %v3621 = vsel %vm665, %v3469, 0.0
      %3622 = vadd.xlane.f32.xlu0 %v3621
      %v3623 = vpop.xlane.xlu0 %3622
      %v3624 = vsel %vm665, %v3471, 0.0
      %3625 = vadd.xlane.f32.xlu0 %v3624
      %v3626 = vpop.xlane.xlu0 %3625
      %v3627 = vsel %vm665, %v3473, 0.0
      %3628 = vadd.xlane.f32.xlu0 %v3627
      %v3629 = vpop.xlane.xlu0 %3628
      %v3630 = vsel %vm665, %v3475, 0.0
      %3631 = vadd.xlane.f32.xlu0 %v3630
      %v3632 = vpop.xlane.xlu0 %3631
      %v3633 = vsel %vm665, %v3477, 0.0
      %3634 = vadd.xlane.f32.xlu0 %v3633
      %v3635 = vpop.xlane.xlu0 %3634
      %v3636 = vsel %vm665, %v3479, 0.0
      %3637 = vadd.xlane.f32.xlu0 %v3636
      %v3638 = vpop.xlane.xlu0 %3637
      %v3639 = vsel %vm665, %v3481, 0.0
      %3640 = vadd.xlane.f32.xlu0 %v3639
      %v3641 = vpop.xlane.xlu0 %3640
      %v3642 = vsel %vm665, %v3483, 0.0
      %3643 = vadd.xlane.f32.xlu0 %v3642
      %v3644 = vpop.xlane.xlu0 %3643
      %v3645 = vsel %vm665, %v3485, 0.0
      %3646 = vadd.xlane.f32.xlu0 %v3645
      %v3647 = vpop.xlane.xlu0 %3646
      %v3648 = vsel %vm665, %v3487, 0.0
      %3649 = vadd.xlane.f32.xlu0 %v3648
      %v3650 = vpop.xlane.xlu0 %3649
      %v3651 = vsel %vm665, %v3489, 0.0
      %3652 = vadd.xlane.f32.xlu0 %v3651
      %v3653 = vpop.xlane.xlu0 %3652
      %v3654 = vsel %vm665, %v3491, 0.0
      %3655 = vadd.xlane.f32.xlu0 %v3654
      %v3656 = vpop.xlane.xlu0 %3655
      %v3657 = vsel %vm665, %v3493, 0.0
      %3658 = vadd.xlane.f32.xlu0 %v3657
      %v3659 = vpop.xlane.xlu0 %3658
      %v3660 = vsel %vm665, %v3495, 0.0
      %3661 = vadd.xlane.f32.xlu0 %v3660
      %v3662 = vpop.xlane.xlu0 %3661
      %v3663 = vsel %vm665, %v3497, 0.0
      %3664 = vadd.xlane.f32.xlu0 %v3663
      %v3665 = vpop.xlane.xlu0 %3664
      %v3666 = vsel %vm665, %v3499, 0.0
      %3667 = vadd.xlane.f32.xlu0 %v3666
      %v3668 = vpop.xlane.xlu0 %3667
      %v3669 = vsel %vm665, %v3501, 0.0
      %3670 = vadd.xlane.f32.xlu0 %v3669
      %v3671 = vpop.xlane.xlu0 %3670
      %v3672 = vsel %vm665, %v3503, 0.0
      %3673 = vadd.xlane.f32.xlu0 %v3672
      %v3674 = vpop.xlane.xlu0 %3673
      %v3675 = vsel %vm665, %v3505, 0.0
      %3676 = vadd.xlane.f32.xlu0 %v3675
      %v3677 = vpop.xlane.xlu0 %3676
      %v3678 = vsel %vm665, %v3507, 0.0
      %3679 = vadd.xlane.f32.xlu0 %v3678
      %v3680 = vpop.xlane.xlu0 %3679
      %v3681 = vsel %vm665, %v3509, 0.0
      %3682 = vadd.xlane.f32.xlu0 %v3681
      %v3683 = vpop.xlane.xlu0 %3682
      %v3684 = vsel %vm665, %v3511, 0.0
      %3685 = vadd.xlane.f32.xlu0 %v3684
      %v3686 = vpop.xlane.xlu0 %3685
      %v3687 = vsel %vm665, %v3513, 0.0
      %3688 = vadd.xlane.f32.xlu0 %v3687
      %v3689 = vpop.xlane.xlu0 %3688
      %v3690 = vsel %vm665, %v3515, 0.0
      %3691 = vadd.xlane.f32.xlu0 %v3690
      %v3692 = vpop.xlane.xlu0 %3691
      %v3693 = vsel %vm665, %v3517, 0.0
      %3694 = vadd.xlane.f32.xlu0 %v3693
      %v3695 = vpop.xlane.xlu0 %3694
      %v3696 = vsel %vm665, %v3519, 0.0
      %3697 = vadd.xlane.f32.xlu0 %v3696
      %v3698 = vpop.xlane.xlu0 %3697
      %v3699 = vsel %vm665, %v3521, 0.0
      %3700 = vadd.xlane.f32.xlu0 %v3699
      %v3701 = vpop.xlane.xlu0 %3700
      %v3702 = vsel %vm665, %v3523, 0.0
      %3703 = vadd.xlane.f32.xlu0 %v3702
      %v3704 = vpop.xlane.xlu0 %3703
      %v3705 = vsel %vm665, %v3525, 0.0
      %3706 = vadd.xlane.f32.xlu0 %v3705
      %v3707 = vpop.xlane.xlu0 %3706
      %v3708 = vsel %vm665, %v3527, 0.0
      %3709 = vadd.xlane.f32.xlu0 %v3708
      %v3710 = vpop.xlane.xlu0 %3709
      %v3711 = vsel %vm665, %v3529, 0.0
      %3712 = vadd.xlane.f32.xlu0 %v3711
      %v3713 = vpop.xlane.xlu0 %3712
      %v3714 = vsel %vm665, %v3531, 0.0
      %3715 = vadd.xlane.f32.xlu0 %v3714
      %v3716 = vpop.xlane.xlu0 %3715
      %v3717 = vsel %vm665, %v3533, 0.0
      %3718 = vadd.xlane.f32.xlu0 %v3717
      %v3719 = vpop.xlane.xlu0 %3718
      %v3720 = vsel %vm665, %v3535, 0.0
      %3721 = vadd.xlane.f32.xlu0 %v3720
      %v3722 = vpop.xlane.xlu0 %3721
      %v3723 = vsel %vm665, %v3537, 0.0
      %3724 = vadd.xlane.f32.xlu0 %v3723
      %v3725 = vpop.xlane.xlu0 %3724
      %v3726 = vsel %vm665, %v3539, 0.0
      %3727 = vadd.xlane.f32.xlu0 %v3726
      %v3728 = vpop.xlane.xlu0 %3727
      %v3729 = vsel %vm665, %v3541, 0.0
      %3730 = vadd.xlane.f32.xlu0 %v3729
      %v3731 = vpop.xlane.xlu0 %3730
      %v3732 = vsel %vm665, %v3543, 0.0
      %3733 = vadd.xlane.f32.xlu0 %v3732
      %v3734 = vpop.xlane.xlu0 %3733
      %v3735 = vsel %vm665, %v3545, 0.0
      %3736 = vadd.xlane.f32.xlu0 %v3735
      %v3737 = vpop.xlane.xlu0 %3736
      %v3738 = vrcp.pop %v3548
      %v3739 = vrcp.pop %v3551
      %v3740 = vrcp.pop %v3554
      %v3741 = vrcp.pop %v3557
      %v3742 = vrcp.pop %v3560
      %v3743 = vrcp.pop %v3563
      %v3744 = vrcp.pop %v3566
      %v3745 = vrcp.pop %v3569
      %v3746 = vrcp.pop %v3572
      %v3747 = vrcp.pop %v3575
      %v3748 = vrcp.pop %v3578
      %v3749 = vrcp.pop %v3581
      %v3750 = vrcp.pop %v3584
      %v3751 = vrcp.pop %v3587
      %v3752 = vrcp.pop %v3590
      %v3753 = vrcp.pop %v3593
      %v3754 = vrcp.pop %v3596
      %v3755 = vrcp.pop %v3599
      %v3756 = vrcp.pop %v3602
      %v3757 = vrcp.pop %v3605
      %v3758 = vrcp.pop %v3608
      %v3759 = vrcp.pop %v3611
      %v3760 = vrcp.pop %v3614
      %v3761 = vrcp.pop %v3617
      %v3762 = vrcp.pop %v3620
      %v3763 = vrcp.pop %v3623
      %v3764 = vrcp.pop %v3626
      %v3765 = vrcp.pop %v3629
      %v3766 = vrcp.pop %v3632
      %v3767 = vrcp.pop %v3635
      %v3768 = vrcp.pop %v3638
      %v3769 = vrcp.pop %v3641
      %v3770 = vrcp.pop %v3644
      %v3771 = vrcp.pop %v3647
      %v3772 = vrcp.pop %v3650
      %v3773 = vrcp.pop %v3653
      %v3774 = vrcp.pop %v3656
      %v3775 = vrcp.pop %v3659
      %v3776 = vrcp.pop %v3662
      %v3777 = vrcp.pop %v3665
      %v3778 = vrcp.pop %v3668
      %v3779 = vrcp.pop %v3671
      %v3780 = vrcp.pop %v3674
      %v3781 = vrcp.pop %v3677
      %v3782 = vrcp.pop %v3680
      %v3783 = vrcp.pop %v3683
      %v3784 = vrcp.pop %v3686
      %v3785 = vrcp.pop %v3689
      %v3786 = vrcp.pop %v3692
      %v3787 = vrcp.pop %v3695
      %v3788 = vrcp.pop %v3698
      %v3789 = vrcp.pop %v3701
      %v3790 = vrcp.pop %v3704
      %v3791 = vrcp.pop %v3707
      %v3792 = vrcp.pop %v3710
      %v3793 = vrcp.pop %v3713
      %v3794 = vrcp.pop %v3716
      %v3795 = vrcp.pop %v3719
      %v3796 = vrcp.pop %v3722
      %v3797 = vrcp.pop %v3725
      %v3798 = vrcp.pop %v3728
      %v3799 = vrcp.pop %v3731
      %v3800 = vrcp.pop %v3734
      %v3801 = vrcp.pop %v3737
      %v3802 = vmul.f32 %v3419, %v3738
      %v3803 = vmul.f32 %v3421, %v3739
      %v3804 = vmul.f32 %v3423, %v3740
      %v3805 = vmul.f32 %v3425, %v3741
      %v3806 = vmul.f32 %v3427, %v3742
      %v3807 = vmul.f32 %v3429, %v3743
      %v3808 = vmul.f32 %v3431, %v3744
      %v3809 = vmul.f32 %v3433, %v3745
      %v3810 = vmul.f32 %v3435, %v3746
      %v3811 = vmul.f32 %v3437, %v3747
      %v3812 = vmul.f32 %v3439, %v3748
      %v3813 = vmul.f32 %v3441, %v3749
      %v3814 = vmul.f32 %v3443, %v3750
      %v3815 = vmul.f32 %v3445, %v3751
      %v3816 = vmul.f32 %v3447, %v3752
      %v3817 = vmul.f32 %v3449, %v3753
      %v3818 = vmul.f32 %v3451, %v3754
      %v3819 = vmul.f32 %v3453, %v3755
      %v3820 = vmul.f32 %v3455, %v3756
      %v3821 = vmul.f32 %v3457, %v3757
      %v3822 = vmul.f32 %v3459, %v3758
      %v3823 = vmul.f32 %v3461, %v3759
      %v3824 = vmul.f32 %v3463, %v3760
      %v3825 = vmul.f32 %v3465, %v3761
      %v3826 = vmul.f32 %v3467, %v3762
      %v3827 = vmul.f32 %v3469, %v3763
      %v3828 = vmul.f32 %v3471, %v3764
      %v3829 = vmul.f32 %v3473, %v3765
      %v3830 = vmul.f32 %v3475, %v3766
      %v3831 = vmul.f32 %v3477, %v3767
      %v3832 = vmul.f32 %v3479, %v3768
      %v3833 = vmul.f32 %v3481, %v3769
      %v3834 = vmul.f32 %v3483, %v3770
      %v3835 = vmul.f32 %v3485, %v3771
      %v3836 = vmul.f32 %v3487, %v3772
      %v3837 = vmul.f32 %v3489, %v3773
      %v3838 = vmul.f32 %v3491, %v3774
      %v3839 = vmul.f32 %v3493, %v3775
      %v3840 = vmul.f32 %v3495, %v3776
      %v3841 = vmul.f32 %v3497, %v3777
      %v3842 = vmul.f32 %v3499, %v3778
      %v3843 = vmul.f32 %v3501, %v3779
      %v3844 = vmul.f32 %v3503, %v3780
      %v3845 = vmul.f32 %v3505, %v3781
      %v3846 = vmul.f32 %v3507, %v3782
      %v3847 = vmul.f32 %v3509, %v3783
      %v3848 = vmul.f32 %v3511, %v3784
      %v3849 = vmul.f32 %v3513, %v3785
      %v3850 = vmul.f32 %v3515, %v3786
      %v3851 = vmul.f32 %v3517, %v3787
      %v3852 = vmul.f32 %v3519, %v3788
      %v3853 = vmul.f32 %v3521, %v3789
      %v3854 = vmul.f32 %v3523, %v3790
      %v3855 = vmul.f32 %v3525, %v3791
      %v3856 = vmul.f32 %v3527, %v3792
      %v3857 = vmul.f32 %v3529, %v3793
      %v3858 = vmul.f32 %v3531, %v3794
      %v3859 = vmul.f32 %v3533, %v3795
      %v3860 = vmul.f32 %v3535, %v3796
      %v3861 = vmul.f32 %v3537, %v3797
      %v3862 = vmul.f32 %v3539, %v3798
      %v3863 = vmul.f32 %v3541, %v3799
      %v3864 = vmul.f32 %v3543, %v3800
      %v3865 = vmul.f32 %v3545, %v3801
      %v3866 = vld [vmem:[%s8] sm:$0xff]
      %v3867 = vld [vmem:[%s8 + $0x8] sm:$0xff]
      %v3868 = vld [vmem:[%s8 + $0x10] sm:$0xff]
      %v3869 = vld [vmem:[%s8 + $0x18] sm:$0xff]
      %v3870 = vld [vmem:[%s8 + $0x20] sm:$0xff]
      %v3871 = vld [vmem:[%s8 + $0x28] sm:$0xff]
      %v3872 = vld [vmem:[%s8 + $0x30] sm:$0xff]
      %v3873 = vld [vmem:[%s8 + $0x38] sm:$0xff]
      %v3874 = vld [vmem:[%s8 + $0x40] sm:$0xff]
      %v3875 = vld [vmem:[%s8 + $0x48] sm:$0xff]
      %v3876 = vld [vmem:[%s8 + $0x50] sm:$0xff]
      %v3877 = vld [vmem:[%s8 + $0x58] sm:$0xff]
      %v3878 = vld [vmem:[%s8 + $0x60] sm:$0xff]
      %v3879 = vld [vmem:[%s8 + $0x68] sm:$0xff]
      %v3880 = vld [vmem:[%s8 + $0x70] sm:$0xff]
      %v3881 = vld [vmem:[%s8 + $0x78] sm:$0xff]
      %v3882 = vld [vmem:[%s8 + $0x80] sm:$0xff]
      %v3883 = vld [vmem:[%s8 + $0x88] sm:$0xff]
      %v3884 = vld [vmem:[%s8 + $0x90] sm:$0xff]
      %v3885 = vld [vmem:[%s8 + $0x98] sm:$0xff]
      %v3886 = vld [vmem:[%s8 + $0xa0] sm:$0xff]
      %v3887 = vld [vmem:[%s8 + $0xa8] sm:$0xff]
      %v3888 = vld [vmem:[%s8 + $0xb0] sm:$0xff]
      %v3889 = vld [vmem:[%s8 + $0xb8] sm:$0xff]
      %v3890 = vld [vmem:[%s8 + $0xc0] sm:$0xff]
      %v3891 = vld [vmem:[%s8 + $0xc8] sm:$0xff]
      %v3892 = vld [vmem:[%s8 + $0xd0] sm:$0xff]
      %v3893 = vld [vmem:[%s8 + $0xd8] sm:$0xff]
      %v3894 = vld [vmem:[%s8 + $0xe0] sm:$0xff]
      %v3895 = vld [vmem:[%s8 + $0xe8] sm:$0xff]
      %v3896 = vld [vmem:[%s8 + $0xf0] sm:$0xff]
      %v3897 = vld [vmem:[%s8 + $0xf8] sm:$0xff]
      %v3898 = vld [vmem:[%s8 + $0x100] sm:$0xff]
      %v3899 = vld [vmem:[%s8 + $0x108] sm:$0xff]
      %v3900 = vld [vmem:[%s8 + $0x110] sm:$0xff]
      %v3901 = vld [vmem:[%s8 + $0x118] sm:$0xff]
      %v3902 = vld [vmem:[%s8 + $0x120] sm:$0xff]
      %v3903 = vld [vmem:[%s8 + $0x128] sm:$0xff]
      %v3904 = vld [vmem:[%s8 + $0x130] sm:$0xff]
      %v3905 = vld [vmem:[%s8 + $0x138] sm:$0xff]
      %v3906 = vld [vmem:[%s8 + $0x140] sm:$0xff]
      %v3907 = vld [vmem:[%s8 + $0x148] sm:$0xff]
      %v3908 = vld [vmem:[%s8 + $0x150] sm:$0xff]
      %v3909 = vld [vmem:[%s8 + $0x158] sm:$0xff]
      %v3910 = vld [vmem:[%s8 + $0x160] sm:$0xff]
      %v3911 = vld [vmem:[%s8 + $0x168] sm:$0xff]
      %v3912 = vld [vmem:[%s8 + $0x170] sm:$0xff]
      %v3913 = vld [vmem:[%s8 + $0x178] sm:$0xff]
      %v3914 = vld [vmem:[%s8 + $0x180] sm:$0xff]
      %v3915 = vld [vmem:[%s8 + $0x188] sm:$0xff]
      %v3916 = vld [vmem:[%s8 + $0x190] sm:$0xff]
      %v3917 = vld [vmem:[%s8 + $0x198] sm:$0xff]
      %v3918 = vld [vmem:[%s8 + $0x1a0] sm:$0xff]
      %v3919 = vld [vmem:[%s8 + $0x1a8] sm:$0xff]
      %v3920 = vld [vmem:[%s8 + $0x1b0] sm:$0xff]
      %v3921 = vld [vmem:[%s8 + $0x1b8] sm:$0xff]
      %v3922 = vld [vmem:[%s8 + $0x1c0] sm:$0xff]
      %v3923 = vld [vmem:[%s8 + $0x1c8] sm:$0xff]
      %v3924 = vld [vmem:[%s8 + $0x1d0] sm:$0xff]
      %v3925 = vld [vmem:[%s8 + $0x1d8] sm:$0xff]
      %v3926 = vld [vmem:[%s8 + $0x1e0] sm:$0xff]
      %v3927 = vld [vmem:[%s8 + $0x1e8] sm:$0xff]
      %v3928 = vld [vmem:[%s8 + $0x1f0] sm:$0xff]
      %v3929 = vld [vmem:[%s8 + $0x1f8] sm:$0xff]
      %v3930 = vadd.f32 %v3802, %v3866
      %v3931 = vadd.f32 %v3803, %v3867
      %v3932 = vadd.f32 %v3804, %v3868
      %v3933 = vadd.f32 %v3805, %v3869
      %v3934 = vadd.f32 %v3806, %v3870
      %v3935 = vadd.f32 %v3807, %v3871
      %v3936 = vadd.f32 %v3808, %v3872
      %v3937 = vadd.f32 %v3809, %v3873
      %v3938 = vadd.f32 %v3810, %v3874
      %v3939 = vadd.f32 %v3811, %v3875
      %v3940 = vadd.f32 %v3812, %v3876
      %v3941 = vadd.f32 %v3813, %v3877
      %v3942 = vadd.f32 %v3814, %v3878
      %v3943 = vadd.f32 %v3815, %v3879
      %v3944 = vadd.f32 %v3816, %v3880
      %v3945 = vadd.f32 %v3817, %v3881
      %v3946 = vadd.f32 %v3818, %v3882
      %v3947 = vadd.f32 %v3819, %v3883
      %v3948 = vadd.f32 %v3820, %v3884
      %v3949 = vadd.f32 %v3821, %v3885
      %v3950 = vadd.f32 %v3822, %v3886
      %v3951 = vadd.f32 %v3823, %v3887
      %v3952 = vadd.f32 %v3824, %v3888
      %v3953 = vadd.f32 %v3825, %v3889
      %v3954 = vadd.f32 %v3826, %v3890
      %v3955 = vadd.f32 %v3827, %v3891
      %v3956 = vadd.f32 %v3828, %v3892
      %v3957 = vadd.f32 %v3829, %v3893
      %v3958 = vadd.f32 %v3830, %v3894
      %v3959 = vadd.f32 %v3831, %v3895
      %v3960 = vadd.f32 %v3832, %v3896
      %v3961 = vadd.f32 %v3833, %v3897
      %v3962 = vadd.f32 %v3834, %v3898
      %v3963 = vadd.f32 %v3835, %v3899
      %v3964 = vadd.f32 %v3836, %v3900
      %v3965 = vadd.f32 %v3837, %v3901
      %v3966 = vadd.f32 %v3838, %v3902
      %v3967 = vadd.f32 %v3839, %v3903
      %v3968 = vadd.f32 %v3840, %v3904
      %v3969 = vadd.f32 %v3841, %v3905
      %v3970 = vadd.f32 %v3842, %v3906
      %v3971 = vadd.f32 %v3843, %v3907
      %v3972 = vadd.f32 %v3844, %v3908
      %v3973 = vadd.f32 %v3845, %v3909
      %v3974 = vadd.f32 %v3846, %v3910
      %v3975 = vadd.f32 %v3847, %v3911
      %v3976 = vadd.f32 %v3848, %v3912
      %v3977 = vadd.f32 %v3849, %v3913
      %v3978 = vadd.f32 %v3850, %v3914
      %v3979 = vadd.f32 %v3851, %v3915
      %v3980 = vadd.f32 %v3852, %v3916
      %v3981 = vadd.f32 %v3853, %v3917
      %v3982 = vadd.f32 %v3854, %v3918
      %v3983 = vadd.f32 %v3855, %v3919
      %v3984 = vadd.f32 %v3856, %v3920
      %v3985 = vadd.f32 %v3857, %v3921
      %v3986 = vadd.f32 %v3858, %v3922
      %v3987 = vadd.f32 %v3859, %v3923
      %v3988 = vadd.f32 %v3860, %v3924
      %v3989 = vadd.f32 %v3861, %v3925
      %v3990 = vadd.f32 %v3862, %v3926
      %v3991 = vadd.f32 %v3863, %v3927
      %v3992 = vadd.f32 %v3864, %v3928
      %v3993 = vadd.f32 %v3865, %v3929
      %3994 = vrot.lane.b32.xlu0 %v2387, 96
      %v3995 = vpop.permute.xlu0 %3994
      %3996 = vrot.lane.b32.xlu0 %v2392, 96
      %v3997 = vpop.permute.xlu0 %3996
      %3998 = vrot.lane.b32.xlu0 %v2397, 96
      %v3999 = vpop.permute.xlu0 %3998
      %4000 = vrot.lane.b32.xlu0 %v2402, 96
      %v4001 = vpop.permute.xlu0 %4000
      %4002 = vrot.lane.b32.xlu0 %v2407, 96
      %v4003 = vpop.permute.xlu0 %4002
      %4004 = vrot.lane.b32.xlu0 %v2412, 96
      %v4005 = vpop.permute.xlu0 %4004
      %4006 = vrot.lane.b32.xlu0 %v2417, 96
      %v4007 = vpop.permute.xlu0 %4006
      %4008 = vrot.lane.b32.xlu0 %v2422, 96
      %v4009 = vpop.permute.xlu0 %4008
      %v4019 = vsel %vm665, %v3930, 0
      %v4022 = vsel %vm665, %v3931, 0
      %v4025 = vsel %vm665, %v3932, 0
      %v4028 = vsel %vm665, %v3933, 0
      %v4031 = vsel %vm665, %v3934, 0
      %v4034 = vsel %vm665, %v3935, 0
      %v4037 = vsel %vm665, %v3936, 0
      %v4040 = vsel %vm665, %v3937, 0
      %v4043 = vsel %vm665, %v3938, 0
      %v4046 = vsel %vm665, %v3939, 0
      %v4049 = vsel %vm665, %v3940, 0
      %v4052 = vsel %vm665, %v3941, 0
      %v4055 = vsel %vm665, %v3942, 0
      %v4058 = vsel %vm665, %v3943, 0
      %v4061 = vsel %vm665, %v3944, 0
      %v4064 = vsel %vm665, %v3945, 0
      %v4067 = vsel %vm665, %v3946, 0
      %v4070 = vsel %vm665, %v3947, 0
      %v4073 = vsel %vm665, %v3948, 0
      %v4076 = vsel %vm665, %v3949, 0
      %v4079 = vsel %vm665, %v3950, 0
      %v4082 = vsel %vm665, %v3951, 0
      %v4085 = vsel %vm665, %v3952, 0
      %v4088 = vsel %vm665, %v3953, 0
      %v4091 = vsel %vm665, %v3954, 0
      %v4094 = vsel %vm665, %v3955, 0
      %v4097 = vsel %vm665, %v3956, 0
      %v4100 = vsel %vm665, %v3957, 0
      %v4103 = vsel %vm665, %v3958, 0
      %v4106 = vsel %vm665, %v3959, 0
      %v4109 = vsel %vm665, %v3960, 0
      %v4112 = vsel %vm665, %v3961, 0
      %v4115 = vsel %vm665, %v3962, 0
      %v4118 = vsel %vm665, %v3963, 0
      %v4121 = vsel %vm665, %v3964, 0
      %v4124 = vsel %vm665, %v3965, 0
      %v4127 = vsel %vm665, %v3966, 0
      %v4130 = vsel %vm665, %v3967, 0
      %v4133 = vsel %vm665, %v3968, 0
      %v4136 = vsel %vm665, %v3969, 0
      %v4139 = vsel %vm665, %v3970, 0
      %v4142 = vsel %vm665, %v3971, 0
      %v4145 = vsel %vm665, %v3972, 0
      %v4148 = vsel %vm665, %v3973, 0
      %v4151 = vsel %vm665, %v3974, 0
      %v4154 = vsel %vm665, %v3975, 0
      %v4157 = vsel %vm665, %v3976, 0
      %v4160 = vsel %vm665, %v3977, 0
      %v4163 = vsel %vm665, %v3978, 0
      %v4166 = vsel %vm665, %v3979, 0
      %v4169 = vsel %vm665, %v3980, 0
      %v4172 = vsel %vm665, %v3981, 0
      %v4175 = vsel %vm665, %v3982, 0
      %v4178 = vsel %vm665, %v3983, 0
      %v4181 = vsel %vm665, %v3984, 0
      %v4184 = vsel %vm665, %v3985, 0
      %v4187 = vsel %vm665, %v3986, 0
      %v4190 = vsel %vm665, %v3987, 0
      %v4193 = vsel %vm665, %v3988, 0
      %v4196 = vsel %vm665, %v3989, 0
      %v4199 = vsel %vm665, %v3990, 0
      %v4202 = vsel %vm665, %v3991, 0
      %v4205 = vsel %vm665, %v3992, 0
      %v4208 = vsel %vm665, %v3993, 0
      %4210 = vmatprep.subr.mxu0 0.0
      %4211 = vmatpush1.msra.mxu0 %v3995
      %4212 = vmatprep.subr.mxu0 0.0
      %4213 = vmatpush1.msra.mxu0 %v3997
      %4214 = vmatprep.subr.mxu0 0.0
      %4215 = vmatpush1.msra.mxu0 %v3999
      %4216 = vmatprep.subr.mxu0 0.0
      %4217 = vmatpush1.msra.mxu0 %v4001
      %4218 = vmatprep.subr.mxu0 0.0
      %4219 = vmatpush1.msra.mxu0 %v4003
      %4220 = vmatprep.subr.mxu0 0.0
      %4221 = vmatpush1.msra.mxu0 %v4005
      %4222 = vmatprep.subr.mxu0 0.0
      %4223 = vmatpush1.msra.mxu0 %v4007
      %4224 = vmatprep.subr.mxu0 0.0
      %4225 = vmatpush1.msra.mxu0 %v4009
      %4226 = vmatprep.subr.mxu0 0.0
      %4227 = vmatpush1.msra.mxu0 0.0
      %4228 = vmatprep.subr.mxu0 0.0
      %4229 = vmatpush1.msra.mxu0 0.0
      %4230 = vmatprep.subr.mxu0 0.0
      %4231 = vmatpush1.msra.mxu0 0.0
      %4232 = vmatprep.subr.mxu0 0.0
      %4233 = vmatpush1.msra.mxu0 0.0
      %4234 = vmatprep.subr.mxu0 0.0
      %4235 = vmatpush1.msra.mxu0 0.0
      %4236 = vmatprep.subr.mxu0 0.0
      %4237 = vmatpush1.msra.mxu0 0.0
      %4238 = vmatprep.subr.mxu0 0.0
      %4239 = vmatpush1.msra.mxu0 0.0
      %4240 = vmatprep.subr.mxu0 0.0
      %4241 = vmatpush1.msra.mxu0 0.0
      %4242 = vmatprep.subr.mxu0 0.0
      %4243 = vmatpush1.msra.mxu0 0.0
      %4244 = vmatprep.subr.mxu0 0.0
      %4245 = vmatpush1.msra.mxu0 0.0
      %4246 = vmatprep.subr.mxu0 0.0
      %4247 = vmatpush1.msra.mxu0 0.0
      %4248 = vmatprep.subr.mxu0 0.0
      %4249 = vmatpush1.msra.mxu0 0.0
      %4250 = vmatprep.subr.mxu0 0.0
      %4251 = vmatpush1.msra.mxu0 0.0
      %4252 = vmatprep.subr.mxu0 0.0
      %4253 = vmatpush1.msra.mxu0 0.0
      %4254 = vmatprep.subr.mxu0 0.0
      %4255 = vmatpush1.msra.mxu0 0.0
      %4256 = vmatprep.subr.mxu0 0.0
      %4257 = vmatpush1.msra.mxu0 0.0
      %4258 = vmatprep.subr.mxu0 0.0
      %4259 = vmatpush1.msra.mxu0 0.0
      %4260 = vmatprep.subr.mxu0 0.0
      %4261 = vmatpush1.msra.mxu0 0.0
      %4262 = vmatprep.subr.mxu0 0.0
      %4263 = vmatpush1.msra.mxu0 0.0
      %4264 = vmatprep.subr.mxu0 0.0
      %4265 = vmatpush1.msra.mxu0 0.0
      %4266 = vmatprep.subr.mxu0 0.0
      %4267 = vmatpush1.msra.mxu0 0.0
      %4268 = vmatprep.subr.mxu0 0.0
      %4269 = vmatpush1.msra.mxu0 0.0
      %4270 = vmatprep.subr.mxu0 0.0
      %4271 = vmatpush1.msra.mxu0 0.0
      %4272 = vmatprep.subr.mxu0 0.0
      %4273 = vmatpush1.msra.mxu0 0.0
      %4274 = vmatprep.mubr.f32.mxu0 0.0
      %4275 = vmatmul.mubr.f32.gmra.mrb[0].mxu0 %v4019
      %v4276 = vpop.f32.mrb[0].mxu0
      %v4277 = vadd.f32 0.0, %v4276
      %v4278 = vpop.f32.mrb[0].mxu0
      %4279 = vmatprep.mubr.f32.mxu0 0.0
      %4280 = vmatmul.mubr.f32.gmra.mrb[0].mxu0 %v4022
      %v4281 = vpop.f32.mrb[0].mxu0
      %v4282 = vadd.f32 0.0, %v4281
      %v4283 = vpop.f32.mrb[0].mxu0
      %4284 = vmatprep.mubr.f32.mxu0 0.0
      %4285 = vmatmul.mubr.f32.gmra.mrb[0].mxu0 %v4025
      %v4286 = vpop.f32.mrb[0].mxu0
      %v4287 = vadd.f32 0.0, %v4286
      %v4288 = vpop.f32.mrb[0].mxu0
      %4289 = vmatprep.mubr.f32.mxu0 0.0
      %4290 = vmatmul.mubr.f32.gmra.mrb[0].mxu0 %v4028
      %v4291 = vpop.f32.mrb[0].mxu0
      %v4292 = vadd.f32 0.0, %v4291
      %v4293 = vpop.f32.mrb[0].mxu0
      %4294 = vmatprep.mubr.f32.mxu0 0.0
      %4295 = vmatmul.mubr.f32.gmra.mrb[0].mxu0 %v4031
      %v4296 = vpop.f32.mrb[0].mxu0
      %v4297 = vadd.f32 0.0, %v4296
      %v4298 = vpop.f32.mrb[0].mxu0
      %4299 = vmatprep.mubr.f32.mxu0 0.0
      %4300 = vmatmul.mubr.f32.gmra.mrb[0].mxu0 %v4034
      %v4301 = vpop.f32.mrb[0].mxu0
      %v4302 = vadd.f32 0.0, %v4301
      %v4303 = vpop.f32.mrb[0].mxu0
      %4304 = vmatprep.mubr.f32.mxu0 0.0
      %4305 = vmatmul.mubr.f32.gmra.mrb[0].mxu0 %v4037
      %v4306 = vpop.f32.mrb[0].mxu0
      %v4307 = vadd.f32 0.0, %v4306
      %v4308 = vpop.f32.mrb[0].mxu0
      %4309 = vmatprep.mubr.f32.mxu0 0.0
      %4310 = vmatmul.mubr.f32.gmra.mrb[0].mxu0 %v4040
      %v4311 = vpop.f32.mrb[0].mxu0
      %v4312 = vadd.f32 0.0, %v4311
      %v4313 = vpop.f32.mrb[0].mxu0
      %4314 = vmatprep.mubr.f32.mxu0 0.0
      %4315 = vmatmul.mubr.f32.gmra.mrb[0].mxu0 %v4043
      %v4316 = vpop.f32.mrb[0].mxu0
      %v4317 = vadd.f32 0.0, %v4316
      %v4318 = vpop.f32.mrb[0].mxu0
      %4319 = vmatprep.mubr.f32.mxu0 0.0
      %4320 = vmatmul.mubr.f32.gmra.mrb[0].mxu0 %v4046
      %v4321 = vpop.f32.mrb[0].mxu0
      %v4322 = vadd.f32 0.0, %v4321
      %v4323 = vpop.f32.mrb[0].mxu0
      %4324 = vmatprep.mubr.f32.mxu0 0.0
      %4325 = vmatmul.mubr.f32.gmra.mrb[0].mxu0 %v4049
      %v4326 = vpop.f32.mrb[0].mxu0
      %v4327 = vadd.f32 0.0, %v4326
      %v4328 = vpop.f32.mrb[0].mxu0
      %4329 = vmatprep.mubr.f32.mxu0 0.0
      %4330 = vmatmul.mubr.f32.gmra.mrb[0].mxu0 %v4052
      %v4331 = vpop.f32.mrb[0].mxu0
      %v4332 = vadd.f32 0.0, %v4331
      %v4333 = vpop.f32.mrb[0].mxu0
      %4334 = vmatprep.mubr.f32.mxu0 0.0
      %4335 = vmatmul.mubr.f32.gmra.mrb[0].mxu0 %v4055
      %v4336 = vpop.f32.mrb[0].mxu0
      %v4337 = vadd.f32 0.0, %v4336
      %v4338 = vpop.f32.mrb[0].mxu0
      %4339 = vmatprep.mubr.f32.mxu0 0.0
      %4340 = vmatmul.mubr.f32.gmra.mrb[0].mxu0 %v4058
      %v4341 = vpop.f32.mrb[0].mxu0
      %v4342 = vadd.f32 0.0, %v4341
      %v4343 = vpop.f32.mrb[0].mxu0
      %4344 = vmatprep.mubr.f32.mxu0 0.0
      %4345 = vmatmul.mubr.f32.gmra.mrb[0].mxu0 %v4061
      %v4346 = vpop.f32.mrb[0].mxu0
      %v4347 = vadd.f32 0.0, %v4346
      %v4348 = vpop.f32.mrb[0].mxu0
      %4349 = vmatprep.mubr.f32.mxu0 0.0
      %4350 = vmatmul.mubr.f32.gmra.mrb[0].mxu0 %v4064
      %v4351 = vpop.f32.mrb[0].mxu0
      %v4352 = vadd.f32 0.0, %v4351
      %v4353 = vpop.f32.mrb[0].mxu0
      %4354 = vmatprep.mubr.f32.mxu0 0.0
      %4355 = vmatmul.mubr.f32.gmra.mrb[0].mxu0 %v4067
      %v4356 = vpop.f32.mrb[0].mxu0
      %v4357 = vadd.f32 0.0, %v4356
      %v4358 = vpop.f32.mrb[0].mxu0
      %4359 = vmatprep.mubr.f32.mxu0 0.0
      %4360 = vmatmul.mubr.f32.gmra.mrb[0].mxu0 %v4070
      %v4361 = vpop.f32.mrb[0].mxu0
      %v4362 = vadd.f32 0.0, %v4361
      %v4363 = vpop.f32.mrb[0].mxu0
      %4364 = vmatprep.mubr.f32.mxu0 0.0
      %4365 = vmatmul.mubr.f32.gmra.mrb[0].mxu0 %v4073
      %v4366 = vpop.f32.mrb[0].mxu0
      %v4367 = vadd.f32 0.0, %v4366
      %v4368 = vpop.f32.mrb[0].mxu0
      %4369 = vmatprep.mubr.f32.mxu0 0.0
      %4370 = vmatmul.mubr.f32.gmra.mrb[0].mxu0 %v4076
      %v4371 = vpop.f32.mrb[0].mxu0
      %v4372 = vadd.f32 0.0, %v4371
      %v4373 = vpop.f32.mrb[0].mxu0
      %4374 = vmatprep.mubr.f32.mxu0 0.0
      %4375 = vmatmul.mubr.f32.gmra.mrb[0].mxu0 %v4079
      %v4376 = vpop.f32.mrb[0].mxu0
      %v4377 = vadd.f32 0.0, %v4376
      %v4378 = vpop.f32.mrb[0].mxu0
      %4379 = vmatprep.mubr.f32.mxu0 0.0
      %4380 = vmatmul.mubr.f32.gmra.mrb[0].mxu0 %v4082
      %v4381 = vpop.f32.mrb[0].mxu0
      %v4382 = vadd.f32 0.0, %v4381
      %v4383 = vpop.f32.mrb[0].mxu0
      %4384 = vmatprep.mubr.f32.mxu0 0.0
      %4385 = vmatmul.mubr.f32.gmra.mrb[0].mxu0 %v4085
      %v4386 = vpop.f32.mrb[0].mxu0
      %v4387 = vadd.f32 0.0, %v4386
      %v4388 = vpop.f32.mrb[0].mxu0
      %4389 = vmatprep.mubr.f32.mxu0 0.0
      %4390 = vmatmul.mubr.f32.gmra.mrb[0].mxu0 %v4088
      %v4391 = vpop.f32.mrb[0].mxu0
      %v4392 = vadd.f32 0.0, %v4391
      %v4393 = vpop.f32.mrb[0].mxu0
      %4394 = vmatprep.mubr.f32.mxu0 0.0
      %4395 = vmatmul.mubr.f32.gmra.mrb[0].mxu0 %v4091
      %v4396 = vpop.f32.mrb[0].mxu0
      %v4397 = vadd.f32 0.0, %v4396
      %v4398 = vpop.f32.mrb[0].mxu0
      %4399 = vmatprep.mubr.f32.mxu0 0.0
      %4400 = vmatmul.mubr.f32.gmra.mrb[0].mxu0 %v4094
      %v4401 = vpop.f32.mrb[0].mxu0
      %v4402 = vadd.f32 0.0, %v4401
      %v4403 = vpop.f32.mrb[0].mxu0
      %4404 = vmatprep.mubr.f32.mxu0 0.0
      %4405 = vmatmul.mubr.f32.gmra.mrb[0].mxu0 %v4097
      %v4406 = vpop.f32.mrb[0].mxu0
      %v4407 = vadd.f32 0.0, %v4406
      %v4408 = vpop.f32.mrb[0].mxu0
      %4409 = vmatprep.mubr.f32.mxu0 0.0
      %4410 = vmatmul.mubr.f32.gmra.mrb[0].mxu0 %v4100
      %v4411 = vpop.f32.mrb[0].mxu0
      %v4412 = vadd.f32 0.0, %v4411
      %v4413 = vpop.f32.mrb[0].mxu0
      %4414 = vmatprep.mubr.f32.mxu0 0.0
      %4415 = vmatmul.mubr.f32.gmra.mrb[0].mxu0 %v4103
      %v4416 = vpop.f32.mrb[0].mxu0
      %v4417 = vadd.f32 0.0, %v4416
      %v4418 = vpop.f32.mrb[0].mxu0
      %4419 = vmatprep.mubr.f32.mxu0 0.0
      %4420 = vmatmul.mubr.f32.gmra.mrb[0].mxu0 %v4106
      %v4421 = vpop.f32.mrb[0].mxu0
      %v4422 = vadd.f32 0.0, %v4421
      %v4423 = vpop.f32.mrb[0].mxu0
      %4424 = vmatprep.mubr.f32.mxu0 0.0
      %4425 = vmatmul.mubr.f32.gmra.mrb[0].mxu0 %v4109
      %v4426 = vpop.f32.mrb[0].mxu0
      %v4427 = vadd.f32 0.0, %v4426
      %v4428 = vpop.f32.mrb[0].mxu0
      %4429 = vmatprep.mubr.f32.mxu0 0.0
      %4430 = vmatmul.mubr.f32.gmra.mrb[0].mxu0 %v4112
      %v4431 = vpop.f32.mrb[0].mxu0
      %v4432 = vadd.f32 0.0, %v4431
      %v4433 = vpop.f32.mrb[0].mxu0
      %4434 = vmatprep.mubr.f32.mxu0 0.0
      %4435 = vmatmul.mubr.f32.gmra.mrb[0].mxu0 %v4115
      %v4436 = vpop.f32.mrb[0].mxu0
      %v4437 = vadd.f32 0.0, %v4436
      %v4438 = vpop.f32.mrb[0].mxu0
      %4439 = vmatprep.mubr.f32.mxu0 0.0
      %4440 = vmatmul.mubr.f32.gmra.mrb[0].mxu0 %v4118
      %v4441 = vpop.f32.mrb[0].mxu0
      %v4442 = vadd.f32 0.0, %v4441
      %v4443 = vpop.f32.mrb[0].mxu0
      %4444 = vmatprep.mubr.f32.mxu0 0.0
      %4445 = vmatmul.mubr.f32.gmra.mrb[0].mxu0 %v4121
      %v4446 = vpop.f32.mrb[0].mxu0
      %v4447 = vadd.f32 0.0, %v4446
      %v4448 = vpop.f32.mrb[0].mxu0
      %4449 = vmatprep.mubr.f32.mxu0 0.0
      %4450 = vmatmul.mubr.f32.gmra.mrb[0].mxu0 %v4124
      %v4451 = vpop.f32.mrb[0].mxu0
      %v4452 = vadd.f32 0.0, %v4451
      %v4453 = vpop.f32.mrb[0].mxu0
      %4454 = vmatprep.mubr.f32.mxu0 0.0
      %4455 = vmatmul.mubr.f32.gmra.mrb[0].mxu0 %v4127
      %v4456 = vpop.f32.mrb[0].mxu0
      %v4457 = vadd.f32 0.0, %v4456
      %v4458 = vpop.f32.mrb[0].mxu0
      %4459 = vmatprep.mubr.f32.mxu0 0.0
      %4460 = vmatmul.mubr.f32.gmra.mrb[0].mxu0 %v4130
      %v4461 = vpop.f32.mrb[0].mxu0
      %v4462 = vadd.f32 0.0, %v4461
      %v4463 = vpop.f32.mrb[0].mxu0
      %4464 = vmatprep.mubr.f32.mxu0 0.0
      %4465 = vmatmul.mubr.f32.gmra.mrb[0].mxu0 %v4133
      %v4466 = vpop.f32.mrb[0].mxu0
      %v4467 = vadd.f32 0.0, %v4466
      %v4468 = vpop.f32.mrb[0].mxu0
      %4469 = vmatprep.mubr.f32.mxu0 0.0
      %4470 = vmatmul.mubr.f32.gmra.mrb[0].mxu0 %v4136
      %v4471 = vpop.f32.mrb[0].mxu0
      %v4472 = vadd.f32 0.0, %v4471
      %v4473 = vpop.f32.mrb[0].mxu0
      %4474 = vmatprep.mubr.f32.mxu0 0.0
      %4475 = vmatmul.mubr.f32.gmra.mrb[0].mxu0 %v4139
      %v4476 = vpop.f32.mrb[0].mxu0
      %v4477 = vadd.f32 0.0, %v4476
      %v4478 = vpop.f32.mrb[0].mxu0
      %4479 = vmatprep.mubr.f32.mxu0 0.0
      %4480 = vmatmul.mubr.f32.gmra.mrb[0].mxu0 %v4142
      %v4481 = vpop.f32.mrb[0].mxu0
      %v4482 = vadd.f32 0.0, %v4481
      %v4483 = vpop.f32.mrb[0].mxu0
      %4484 = vmatprep.mubr.f32.mxu0 0.0
      %4485 = vmatmul.mubr.f32.gmra.mrb[0].mxu0 %v4145
      %v4486 = vpop.f32.mrb[0].mxu0
      %v4487 = vadd.f32 0.0, %v4486
      %v4488 = vpop.f32.mrb[0].mxu0
      %4489 = vmatprep.mubr.f32.mxu0 0.0
      %4490 = vmatmul.mubr.f32.gmra.mrb[0].mxu0 %v4148
      %v4491 = vpop.f32.mrb[0].mxu0
      %v4492 = vadd.f32 0.0, %v4491
      %v4493 = vpop.f32.mrb[0].mxu0
      %4494 = vmatprep.mubr.f32.mxu0 0.0
      %4495 = vmatmul.mubr.f32.gmra.mrb[0].mxu0 %v4151
      %v4496 = vpop.f32.mrb[0].mxu0
      %v4497 = vadd.f32 0.0, %v4496
      %v4498 = vpop.f32.mrb[0].mxu0
      %4499 = vmatprep.mubr.f32.mxu0 0.0
      %4500 = vmatmul.mubr.f32.gmra.mrb[0].mxu0 %v4154
      %v4501 = vpop.f32.mrb[0].mxu0
      %v4502 = vadd.f32 0.0, %v4501
      %v4503 = vpop.f32.mrb[0].mxu0
      %4504 = vmatprep.mubr.f32.mxu0 0.0
      %4505 = vmatmul.mubr.f32.gmra.mrb[0].mxu0 %v4157
      %v4506 = vpop.f32.mrb[0].mxu0
      %v4507 = vadd.f32 0.0, %v4506
      %v4508 = vpop.f32.mrb[0].mxu0
      %4509 = vmatprep.mubr.f32.mxu0 0.0
      %4510 = vmatmul.mubr.f32.gmra.mrb[0].mxu0 %v4160
      %v4511 = vpop.f32.mrb[0].mxu0
      %v4512 = vadd.f32 0.0, %v4511
      %v4513 = vpop.f32.mrb[0].mxu0
      %4514 = vmatprep.mubr.f32.mxu0 0.0
      %4515 = vmatmul.mubr.f32.gmra.mrb[0].mxu0 %v4163
      %v4516 = vpop.f32.mrb[0].mxu0
      %v4517 = vadd.f32 0.0, %v4516
      %v4518 = vpop.f32.mrb[0].mxu0
      %4519 = vmatprep.mubr.f32.mxu0 0.0
      %4520 = vmatmul.mubr.f32.gmra.mrb[0].mxu0 %v4166
      %v4521 = vpop.f32.mrb[0].mxu0
      %v4522 = vadd.f32 0.0, %v4521
      %v4523 = vpop.f32.mrb[0].mxu0
      %4524 = vmatprep.mubr.f32.mxu0 0.0
      %4525 = vmatmul.mubr.f32.gmra.mrb[0].mxu0 %v4169
      %v4526 = vpop.f32.mrb[0].mxu0
      %v4527 = vadd.f32 0.0, %v4526
      %v4528 = vpop.f32.mrb[0].mxu0
      %4529 = vmatprep.mubr.f32.mxu0 0.0
      %4530 = vmatmul.mubr.f32.gmra.mrb[0].mxu0 %v4172
      %v4531 = vpop.f32.mrb[0].mxu0
      %v4532 = vadd.f32 0.0, %v4531
      %v4533 = vpop.f32.mrb[0].mxu0
      %4534 = vmatprep.mubr.f32.mxu0 0.0
      %4535 = vmatmul.mubr.f32.gmra.mrb[0].mxu0 %v4175
      %v4536 = vpop.f32.mrb[0].mxu0
      %v4537 = vadd.f32 0.0, %v4536
      %v4538 = vpop.f32.mrb[0].mxu0
      %4539 = vmatprep.mubr.f32.mxu0 0.0
      %4540 = vmatmul.mubr.f32.gmra.mrb[0].mxu0 %v4178
      %v4541 = vpop.f32.mrb[0].mxu0
      %v4542 = vadd.f32 0.0, %v4541
      %v4543 = vpop.f32.mrb[0].mxu0
      %4544 = vmatprep.mubr.f32.mxu0 0.0
      %4545 = vmatmul.mubr.f32.gmra.mrb[0].mxu0 %v4181
      %v4546 = vpop.f32.mrb[0].mxu0
      %v4547 = vadd.f32 0.0, %v4546
      %v4548 = vpop.f32.mrb[0].mxu0
      %4549 = vmatprep.mubr.f32.mxu0 0.0
      %4550 = vmatmul.mubr.f32.gmra.mrb[0].mxu0 %v4184
      %v4551 = vpop.f32.mrb[0].mxu0
      %v4552 = vadd.f32 0.0, %v4551
      %v4553 = vpop.f32.mrb[0].mxu0
      %4554 = vmatprep.mubr.f32.mxu0 0.0
      %4555 = vmatmul.mubr.f32.gmra.mrb[0].mxu0 %v4187
      %v4556 = vpop.f32.mrb[0].mxu0
      %v4557 = vadd.f32 0.0, %v4556
      %v4558 = vpop.f32.mrb[0].mxu0
      %4559 = vmatprep.mubr.f32.mxu0 0.0
      %4560 = vmatmul.mubr.f32.gmra.mrb[0].mxu0 %v4190
      %v4561 = vpop.f32.mrb[0].mxu0
      %v4562 = vadd.f32 0.0, %v4561
      %v4563 = vpop.f32.mrb[0].mxu0
      %4564 = vmatprep.mubr.f32.mxu0 0.0
      %4565 = vmatmul.mubr.f32.gmra.mrb[0].mxu0 %v4193
      %v4566 = vpop.f32.mrb[0].mxu0
      %v4567 = vadd.f32 0.0, %v4566
      %v4568 = vpop.f32.mrb[0].mxu0
      %4569 = vmatprep.mubr.f32.mxu0 0.0
      %4570 = vmatmul.mubr.f32.gmra.mrb[0].mxu0 %v4196
      %v4571 = vpop.f32.mrb[0].mxu0
      %v4572 = vadd.f32 0.0, %v4571
      %v4573 = vpop.f32.mrb[0].mxu0
      %4574 = vmatprep.mubr.f32.mxu0 0.0
      %4575 = vmatmul.mubr.f32.gmra.mrb[0].mxu0 %v4199
      %v4576 = vpop.f32.mrb[0].mxu0
      %v4577 = vadd.f32 0.0, %v4576
      %v4578 = vpop.f32.mrb[0].mxu0
      %4579 = vmatprep.mubr.f32.mxu0 0.0
      %4580 = vmatmul.mubr.f32.gmra.mrb[0].mxu0 %v4202
      %v4581 = vpop.f32.mrb[0].mxu0
      %v4582 = vadd.f32 0.0, %v4581
      %v4583 = vpop.f32.mrb[0].mxu0
      %4584 = vmatprep.mubr.f32.mxu0 0.0
      %4585 = vmatmul.mubr.f32.gmra.mrb[0].mxu0 %v4205
      %v4586 = vpop.f32.mrb[0].mxu0
      %v4587 = vadd.f32 0.0, %v4586
      %v4588 = vpop.f32.mrb[0].mxu0
      %4589 = vmatprep.mubr.f32.mxu0 0.0
      %4590 = vmatmul.mubr.f32.gmra.mrb[0].mxu0 %v4208
      %v4591 = vpop.f32.mrb[0].mxu0
      %v4592 = vadd.f32 0.0, %v4591
      %v4593 = vpop.f32.mrb[0].mxu0
      %4594 = vdwg.mxu0
      %v4595 = vmul.f32 %v4277, %v2444
      %v4596 = vmul.f32 %v4282, %v2444
      %v4597 = vmul.f32 %v4287, %v2444
      %v4598 = vmul.f32 %v4292, %v2444
      %v4599 = vmul.f32 %v4297, %v2444
      %v4600 = vmul.f32 %v4302, %v2444
      %v4601 = vmul.f32 %v4307, %v2444
      %v4602 = vmul.f32 %v4312, %v2444
      %v4603 = vmul.f32 %v4317, %v2448
      %v4604 = vmul.f32 %v4322, %v2448
      %v4605 = vmul.f32 %v4327, %v2448
      %v4606 = vmul.f32 %v4332, %v2448
      %v4607 = vmul.f32 %v4337, %v2448
      %v4608 = vmul.f32 %v4342, %v2448
      %v4609 = vmul.f32 %v4347, %v2448
      %v4610 = vmul.f32 %v4352, %v2448
      %v4611 = vmul.f32 %v4357, %v2452
      %v4612 = vmul.f32 %v4362, %v2452
      %v4613 = vmul.f32 %v4367, %v2452
      %v4614 = vmul.f32 %v4372, %v2452
      %v4615 = vmul.f32 %v4377, %v2452
      %v4616 = vmul.f32 %v4382, %v2452
      %v4617 = vmul.f32 %v4387, %v2452
      %v4618 = vmul.f32 %v4392, %v2452
      %v4619 = vmul.f32 %v4397, %v2456
      %v4620 = vmul.f32 %v4402, %v2456
      %v4621 = vmul.f32 %v4407, %v2456
      %v4622 = vmul.f32 %v4412, %v2456
      %v4623 = vmul.f32 %v4417, %v2456
      %v4624 = vmul.f32 %v4422, %v2456
      %v4625 = vmul.f32 %v4427, %v2456
      %v4626 = vmul.f32 %v4432, %v2456
      %v4627 = vmul.f32 %v4437, %v2460
      %v4628 = vmul.f32 %v4442, %v2460
      %v4629 = vmul.f32 %v4447, %v2460
      %v4630 = vmul.f32 %v4452, %v2460
      %v4631 = vmul.f32 %v4457, %v2460
      %v4632 = vmul.f32 %v4462, %v2460
      %v4633 = vmul.f32 %v4467, %v2460
      %v4634 = vmul.f32 %v4472, %v2460
      %v4635 = vmul.f32 %v4477, %v2464
      %v4636 = vmul.f32 %v4482, %v2464
      %v4637 = vmul.f32 %v4487, %v2464
      %v4638 = vmul.f32 %v4492, %v2464
      %v4639 = vmul.f32 %v4497, %v2464
      %v4640 = vmul.f32 %v4502, %v2464
      %v4641 = vmul.f32 %v4507, %v2464
      %v4642 = vmul.f32 %v4512, %v2464
      %v4643 = vmul.f32 %v4517, %v2468
      %v4644 = vmul.f32 %v4522, %v2468
      %v4645 = vmul.f32 %v4527, %v2468
      %v4646 = vmul.f32 %v4532, %v2468
      %v4647 = vmul.f32 %v4537, %v2468
      %v4648 = vmul.f32 %v4542, %v2468
      %v4649 = vmul.f32 %v4547, %v2468
      %v4650 = vmul.f32 %v4552, %v2468
      %v4651 = vmul.f32 %v4557, %v2472
      %v4652 = vmul.f32 %v4562, %v2472
      %v4653 = vmul.f32 %v4567, %v2472
      %v4654 = vmul.f32 %v4572, %v2472
      %v4655 = vmul.f32 %v4577, %v2472
      %v4656 = vmul.f32 %v4582, %v2472
      %v4657 = vmul.f32 %v4587, %v2472
      %v4658 = vmul.f32 %v4592, %v2472
      %v4659 = vsel %vm2295, %v4595, 0.0
      %v4660 = vsel %vm2295, %v4603, 0.0
      %v4661 = vadd.f32 %v4659, %v4660
      %v4662 = vsel %vm2295, %v4611, 0.0
      %v4663 = vadd.f32 %v4661, %v4662
      %v4664 = vsel %vm2295, %v4619, 0.0
      %v4665 = vadd.f32 %v4663, %v4664
      %v4666 = vsel %vm2295, %v4627, 0.0
      %v4667 = vadd.f32 %v4665, %v4666
      %v4668 = vsel %vm2295, %v4635, 0.0
      %v4669 = vadd.f32 %v4667, %v4668
      %v4670 = vsel %vm2295, %v4643, 0.0
      %v4671 = vadd.f32 %v4669, %v4670
      %v4672 = vsel %vm2295, %v4651, 0.0
      %v4673 = vadd.f32 %v4671, %v4672
      %v4674 = vsel %vm2295, %v4596, 0.0
      %v4675 = vsel %vm2295, %v4604, 0.0
      %v4676 = vadd.f32 %v4674, %v4675
      %v4677 = vsel %vm2295, %v4612, 0.0
      %v4678 = vadd.f32 %v4676, %v4677
      %v4679 = vsel %vm2295, %v4620, 0.0
      %v4680 = vadd.f32 %v4678, %v4679
      %v4681 = vsel %vm2295, %v4628, 0.0
      %v4682 = vadd.f32 %v4680, %v4681
      %v4683 = vsel %vm2295, %v4636, 0.0
      %v4684 = vadd.f32 %v4682, %v4683
      %v4685 = vsel %vm2295, %v4644, 0.0
      %v4686 = vadd.f32 %v4684, %v4685
      %v4687 = vsel %vm2295, %v4652, 0.0
      %v4688 = vadd.f32 %v4686, %v4687
      %v4689 = vsel %vm2295, %v4597, 0.0
      %v4690 = vsel %vm2295, %v4605, 0.0
      %v4691 = vadd.f32 %v4689, %v4690
      %v4692 = vsel %vm2295, %v4613, 0.0
      %v4693 = vadd.f32 %v4691, %v4692
      %v4694 = vsel %vm2295, %v4621, 0.0
      %v4695 = vadd.f32 %v4693, %v4694
      %v4696 = vsel %vm2295, %v4629, 0.0
      %v4697 = vadd.f32 %v4695, %v4696
      %v4698 = vsel %vm2295, %v4637, 0.0
      %v4699 = vadd.f32 %v4697, %v4698
      %v4700 = vsel %vm2295, %v4645, 0.0
      %v4701 = vadd.f32 %v4699, %v4700
      %v4702 = vsel %vm2295, %v4653, 0.0
      %v4703 = vadd.f32 %v4701, %v4702
      %v4704 = vsel %vm2295, %v4598, 0.0
      %v4705 = vsel %vm2295, %v4606, 0.0
      %v4706 = vadd.f32 %v4704, %v4705
      %v4707 = vsel %vm2295, %v4614, 0.0
      %v4708 = vadd.f32 %v4706, %v4707
      %v4709 = vsel %vm2295, %v4622, 0.0
      %v4710 = vadd.f32 %v4708, %v4709
      %v4711 = vsel %vm2295, %v4630, 0.0
      %v4712 = vadd.f32 %v4710, %v4711
      %v4713 = vsel %vm2295, %v4638, 0.0
      %v4714 = vadd.f32 %v4712, %v4713
      %v4715 = vsel %vm2295, %v4646, 0.0
      %v4716 = vadd.f32 %v4714, %v4715
      %v4717 = vsel %vm2295, %v4654, 0.0
      %v4718 = vadd.f32 %v4716, %v4717
      %v4719 = vsel %vm2295, %v4599, 0.0
      %v4720 = vsel %vm2295, %v4607, 0.0
      %v4721 = vadd.f32 %v4719, %v4720
      %v4722 = vsel %vm2295, %v4615, 0.0
      %v4723 = vadd.f32 %v4721, %v4722
      %v4724 = vsel %vm2295, %v4623, 0.0
      %v4725 = vadd.f32 %v4723, %v4724
      %v4726 = vsel %vm2295, %v4631, 0.0
      %v4727 = vadd.f32 %v4725, %v4726
      %v4728 = vsel %vm2295, %v4639, 0.0
      %v4729 = vadd.f32 %v4727, %v4728
      %v4730 = vsel %vm2295, %v4647, 0.0
      %v4731 = vadd.f32 %v4729, %v4730
      %v4732 = vsel %vm2295, %v4655, 0.0
      %v4733 = vadd.f32 %v4731, %v4732
      %v4734 = vsel %vm2295, %v4600, 0.0
      %v4735 = vsel %vm2295, %v4608, 0.0
      %v4736 = vadd.f32 %v4734, %v4735
      %v4737 = vsel %vm2295, %v4616, 0.0
      %v4738 = vadd.f32 %v4736, %v4737
      %v4739 = vsel %vm2295, %v4624, 0.0
      %v4740 = vadd.f32 %v4738, %v4739
      %v4741 = vsel %vm2295, %v4632, 0.0
      %v4742 = vadd.f32 %v4740, %v4741
      %v4743 = vsel %vm2295, %v4640, 0.0
      %v4744 = vadd.f32 %v4742, %v4743
      %v4745 = vsel %vm2295, %v4648, 0.0
      %v4746 = vadd.f32 %v4744, %v4745
      %v4747 = vsel %vm2295, %v4656, 0.0
      %v4748 = vadd.f32 %v4746, %v4747
      %v4749 = vsel %vm2295, %v4601, 0.0
      %v4750 = vsel %vm2295, %v4609, 0.0
      %v4751 = vadd.f32 %v4749, %v4750
      %v4752 = vsel %vm2295, %v4617, 0.0
      %v4753 = vadd.f32 %v4751, %v4752
      %v4754 = vsel %vm2295, %v4625, 0.0
      %v4755 = vadd.f32 %v4753, %v4754
      %v4756 = vsel %vm2295, %v4633, 0.0
      %v4757 = vadd.f32 %v4755, %v4756
      %v4758 = vsel %vm2295, %v4641, 0.0
      %v4759 = vadd.f32 %v4757, %v4758
      %v4760 = vsel %vm2295, %v4649, 0.0
      %v4761 = vadd.f32 %v4759, %v4760
      %v4762 = vsel %vm2295, %v4657, 0.0
      %v4763 = vadd.f32 %v4761, %v4762
      %v4764 = vsel %vm2295, %v4602, 0.0
      %v4765 = vsel %vm2295, %v4610, 0.0
      %v4766 = vadd.f32 %v4764, %v4765
      %v4767 = vsel %vm2295, %v4618, 0.0
      %v4768 = vadd.f32 %v4766, %v4767
      %v4769 = vsel %vm2295, %v4626, 0.0
      %v4770 = vadd.f32 %v4768, %v4769
      %v4771 = vsel %vm2295, %v4634, 0.0
      %v4772 = vadd.f32 %v4770, %v4771
      %v4773 = vsel %vm2295, %v4642, 0.0
      %v4774 = vadd.f32 %v4772, %v4773
      %v4775 = vsel %vm2295, %v4650, 0.0
      %v4776 = vadd.f32 %v4774, %v4775
      %v4777 = vsel %vm2295, %v4658, 0.0
      %v4778 = vadd.f32 %v4776, %v4777
      %v4779 = vld [vmem:[%s9] sm:$0x1]
      %v4780 = vld [vmem:[%s10] sm:$0x1]
      %v4781 = vsel %vm2295, %v4673, 0.0
      %4782 = vadd.xlane.f32.xlu0 %v4781
      %v4783 = vpop.xlane.xlu0 %4782
      %v4784 = vsel %vm2295, %v4688, 0.0
      %4785 = vadd.xlane.f32.xlu0 %v4784
      %v4786 = vpop.xlane.xlu0 %4785
      %v4787 = vsel %vm2295, %v4703, 0.0
      %4788 = vadd.xlane.f32.xlu0 %v4787
      %v4789 = vpop.xlane.xlu0 %4788
      %v4790 = vsel %vm2295, %v4718, 0.0
      %4791 = vadd.xlane.f32.xlu0 %v4790
      %v4792 = vpop.xlane.xlu0 %4791
      %v4793 = vsel %vm2295, %v4733, 0.0
      %4794 = vadd.xlane.f32.xlu0 %v4793
      %v4795 = vpop.xlane.xlu0 %4794
      %v4796 = vsel %vm2295, %v4748, 0.0
      %4797 = vadd.xlane.f32.xlu0 %v4796
      %v4798 = vpop.xlane.xlu0 %4797
      %v4799 = vsel %vm2295, %v4763, 0.0
      %4800 = vadd.xlane.f32.xlu0 %v4799
      %v4801 = vpop.xlane.xlu0 %4800
      %v4802 = vsel %vm2295, %v4778, 0.0
      %4803 = vadd.xlane.f32.xlu0 %v4802
      %v4804 = vpop.xlane.xlu0 %4803
      %v4805 = vrcp.pop 16.0
      %v4806 = vmul.f32 %v4783, %v4805
      %v4807 = vmul.f32 %v4786, %v4805
      %v4808 = vmul.f32 %v4789, %v4805
      %v4809 = vmul.f32 %v4792, %v4805
      %v4810 = vmul.f32 %v4795, %v4805
      %v4811 = vmul.f32 %v4798, %v4805
      %v4812 = vmul.f32 %v4801, %v4805
      %v4813 = vmul.f32 %v4804, %v4805
      %v4814 = vsub.f32 %v4673, %v4806
      %v4815 = vsub.f32 %v4688, %v4807
      %v4816 = vsub.f32 %v4703, %v4808
      %v4817 = vsub.f32 %v4718, %v4809
      %v4818 = vsub.f32 %v4733, %v4810
      %v4819 = vsub.f32 %v4748, %v4811
      %v4820 = vsub.f32 %v4763, %v4812
      %v4821 = vsub.f32 %v4778, %v4813
      %v4822 = vmul.f32 %v4814, %v4814
      %v4823 = vmul.f32 %v4815, %v4815
      %v4824 = vmul.f32 %v4816, %v4816
      %v4825 = vmul.f32 %v4817, %v4817
      %v4826 = vmul.f32 %v4818, %v4818
      %v4827 = vmul.f32 %v4819, %v4819
      %v4828 = vmul.f32 %v4820, %v4820
      %v4829 = vmul.f32 %v4821, %v4821
      %v4830 = vsel %vm2295, %v4822, 0.0
      %4831 = vadd.xlane.f32.xlu0 %v4830
      %v4832 = vpop.xlane.xlu0 %4831
      %v4833 = vsel %vm2295, %v4823, 0.0
      %4834 = vadd.xlane.f32.xlu0 %v4833
      %v4835 = vpop.xlane.xlu0 %4834
      %v4836 = vsel %vm2295, %v4824, 0.0
      %4837 = vadd.xlane.f32.xlu0 %v4836
      %v4838 = vpop.xlane.xlu0 %4837
      %v4839 = vsel %vm2295, %v4825, 0.0
      %4840 = vadd.xlane.f32.xlu0 %v4839
      %v4841 = vpop.xlane.xlu0 %4840
      %v4842 = vsel %vm2295, %v4826, 0.0
      %4843 = vadd.xlane.f32.xlu0 %v4842
      %v4844 = vpop.xlane.xlu0 %4843
      %v4845 = vsel %vm2295, %v4827, 0.0
      %4846 = vadd.xlane.f32.xlu0 %v4845
      %v4847 = vpop.xlane.xlu0 %4846
      %v4848 = vsel %vm2295, %v4828, 0.0
      %4849 = vadd.xlane.f32.xlu0 %v4848
      %v4850 = vpop.xlane.xlu0 %4849
      %v4851 = vsel %vm2295, %v4829, 0.0
      %4852 = vadd.xlane.f32.xlu0 %v4851
      %v4853 = vpop.xlane.xlu0 %4852
      %v4854 = vmul.f32 %v4832, %v4805
      %v4855 = vmul.f32 %v4835, %v4805
      %v4856 = vmul.f32 %v4838, %v4805
      %v4857 = vmul.f32 %v4841, %v4805
      %v4858 = vmul.f32 %v4844, %v4805
      %v4859 = vmul.f32 %v4847, %v4805
      %v4860 = vmul.f32 %v4850, %v4805
      %v4861 = vmul.f32 %v4853, %v4805
      %v4862 = vadd.f32 %v4854, 1e-05
      %v4863 = vadd.f32 %v4855, 1e-05
      %v4864 = vadd.f32 %v4856, 1e-05
      %v4865 = vadd.f32 %v4857, 1e-05
      %v4866 = vadd.f32 %v4858, 1e-05
      %v4867 = vadd.f32 %v4859, 1e-05
      %v4868 = vadd.f32 %v4860, 1e-05
      %v4869 = vadd.f32 %v4861, 1e-05
      %v4870 = vrsqrt.pop %v4862
      %v4871 = vrsqrt.pop %v4863
      %v4872 = vrsqrt.pop %v4864
      %v4873 = vrsqrt.pop %v4865
      %v4874 = vrsqrt.pop %v4866
      %v4875 = vrsqrt.pop %v4867
      %v4876 = vrsqrt.pop %v4868
      %v4877 = vrsqrt.pop %v4869
      %v4878 = vmul.f32 %v4814, %v4870
      %v4879 = vmul.f32 %v4815, %v4871
      %v4880 = vmul.f32 %v4816, %v4872
      %v4881 = vmul.f32 %v4817, %v4873
      %v4882 = vmul.f32 %v4818, %v4874
      %v4883 = vmul.f32 %v4819, %v4875
      %v4884 = vmul.f32 %v4820, %v4876
      %v4885 = vmul.f32 %v4821, %v4877
      %v4887 = vlaneseq
      %v4888 = vshrl.u32 %v4887, 7
      %v4889 = vsub.s32 0, %v4888
      %v4890 = vrot.slane %v4779, %v4889
      %v4892 = vmul.f32 %v4878, %v4890
      %v4893 = vmul.f32 %v4879, %v4890
      %v4894 = vmul.f32 %v4880, %v4890
      %v4895 = vmul.f32 %v4881, %v4890
      %v4896 = vmul.f32 %v4882, %v4890
      %v4897 = vmul.f32 %v4883, %v4890
      %v4898 = vmul.f32 %v4884, %v4890
      %v4899 = vmul.f32 %v4885, %v4890
      %v4901 = vlaneseq
      %v4902 = vshrl.u32 %v4901, 7
      %v4903 = vsub.s32 0, %v4902
      %v4904 = vrot.slane %v4780, %v4903
      %v4906 = vadd.f32 %v4892, %v4904
      %v4907 = vadd.f32 %v4893, %v4904
      %v4908 = vadd.f32 %v4894, %v4904
      %v4909 = vadd.f32 %v4895, %v4904
      %v4910 = vadd.f32 %v4896, %v4904
      %v4911 = vadd.f32 %v4897, %v4904
      %v4912 = vadd.f32 %v4898, %v4904
      %v4913 = vadd.f32 %v4899, %v4904
      %v4914 = vadd.f32 %v2285, %v4906
      %v4915 = vadd.f32 %v2286, %v4907
      %v4916 = vadd.f32 %v2287, %v4908
      %v4917 = vadd.f32 %v2288, %v4909
      %v4918 = vadd.f32 %v2289, %v4910
      %v4919 = vadd.f32 %v2290, %v4911
      %v4920 = vadd.f32 %v2291, %v4912
      %v4921 = vadd.f32 %v2292, %v4913
      %v4922 = vld [vmem:[%s11] sm:$0x1]
      %v4923 = vld [vmem:[%s12] sm:$0x1]
      %v4924 = vsel %vm2295, %v4914, 0.0
      %4925 = vadd.xlane.f32.xlu0 %v4924
      %v4926 = vpop.xlane.xlu0 %4925
      %v4927 = vsel %vm2295, %v4915, 0.0
      %4928 = vadd.xlane.f32.xlu0 %v4927
      %v4929 = vpop.xlane.xlu0 %4928
      %v4930 = vsel %vm2295, %v4916, 0.0
      %4931 = vadd.xlane.f32.xlu0 %v4930
      %v4932 = vpop.xlane.xlu0 %4931
      %v4933 = vsel %vm2295, %v4917, 0.0
      %4934 = vadd.xlane.f32.xlu0 %v4933
      %v4935 = vpop.xlane.xlu0 %4934
      %v4936 = vsel %vm2295, %v4918, 0.0
      %4937 = vadd.xlane.f32.xlu0 %v4936
      %v4938 = vpop.xlane.xlu0 %4937
      %v4939 = vsel %vm2295, %v4919, 0.0
      %4940 = vadd.xlane.f32.xlu0 %v4939
      %v4941 = vpop.xlane.xlu0 %4940
      %v4942 = vsel %vm2295, %v4920, 0.0
      %4943 = vadd.xlane.f32.xlu0 %v4942
      %v4944 = vpop.xlane.xlu0 %4943
      %v4945 = vsel %vm2295, %v4921, 0.0
      %4946 = vadd.xlane.f32.xlu0 %v4945
      %v4947 = vpop.xlane.xlu0 %4946
      %v4948 = vmul.f32 %v4926, %v4805
      %v4949 = vmul.f32 %v4929, %v4805
      %v4950 = vmul.f32 %v4932, %v4805
      %v4951 = vmul.f32 %v4935, %v4805
      %v4952 = vmul.f32 %v4938, %v4805
      %v4953 = vmul.f32 %v4941, %v4805
      %v4954 = vmul.f32 %v4944, %v4805
      %v4955 = vmul.f32 %v4947, %v4805
      %v4956 = vsub.f32 %v4914, %v4948
      %v4957 = vsub.f32 %v4915, %v4949
      %v4958 = vsub.f32 %v4916, %v4950
      %v4959 = vsub.f32 %v4917, %v4951
      %v4960 = vsub.f32 %v4918, %v4952
      %v4961 = vsub.f32 %v4919, %v4953
      %v4962 = vsub.f32 %v4920, %v4954
      %v4963 = vsub.f32 %v4921, %v4955
      %v4964 = vmul.f32 %v4956, %v4956
      %v4965 = vmul.f32 %v4957, %v4957
      %v4966 = vmul.f32 %v4958, %v4958
      %v4967 = vmul.f32 %v4959, %v4959
      %v4968 = vmul.f32 %v4960, %v4960
      %v4969 = vmul.f32 %v4961, %v4961
      %v4970 = vmul.f32 %v4962, %v4962
      %v4971 = vmul.f32 %v4963, %v4963
      %v4972 = vsel %vm2295, %v4964, 0.0
      %4973 = vadd.xlane.f32.xlu0 %v4972
      %v4974 = vpop.xlane.xlu0 %4973
      %v4975 = vsel %vm2295, %v4965, 0.0
      %4976 = vadd.xlane.f32.xlu0 %v4975
      %v4977 = vpop.xlane.xlu0 %4976
      %v4978 = vsel %vm2295, %v4966, 0.0
      %4979 = vadd.xlane.f32.xlu0 %v4978
      %v4980 = vpop.xlane.xlu0 %4979
      %v4981 = vsel %vm2295, %v4967, 0.0
      %4982 = vadd.xlane.f32.xlu0 %v4981
      %v4983 = vpop.xlane.xlu0 %4982
      %v4984 = vsel %vm2295, %v4968, 0.0
      %4985 = vadd.xlane.f32.xlu0 %v4984
      %v4986 = vpop.xlane.xlu0 %4985
      %v4987 = vsel %vm2295, %v4969, 0.0
      %4988 = vadd.xlane.f32.xlu0 %v4987
      %v4989 = vpop.xlane.xlu0 %4988
      %v4990 = vsel %vm2295, %v4970, 0.0
      %4991 = vadd.xlane.f32.xlu0 %v4990
      %v4992 = vpop.xlane.xlu0 %4991
      %v4993 = vsel %vm2295, %v4971, 0.0
      %4994 = vadd.xlane.f32.xlu0 %v4993
      %v4995 = vpop.xlane.xlu0 %4994
      %v4996 = vmul.f32 %v4974, %v4805
      %v4997 = vmul.f32 %v4977, %v4805
      %v4998 = vmul.f32 %v4980, %v4805
      %v4999 = vmul.f32 %v4983, %v4805
      %v5000 = vmul.f32 %v4986, %v4805
      %v5001 = vmul.f32 %v4989, %v4805
      %v5002 = vmul.f32 %v4992, %v4805
      %v5003 = vmul.f32 %v4995, %v4805
      %v5004 = vadd.f32 %v4996, 1e-05
      %v5005 = vadd.f32 %v4997, 1e-05
      %v5006 = vadd.f32 %v4998, 1e-05
      %v5007 = vadd.f32 %v4999, 1e-05
      %v5008 = vadd.f32 %v5000, 1e-05
      %v5009 = vadd.f32 %v5001, 1e-05
      %v5010 = vadd.f32 %v5002, 1e-05
      %v5011 = vadd.f32 %v5003, 1e-05
      %v5012 = vrsqrt.pop %v5004
      %v5013 = vrsqrt.pop %v5005
      %v5014 = vrsqrt.pop %v5006
      %v5015 = vrsqrt.pop %v5007
      %v5016 = vrsqrt.pop %v5008
      %v5017 = vrsqrt.pop %v5009
      %v5018 = vrsqrt.pop %v5010
      %v5019 = vrsqrt.pop %v5011
      %v5020 = vmul.f32 %v4956, %v5012
      %v5021 = vmul.f32 %v4957, %v5013
      %v5022 = vmul.f32 %v4958, %v5014
      %v5023 = vmul.f32 %v4959, %v5015
      %v5024 = vmul.f32 %v4960, %v5016
      %v5025 = vmul.f32 %v4961, %v5017
      %v5026 = vmul.f32 %v4962, %v5018
      %v5027 = vmul.f32 %v4963, %v5019
      %v5029 = vlaneseq
      %v5030 = vshrl.u32 %v5029, 7
      %v5031 = vsub.s32 0, %v5030
      %v5032 = vrot.slane %v4922, %v5031
      %v5034 = vmul.f32 %v5020, %v5032
      %v5035 = vmul.f32 %v5021, %v5032
      %v5036 = vmul.f32 %v5022, %v5032
      %v5037 = vmul.f32 %v5023, %v5032
      %v5038 = vmul.f32 %v5024, %v5032
      %v5039 = vmul.f32 %v5025, %v5032
      %v5040 = vmul.f32 %v5026, %v5032
      %v5041 = vmul.f32 %v5027, %v5032
      %v5043 = vlaneseq
      %v5044 = vshrl.u32 %v5043, 7
      %v5045 = vsub.s32 0, %v5044
      %v5046 = vrot.slane %v4923, %v5045
      %v5048 = vadd.f32 %v5034, %v5046
      %v5049 = vadd.f32 %v5035, %v5046
      %v5050 = vadd.f32 %v5036, %v5046
      %v5051 = vadd.f32 %v5037, %v5046
      %v5052 = vadd.f32 %v5038, %v5046
      %v5053 = vadd.f32 %v5039, %v5046
      %v5054 = vadd.f32 %v5040, %v5046
      %v5055 = vadd.f32 %v5041, %v5046
      %v5056 = vld [vmem:[%s13] sm:$0xff]
      %v5057 = vld [vmem:[%s13 + $0x8] sm:$0xff]
      %v5058 = vld [vmem:[%s14] sm:$0x1]
      %v5060 = vlaneseq
      %v5061 = vshrl.u32 %v5060, 7
      %v5062 = vsub.s32 0, %v5061
      %v5063 = vrot.slane %v5058, %v5062
      %v5066 = vsel %vm2295, %v5048, 0
      %v5069 = vsel %vm2295, %v5049, 0
      %v5072 = vsel %vm2295, %v5050, 0
      %v5075 = vsel %vm2295, %v5051, 0
      %v5078 = vsel %vm2295, %v5052, 0
      %v5081 = vsel %vm2295, %v5053, 0
      %v5084 = vsel %vm2295, %v5054, 0
      %v5087 = vsel %vm2295, %v5055, 0
      %5089 = vmatprep.subr.mxu0 0.0
      %5090 = vmatpush1.msra.mxu0 %v5056
      %5091 = vmatprep.subr.mxu0 0.0
      %5092 = vmatpush1.msra.mxu0 %v5057
      %5093 = vmatprep.subr.mxu0 0.0
      %5094 = vmatpush1.msra.mxu0 0.0
      %5095 = vmatprep.subr.mxu0 0.0
      %5096 = vmatpush1.msra.mxu0 0.0
      %5097 = vmatprep.subr.mxu0 0.0
      %5098 = vmatpush1.msra.mxu0 0.0
      %5099 = vmatprep.subr.mxu0 0.0
      %5100 = vmatpush1.msra.mxu0 0.0
      %5101 = vmatprep.subr.mxu0 0.0
      %5102 = vmatpush1.msra.mxu0 0.0
      %5103 = vmatprep.subr.mxu0 0.0
      %5104 = vmatpush1.msra.mxu0 0.0
      %5105 = vmatprep.subr.mxu0 0.0
      %5106 = vmatpush1.msra.mxu0 0.0
      %5107 = vmatprep.subr.mxu0 0.0
      %5108 = vmatpush1.msra.mxu0 0.0
      %5109 = vmatprep.subr.mxu0 0.0
      %5110 = vmatpush1.msra.mxu0 0.0
      %5111 = vmatprep.subr.mxu0 0.0
      %5112 = vmatpush1.msra.mxu0 0.0
      %5113 = vmatprep.subr.mxu0 0.0
      %5114 = vmatpush1.msra.mxu0 0.0
      %5115 = vmatprep.subr.mxu0 0.0
      %5116 = vmatpush1.msra.mxu0 0.0
      %5117 = vmatprep.subr.mxu0 0.0
      %5118 = vmatpush1.msra.mxu0 0.0
      %5119 = vmatprep.subr.mxu0 0.0
      %5120 = vmatpush1.msra.mxu0 0.0
      %5121 = vmatprep.subr.mxu0 0.0
      %5122 = vmatpush1.msra.mxu0 0.0
      %5123 = vmatprep.subr.mxu0 0.0
      %5124 = vmatpush1.msra.mxu0 0.0
      %5125 = vmatprep.subr.mxu0 0.0
      %5126 = vmatpush1.msra.mxu0 0.0
      %5127 = vmatprep.subr.mxu0 0.0
      %5128 = vmatpush1.msra.mxu0 0.0
      %5129 = vmatprep.subr.mxu0 0.0
      %5130 = vmatpush1.msra.mxu0 0.0
      %5131 = vmatprep.subr.mxu0 0.0
      %5132 = vmatpush1.msra.mxu0 0.0
      %5133 = vmatprep.subr.mxu0 0.0
      %5134 = vmatpush1.msra.mxu0 0.0
      %5135 = vmatprep.subr.mxu0 0.0
      %5136 = vmatpush1.msra.mxu0 0.0
      %5137 = vmatprep.subr.mxu0 0.0
      %5138 = vmatpush1.msra.mxu0 0.0
      %5139 = vmatprep.subr.mxu0 0.0
      %5140 = vmatpush1.msra.mxu0 0.0
      %5141 = vmatprep.subr.mxu0 0.0
      %5142 = vmatpush1.msra.mxu0 0.0
      %5143 = vmatprep.subr.mxu0 0.0
      %5144 = vmatpush1.msra.mxu0 0.0
      %5145 = vmatprep.subr.mxu0 0.0
      %5146 = vmatpush1.msra.mxu0 0.0
      %5147 = vmatprep.subr.mxu0 0.0
      %5148 = vmatpush1.msra.mxu0 0.0
      %5149 = vmatprep.subr.mxu0 0.0
      %5150 = vmatpush1.msra.mxu0 0.0
      %5151 = vmatprep.subr.mxu0 0.0
      %5152 = vmatpush1.msra.mxu0 0.0
      %5153 = vmatprep.mubr.f32.mxu0 0.0
      %5154 = vmatmul.mubr.f32.gmra.mrb[0].mxu0 %v5066
      %v5155 = vpop.f32.mrb[0].mxu0
      %v5156 = vadd.f32 %v5063, %v5155
      %v5157 = vpop.f32.mrb[0].mxu0
      %5158 = vmatprep.mubr.f32.mxu0 0.0
      %5159 = vmatmul.mubr.f32.gmra.mrb[0].mxu0 %v5069
      %v5160 = vpop.f32.mrb[0].mxu0
      %v5161 = vadd.f32 %v5063, %v5160
      %v5162 = vpop.f32.mrb[0].mxu0
      %5163 = vmatprep.mubr.f32.mxu0 0.0
      %5164 = vmatmul.mubr.f32.gmra.mrb[0].mxu0 %v5072
      %v5165 = vpop.f32.mrb[0].mxu0
      %v5166 = vadd.f32 %v5063, %v5165
      %v5167 = vpop.f32.mrb[0].mxu0
      %5168 = vmatprep.mubr.f32.mxu0 0.0
      %5169 = vmatmul.mubr.f32.gmra.mrb[0].mxu0 %v5075
      %v5170 = vpop.f32.mrb[0].mxu0
      %v5171 = vadd.f32 %v5063, %v5170
      %v5172 = vpop.f32.mrb[0].mxu0
      %5173 = vmatprep.mubr.f32.mxu0 0.0
      %5174 = vmatmul.mubr.f32.gmra.mrb[0].mxu0 %v5078
      %v5175 = vpop.f32.mrb[0].mxu0
      %v5176 = vadd.f32 %v5063, %v5175
      %v5177 = vpop.f32.mrb[0].mxu0
      %5178 = vmatprep.mubr.f32.mxu0 0.0
      %5179 = vmatmul.mubr.f32.gmra.mrb[0].mxu0 %v5081
      %v5180 = vpop.f32.mrb[0].mxu0
      %v5181 = vadd.f32 %v5063, %v5180
      %v5182 = vpop.f32.mrb[0].mxu0
      %5183 = vmatprep.mubr.f32.mxu0 0.0
      %5184 = vmatmul.mubr.f32.gmra.mrb[0].mxu0 %v5084
      %v5185 = vpop.f32.mrb[0].mxu0
      %v5186 = vadd.f32 %v5063, %v5185
      %v5187 = vpop.f32.mrb[0].mxu0
      %5188 = vmatprep.mubr.f32.mxu0 0.0
      %5189 = vmatmul.mubr.f32.gmra.mrb[0].mxu0 %v5087
      %v5190 = vpop.f32.mrb[0].mxu0
      %v5191 = vadd.f32 %v5063, %v5190
      %v5192 = vpop.f32.mrb[0].mxu0
      %5193 = vdwg.mxu0
      %v5194 = vmax.f32 %v5156, 0.0
      %v5195 = vmax.f32 %v5161, 0.0
      %v5196 = vmax.f32 %v5166, 0.0
      %v5197 = vmax.f32 %v5171, 0.0
      %v5198 = vmax.f32 %v5176, 0.0
      %v5199 = vmax.f32 %v5181, 0.0
      %v5200 = vmax.f32 %v5186, 0.0
      %v5201 = vmax.f32 %v5191, 0.0
      %v5202 = vld [vmem:[%s15] sm:$0xff]
      %v5203 = vld [vmem:[%s15 + $0x8] sm:$0xff]
      %v5204 = vld [vmem:[%s15 + $0x10] sm:$0xff]
      %v5205 = vld [vmem:[%s15 + $0x18] sm:$0xff]
      %v5206 = vld [vmem:[%s15 + $0x20] sm:$0xff]
      %v5207 = vld [vmem:[%s15 + $0x28] sm:$0xff]
      %v5208 = vld [vmem:[%s15 + $0x30] sm:$0xff]
      %v5209 = vld [vmem:[%s15 + $0x38] sm:$0xff]
      %v5210 = vld [vmem:[%s16] sm:$0x1]
      %v5212 = vlaneseq
      %v5213 = vshrl.u32 %v5212, 7
      %v5214 = vsub.s32 0, %v5213
      %v5215 = vrot.slane %v5210, %v5214
      %v5218 = vsel %vm665, %v5194, 0
      %v5221 = vsel %vm665, %v5195, 0
      %v5224 = vsel %vm665, %v5196, 0
      %v5227 = vsel %vm665, %v5197, 0
      %v5230 = vsel %vm665, %v5198, 0
      %v5233 = vsel %vm665, %v5199, 0
      %v5236 = vsel %vm665, %v5200, 0
      %v5239 = vsel %vm665, %v5201, 0
      %5241 = vmatprep.subr.mxu0 0.0
      %5242 = vmatpush1.msra.mxu0 %v5202
      %5243 = vmatprep.subr.mxu0 0.0
      %5244 = vmatpush1.msra.mxu0 %v5203
      %5245 = vmatprep.subr.mxu0 0.0
      %5246 = vmatpush1.msra.mxu0 %v5204
      %5247 = vmatprep.subr.mxu0 0.0
      %5248 = vmatpush1.msra.mxu0 %v5205
      %5249 = vmatprep.subr.mxu0 0.0
      %5250 = vmatpush1.msra.mxu0 %v5206
      %5251 = vmatprep.subr.mxu0 0.0
      %5252 = vmatpush1.msra.mxu0 %v5207
      %5253 = vmatprep.subr.mxu0 0.0
      %5254 = vmatpush1.msra.mxu0 %v5208
      %5255 = vmatprep.subr.mxu0 0.0
      %5256 = vmatpush1.msra.mxu0 %v5209
      %5257 = vmatprep.subr.mxu0 0.0
      %5258 = vmatpush1.msra.mxu0 0.0
      %5259 = vmatprep.subr.mxu0 0.0
      %5260 = vmatpush1.msra.mxu0 0.0
      %5261 = vmatprep.subr.mxu0 0.0
      %5262 = vmatpush1.msra.mxu0 0.0
      %5263 = vmatprep.subr.mxu0 0.0
      %5264 = vmatpush1.msra.mxu0 0.0
      %5265 = vmatprep.subr.mxu0 0.0
      %5266 = vmatpush1.msra.mxu0 0.0
      %5267 = vmatprep.subr.mxu0 0.0
      %5268 = vmatpush1.msra.mxu0 0.0
      %5269 = vmatprep.subr.mxu0 0.0
      %5270 = vmatpush1.msra.mxu0 0.0
      %5271 = vmatprep.subr.mxu0 0.0
      %5272 = vmatpush1.msra.mxu0 0.0
      %5273 = vmatprep.subr.mxu0 0.0
      %5274 = vmatpush1.msra.mxu0 0.0
      %5275 = vmatprep.subr.mxu0 0.0
      %5276 = vmatpush1.msra.mxu0 0.0
      %5277 = vmatprep.subr.mxu0 0.0
      %5278 = vmatpush1.msra.mxu0 0.0
      %5279 = vmatprep.subr.mxu0 0.0
      %5280 = vmatpush1.msra.mxu0 0.0
      %5281 = vmatprep.subr.mxu0 0.0
      %5282 = vmatpush1.msra.mxu0 0.0
      %5283 = vmatprep.subr.mxu0 0.0
      %5284 = vmatpush1.msra.mxu0 0.0
      %5285 = vmatprep.subr.mxu0 0.0
      %5286 = vmatpush1.msra.mxu0 0.0
      %5287 = vmatprep.subr.mxu0 0.0
      %5288 = vmatpush1.msra.mxu0 0.0
      %5289 = vmatprep.subr.mxu0 0.0
      %5290 = vmatpush1.msra.mxu0 0.0
      %5291 = vmatprep.subr.mxu0 0.0
      %5292 = vmatpush1.msra.mxu0 0.0
      %5293 = vmatprep.subr.mxu0 0.0
      %5294 = vmatpush1.msra.mxu0 0.0
      %5295 = vmatprep.subr.mxu0 0.0
      %5296 = vmatpush1.msra.mxu0 0.0
      %5297 = vmatprep.subr.mxu0 0.0
      %5298 = vmatpush1.msra.mxu0 0.0
      %5299 = vmatprep.subr.mxu0 0.0
      %5300 = vmatpush1.msra.mxu0 0.0
      %5301 = vmatprep.subr.mxu0 0.0
      %5302 = vmatpush1.msra.mxu0 0.0
      %5303 = vmatprep.subr.mxu0 0.0
      %5304 = vmatpush1.msra.mxu0 0.0
      %5305 = vmatprep.mubr.f32.mxu0 0.0
      %5306 = vmatmul.mubr.f32.gmra.mrb[0].mxu0 %v5218
      %v5307 = vpop.f32.mrb[0].mxu0
      %v5308 = vadd.f32 %v5215, %v5307
      %v5309 = vpop.f32.mrb[0].mxu0
      %5310 = vmatprep.mubr.f32.mxu0 0.0
      %5311 = vmatmul.mubr.f32.gmra.mrb[0].mxu0 %v5221
      %v5312 = vpop.f32.mrb[0].mxu0
      %v5313 = vadd.f32 %v5215, %v5312
      %v5314 = vpop.f32.mrb[0].mxu0
      %5315 = vmatprep.mubr.f32.mxu0 0.0
      %5316 = vmatmul.mubr.f32.gmra.mrb[0].mxu0 %v5224
      %v5317 = vpop.f32.mrb[0].mxu0
      %v5318 = vadd.f32 %v5215, %v5317
      %v5319 = vpop.f32.mrb[0].mxu0
      %5320 = vmatprep.mubr.f32.mxu0 0.0
      %5321 = vmatmul.mubr.f32.gmra.mrb[0].mxu0 %v5227
      %v5322 = vpop.f32.mrb[0].mxu0
      %v5323 = vadd.f32 %v5215, %v5322
      %v5324 = vpop.f32.mrb[0].mxu0
      %5325 = vmatprep.mubr.f32.mxu0 0.0
      %5326 = vmatmul.mubr.f32.gmra.mrb[0].mxu0 %v5230
      %v5327 = vpop.f32.mrb[0].mxu0
      %v5328 = vadd.f32 %v5215, %v5327
      %v5329 = vpop.f32.mrb[0].mxu0
      %5330 = vmatprep.mubr.f32.mxu0 0.0
      %5331 = vmatmul.mubr.f32.gmra.mrb[0].mxu0 %v5233
      %v5332 = vpop.f32.mrb[0].mxu0
      %v5333 = vadd.f32 %v5215, %v5332
      %v5334 = vpop.f32.mrb[0].mxu0
      %5335 = vmatprep.mubr.f32.mxu0 0.0
      %5336 = vmatmul.mubr.f32.gmra.mrb[0].mxu0 %v5236
      %v5337 = vpop.f32.mrb[0].mxu0
      %v5338 = vadd.f32 %v5215, %v5337
      %v5339 = vpop.f32.mrb[0].mxu0
      %5340 = vmatprep.mubr.f32.mxu0 0.0
      %5341 = vmatmul.mubr.f32.gmra.mrb[0].mxu0 %v5239
      %v5342 = vpop.f32.mrb[0].mxu0
      %v5343 = vadd.f32 %v5215, %v5342
      %v5344 = vpop.f32.mrb[0].mxu0
      %5345 = vdwg.mxu0
      %v5346 = vadd.f32 %v5048, %v5308
      %v5347 = vadd.f32 %v5049, %v5313
      %v5348 = vadd.f32 %v5050, %v5318
      %v5349 = vadd.f32 %v5051, %v5323
      %v5350 = vadd.f32 %v5052, %v5328
      %v5351 = vadd.f32 %v5053, %v5333
      %v5352 = vadd.f32 %v5054, %v5338
      %v5353 = vadd.f32 %v5055, %v5343
      %v5354 = vld [vmem:[%s17] sm:$0x1]
      %v5355 = vld [vmem:[%s18] sm:$0x1]
      %v5356 = vsel %vm2295, %v5346, 0.0
      %5357 = vadd.xlane.f32.xlu0 %v5356
      %v5358 = vpop.xlane.xlu0 %5357
      %v5359 = vsel %vm2295, %v5347, 0.0
      %5360 = vadd.xlane.f32.xlu0 %v5359
      %v5361 = vpop.xlane.xlu0 %5360
      %v5362 = vsel %vm2295, %v5348, 0.0
      %5363 = vadd.xlane.f32.xlu0 %v5362
      %v5364 = vpop.xlane.xlu0 %5363
      %v5365 = vsel %vm2295, %v5349, 0.0
      %5366 = vadd.xlane.f32.xlu0 %v5365
      %v5367 = vpop.xlane.xlu0 %5366
      %v5368 = vsel %vm2295, %v5350, 0.0
      %5369 = vadd.xlane.f32.xlu0 %v5368
      %v5370 = vpop.xlane.xlu0 %5369
      %v5371 = vsel %vm2295, %v5351, 0.0
      %5372 = vadd.xlane.f32.xlu0 %v5371
      %v5373 = vpop.xlane.xlu0 %5372
      %v5374 = vsel %vm2295, %v5352, 0.0
      %5375 = vadd.xlane.f32.xlu0 %v5374
      %v5376 = vpop.xlane.xlu0 %5375
      %v5377 = vsel %vm2295, %v5353, 0.0
      %5378 = vadd.xlane.f32.xlu0 %v5377
      %v5379 = vpop.xlane.xlu0 %5378
      %v5380 = vmul.f32 %v5358, %v4805
      %v5381 = vmul.f32 %v5361, %v4805
      %v5382 = vmul.f32 %v5364, %v4805
      %v5383 = vmul.f32 %v5367, %v4805
      %v5384 = vmul.f32 %v5370, %v4805
      %v5385 = vmul.f32 %v5373, %v4805
      %v5386 = vmul.f32 %v5376, %v4805
      %v5387 = vmul.f32 %v5379, %v4805
      %v5388 = vsub.f32 %v5346, %v5380
      %v5389 = vsub.f32 %v5347, %v5381
      %v5390 = vsub.f32 %v5348, %v5382
      %v5391 = vsub.f32 %v5349, %v5383
      %v5392 = vsub.f32 %v5350, %v5384
      %v5393 = vsub.f32 %v5351, %v5385
      %v5394 = vsub.f32 %v5352, %v5386
      %v5395 = vsub.f32 %v5353, %v5387
      %v5396 = vmul.f32 %v5388, %v5388
      %v5397 = vmul.f32 %v5389, %v5389
      %v5398 = vmul.f32 %v5390, %v5390
      %v5399 = vmul.f32 %v5391, %v5391
      %v5400 = vmul.f32 %v5392, %v5392
      %v5401 = vmul.f32 %v5393, %v5393
      %v5402 = vmul.f32 %v5394, %v5394
      %v5403 = vmul.f32 %v5395, %v5395
      %v5404 = vsel %vm2295, %v5396, 0.0
      %5405 = vadd.xlane.f32.xlu0 %v5404
      %v5406 = vpop.xlane.xlu0 %5405
      %v5407 = vsel %vm2295, %v5397, 0.0
      %5408 = vadd.xlane.f32.xlu0 %v5407
      %v5409 = vpop.xlane.xlu0 %5408
      %v5410 = vsel %vm2295, %v5398, 0.0
      %5411 = vadd.xlane.f32.xlu0 %v5410
      %v5412 = vpop.xlane.xlu0 %5411
      %v5413 = vsel %vm2295, %v5399, 0.0
      %5414 = vadd.xlane.f32.xlu0 %v5413
      %v5415 = vpop.xlane.xlu0 %5414
      %v5416 = vsel %vm2295, %v5400, 0.0
      %5417 = vadd.xlane.f32.xlu0 %v5416
      %v5418 = vpop.xlane.xlu0 %5417
      %v5419 = vsel %vm2295, %v5401, 0.0
      %5420 = vadd.xlane.f32.xlu0 %v5419
      %v5421 = vpop.xlane.xlu0 %5420
      %v5422 = vsel %vm2295, %v5402, 0.0
      %5423 = vadd.xlane.f32.xlu0 %v5422
      %v5424 = vpop.xlane.xlu0 %5423
      %v5425 = vsel %vm2295, %v5403, 0.0
      %5426 = vadd.xlane.f32.xlu0 %v5425
      %v5427 = vpop.xlane.xlu0 %5426
      %v5428 = vmul.f32 %v5406, %v4805
      %v5429 = vmul.f32 %v5409, %v4805
      %v5430 = vmul.f32 %v5412, %v4805
      %v5431 = vmul.f32 %v5415, %v4805
      %v5432 = vmul.f32 %v5418, %v4805
      %v5433 = vmul.f32 %v5421, %v4805
      %v5434 = vmul.f32 %v5424, %v4805
      %v5435 = vmul.f32 %v5427, %v4805
      %v5436 = vadd.f32 %v5428, 1e-05
      %v5437 = vadd.f32 %v5429, 1e-05
      %v5438 = vadd.f32 %v5430, 1e-05
      %v5439 = vadd.f32 %v5431, 1e-05
      %v5440 = vadd.f32 %v5432, 1e-05
      %v5441 = vadd.f32 %v5433, 1e-05
      %v5442 = vadd.f32 %v5434, 1e-05
      %v5443 = vadd.f32 %v5435, 1e-05
      %v5444 = vrsqrt.pop %v5436
      %v5445 = vrsqrt.pop %v5437
      %v5446 = vrsqrt.pop %v5438
      %v5447 = vrsqrt.pop %v5439
      %v5448 = vrsqrt.pop %v5440
      %v5449 = vrsqrt.pop %v5441
      %v5450 = vrsqrt.pop %v5442
      %v5451 = vrsqrt.pop %v5443
      %v5452 = vmul.f32 %v5388, %v5444
      %v5453 = vmul.f32 %v5389, %v5445
      %v5454 = vmul.f32 %v5390, %v5446
      %v5455 = vmul.f32 %v5391, %v5447
      %v5456 = vmul.f32 %v5392, %v5448
      %v5457 = vmul.f32 %v5393, %v5449
      %v5458 = vmul.f32 %v5394, %v5450
      %v5459 = vmul.f32 %v5395, %v5451
      %v5461 = vlaneseq
      %v5462 = vshrl.u32 %v5461, 7
      %v5463 = vsub.s32 0, %v5462
      %v5464 = vrot.slane %v5354, %v5463
      %v5466 = vmul.f32 %v5452, %v5464
      %v5467 = vmul.f32 %v5453, %v5464
      %v5468 = vmul.f32 %v5454, %v5464
      %v5469 = vmul.f32 %v5455, %v5464
      %v5470 = vmul.f32 %v5456, %v5464
      %v5471 = vmul.f32 %v5457, %v5464
      %v5472 = vmul.f32 %v5458, %v5464
      %v5473 = vmul.f32 %v5459, %v5464
      %v5475 = vlaneseq
      %v5476 = vshrl.u32 %v5475, 7
      %v5477 = vsub.s32 0, %v5476
      %v5478 = vrot.slane %v5355, %v5477
      %v5480 = vadd.f32 %v5466, %v5478
      %v5481 = vadd.f32 %v5467, %v5478
      %v5482 = vadd.f32 %v5468, %v5478
      %v5483 = vadd.f32 %v5469, %v5478
      %v5484 = vadd.f32 %v5470, %v5478
      %v5485 = vadd.f32 %v5471, %v5478
      %v5486 = vadd.f32 %v5472, %v5478
      %v5487 = vadd.f32 %v5473, %v5478
      %5488 = vst.msk [vmem:[%s602] sm:$0xff] %vm2295, %v5480
      %5489 = vst.msk [vmem:[%s602 + $0x8] sm:$0xff] %vm2295, %v5481
      %5490 = vst.msk [vmem:[%s602 + $0x10] sm:$0xff] %vm2295, %v5482
      %5491 = vst.msk [vmem:[%s602 + $0x18] sm:$0xff] %vm2295, %v5483
      %5492 = vst.msk [vmem:[%s602 + $0x20] sm:$0xff] %vm2295, %v5484
      %5493 = vst.msk [vmem:[%s602 + $0x28] sm:$0xff] %vm2295, %v5485
      %5494 = vst.msk [vmem:[%s602 + $0x30] sm:$0xff] %vm2295, %v5486
      %5495 = vst.msk [vmem:[%s602 + $0x38] sm:$0xff] %vm2295, %v5487
      %p5496 = scmp.lt.s32.totalorder %s30, 1
      %s5497 = scalar_select %p5496, %s30, 1
      %s5498 = smul.addr %s5497, 8
      %s5499 = smul.addr %s5498, 8
      %s5500 = scalar_lea.vmem %s19, %s5499
      // Predicated region
      $region97: #{transformer_forward.1} parent=95 // pred_check
        %p5501 = pneg %p452
      $region98: #{transformer_forward.1} parent=95 // pred_check_branch
        %5503 = sbr.rel (%p5501) target = $region100
      $region99: #{transformer_forward.1} parent=95 // pred_region
        _
      $region100: #{transformer_forward.1} parent=95 // pred_fallthru
        _
    $region96: #{transformer_forward.1} parent=5 // pred_fallthru
      _
    %p5504 = scmp.le.s32.totalorder 2, %s25
    // Predicated region
    $region101: #{transformer_forward.1} parent=5 // pred_check
      %p5505 = pneg %p5504
    $region102: #{transformer_forward.1} parent=5 // pred_check_branch
      %5507 = sbr.rel (%p5505) target = $region104
    $region103: #{transformer_forward.1} parent=5 // pred_region
      %s5508 = ssub.s32 %s25, 2
      // Predicated region
      $region105: #{transformer_forward.1} parent=103 // pred_check
        %p5509 = pneg %p458
      $region106: #{transformer_forward.1} parent=103 // pred_check_branch
        %5511 = sbr.rel (%p5509) target = $region108
      $region107: #{transformer_forward.1} parent=103 // pred_region
        %p5512 = scmp.lt.s32.totalorder %s31, 1
        %s5513 = scalar_select %p5512, %s31, 1
        %s5514 = smul.addr %s5513, 8
        %s5515 = smul.addr %s5514, 8
        %s5516 = scalar_lea.vmem %s19, %s5515
      $region108: #{transformer_forward.1} parent=103 // pred_fallthru
        _
    $region104: #{transformer_forward.1} parent=5 // pred_fallthru
      _
  $region6: #{transformer_forward.1} parent=0 // loop_footer
    %s29 = sadd.s32 1, %s25
  $region7: #{transformer_forward.1} parent=0 // loop_footer_branch
    %24 = sbr.rel target = $region3
  $region8: #{transformer_forward.1} parent=0 // loop_exit
    _

</llo_original>
